<compile_context>
chip_gen: v6e
topology: v6e:2x2x1
jax: 0.10.0
libtpu: 0.0.40
codegen_flags: <defaults>
</compile_context>

<pallas_src>
import functools
import math

import jax
import jax.numpy as jnp
import numpy as np
from jax.experimental import pallas as pl
from jax.experimental.pallas import tpu as pltpu

LANE = 128
EPS = 1e-5
VMEM_LIMIT = 32 * 1024 * 1024


def _ceil_to(x, m):
    return -(-x // m) * m


def _pick(dim, candidates):
    for c in candidates:
        if dim % c == 0:
            return c
    return candidates[-1]


def _pad_last(a, target):
    pad = target - a.shape[-1]
    if pad == 0:
        return a
    return jnp.pad(a, [(0, 0)] * (a.ndim - 1) + [(0, pad)])


# ----------------------------- fused kernel --------------------------------

def _fused_kernel(*refs, expand, use_res, tap_map, ho, wo, h, w):
    """One grid step = (batch element i, hidden-channel tile j).

    expand (MXU matmul + ReLU6 + border mask) -> depthwise 3x3 (static VMEM
    slices, pairwise-tree reduce, ReLU6) -> projection partial matmul
    accumulated over j into an f32 VMEM scratch.  Epilogue at the last j adds
    the folded-BN shift and the (optional) residual and stores lane-dense.
    """
    if expand:
        (x_ref, wexp_ref, bexp_ref, mask_ref, wdw_ref, bdw_ref,
         wproj_ref, bproj_ref, o_ref, acc_ref) = refs
    else:
        (x_ref, wdw_ref, bdw_ref, wproj_ref, bproj_ref, o_ref, acc_ref) = refs

    j = pl.program_id(1)

    @pl.when(j == 0)
    def _():
        acc_ref[...] = jnp.zeros_like(acc_ref)

    xv = x_ref[0]                               # (nph*HP, WPp, Cin|tc) f32
    n_rows, wpp, _ = xv.shape

    if expand:
        # 1x1 expand conv as MXU matmul over all (padded) pixels.
        x2 = xv.reshape(n_rows * wpp, xv.shape[-1]).astype(jnp.bfloat16)
        hid = jnp.dot(x2, wexp_ref[...], preferred_element_type=jnp.float32)
        hid = jnp.clip(hid + bexp_ref[...], 0.0, 6.0)
        # Zero the positions that are spatial padding of the hidden tensor
        # (PyTorch zero-pads the *hidden* before the depthwise conv).
        hid = hid * mask_ref[...]
        hid3 = hid.reshape(n_rows, wpp, hid.shape[-1])
    else:
        hid3 = xv

    # Depthwise 3x3 (folded BN scale): 9 static taps, pairwise-tree reduce.
    wv = wdw_ref[...]                           # (9, 1, tc)
    prods = []
    for k, (r0, c0) in enumerate(tap_map):
        t = hid3[r0:r0 + ho, c0:c0 + wo, :]     # (ho, wo, tc)
        prods.append(t * wv[k])
    while len(prods) > 1:
        nxt = [prods[i] + prods[i + 1] for i in range(0, len(prods) - 1, 2)]
        if len(prods) % 2:
            nxt.append(prods[-1])
        prods = nxt
    dw = jnp.clip(prods[0] + bdw_ref[...], 0.0, 6.0)      # (ho, wo, tc)
    dw2 = dw.reshape(ho * wo, dw.shape[-1]).astype(jnp.bfloat16)

    # Projection 1x1 conv: partial over this hidden tile, accumulate in f32.
    acc_ref[...] += jnp.dot(dw2, wproj_ref[...],
                            preferred_element_type=jnp.float32)

    @pl.when(j == pl.num_programs(1) - 1)
    def _():
        y = acc_ref[...] + bproj_ref[...]
        if use_res:
            res = xv[1:1 + h, 1:1 + w, :]        # interior of padded x (f32)
            y = y + res.reshape(h * w, res.shape[-1])
        o_ref[0] = y.astype(o_ref.dtype)


# ----------------------------- forward wrapper ------------------------------

def inverted_residual_forward(params, x_nchw, *, cfg):
    n, _, h, w = x_nchw.shape
    stride = cfg['stride']
    cin_p, hid_p, oup_p = cfg['cin_p'], cfg['hid_p'], cfg['oup_p']
    expand, use_res = cfg['expand'], cfg['use_res']

    x = jnp.transpose(x_nchw, (0, 2, 3, 1)).astype(jnp.float32)   # NHWC
    x = _pad_last(x, cin_p)
    xp = jnp.pad(x, ((0, 0), (1, 1), (1, 1), (0, 0)))             # spatial +1

    ho = (h - 1) // stride + 1
    wo = (w - 1) // stride + 1

    if stride == 1:
        nph, HP = 1, h + 2
        WPp = _ceil_to(w + 2, 8)
        xph = jnp.pad(xp, ((0, 0), (0, 0), (0, WPp - (w + 2)), (0, 0)))
        tap_map = tuple((dy, dx) for dy in range(3) for dx in range(3))
    else:
        nph = 4
        HP = -(-(h + 2) // 2)
        WPp = _ceil_to(-(-(w + 2) // 2), 8)
        phs = []
        for py in range(2):
            for px in range(2):
                p = xp[:, py::2, px::2, :]
                p = jnp.pad(p, ((0, 0), (0, HP - p.shape[1]),
                                (0, WPp - p.shape[2]), (0, 0)))
                phs.append(p)
        xph = jnp.stack(phs, axis=1)
        tap_map = tuple((((dy % 2) * 2 + dx % 2) * HP + dy // 2, dx // 2)
                        for dy in range(3) for dx in range(3))
    xph = xph.reshape(n, nph * HP, WPp, cin_p)

    # Hidden-channel tile (reduction axis of the projection matmul).
    if expand:
        tc = _pick(hid_p, (256, 128))
    else:
        tc = hid_p if use_res else _pick(hid_p, (256, 128))
    n_hid = hid_p // tc

    grid = (n, n_hid)
    out_shape = jax.ShapeDtypeStruct((n, ho * wo, oup_p), jnp.float32)
    out_spec = pl.BlockSpec((1, ho * wo, oup_p), lambda i, j: (i, 0, 0))
    scratch = [pltpu.VMEM((ho * wo, oup_p), jnp.float32)]

    if expand:
        # 1 where the padded position holds a real input pixel, 0 on padding.
        mask = np.zeros((nph, HP, WPp), np.float32)
        for p_i in range(nph):
            py, px = (p_i // 2, p_i % 2) if stride == 2 else (0, 0)
            for r in range(HP):
                if not (1 <= stride * r + py <= h):
                    continue
                for c in range(WPp):
                    if 1 <= stride * c + px <= w:
                        mask[p_i, r, c] = 1.0
        mask = jnp.asarray(mask.reshape(nph * HP * WPp, 1))

        in_specs = [
            pl.BlockSpec((1, nph * HP, WPp, cin_p), lambda i, j: (i, 0, 0, 0)),
            pl.BlockSpec((cin_p, tc), lambda i, j: (0, j)),
            pl.BlockSpec((1, tc), lambda i, j: (0, j)),
            pl.BlockSpec((nph * HP * WPp, 1), lambda i, j: (0, 0)),
            pl.BlockSpec((9, 1, tc), lambda i, j: (0, 0, j)),
            pl.BlockSpec((1, tc), lambda i, j: (0, j)),
            pl.BlockSpec((tc, oup_p), lambda i, j: (j, 0)),
            pl.BlockSpec((1, oup_p), lambda i, j: (0, 0)),
        ]
        args = [xph, params['w_exp'], params['b_exp'], mask,
                params['w_dw'], params['b_dw'],
                params['w_proj'], params['b_proj']]
    else:
        in_specs = [
            pl.BlockSpec((1, nph * HP, WPp, tc), lambda i, j: (i, 0, 0, j)),
            pl.BlockSpec((9, 1, tc), lambda i, j: (0, 0, j)),
            pl.BlockSpec((1, tc), lambda i, j: (0, j)),
            pl.BlockSpec((tc, oup_p), lambda i, j: (j, 0)),
            pl.BlockSpec((1, oup_p), lambda i, j: (0, 0)),
        ]
        args = [xph, params['w_dw'], params['b_dw'],
                params['w_proj'], params['b_proj']]

    out = pl.pallas_call(
        functools.partial(_fused_kernel, expand=expand, use_res=use_res,
                          tap_map=tap_map, ho=ho, wo=wo, h=h, w=w),
        out_shape=out_shape,
        grid_spec=pltpu.PrefetchScalarGridSpec(
            num_scalar_prefetch=0,
            grid=grid,
            in_specs=in_specs,
            out_specs=out_spec,
            scratch_shapes=scratch),
        compiler_params=pltpu.CompilerParams(
            dimension_semantics=("parallel", "arbitrary"),
            vmem_limit_bytes=VMEM_LIMIT),
    )(*args)

    out = out.reshape(n, ho, wo, oup_p)[..., :cfg['oup']]
    return jnp.transpose(out, (0, 3, 1, 2))                       # NCHW


# ----------------------------- parameters ----------------------------------

def _rand_bn(key, c):
    k1, k2, k3, k4 = jax.random.split(key, 4)
    gamma = 1.0 + 0.1 * jax.random.normal(k1, (c,), jnp.float32)
    beta = 0.1 * jax.random.normal(k2, (c,), jnp.float32)
    mean = 0.1 * jax.random.normal(k3, (c,), jnp.float32)
    var = 1.0 + 0.1 * jax.random.uniform(k4, (c,), jnp.float32)
    return gamma, beta, mean, var


def make_raw_params(key, inp, oup, stride, expand_ratio):
    """PyTorch-layout weights + eval-mode BN stats (reference ground truth)."""
    hidden = int(round(inp * expand_ratio))
    cfg = dict(inp=inp, oup=oup, stride=stride, hidden=hidden,
               expand=expand_ratio != 1,
               use_res=(stride == 1 and inp == oup))
    ks = jax.random.split(key, 6)
    raw = {}
    if cfg['expand']:
        raw['w_exp'] = (math.sqrt(2.0 / hidden)
                        * jax.random.normal(ks[0], (hidden, inp, 1, 1), jnp.float32))
        raw['bn_exp'] = _rand_bn(ks[1], hidden)
    raw['w_dw'] = (math.sqrt(2.0 / 9.0)
                   * jax.random.normal(ks[2], (hidden, 1, 3, 3), jnp.float32))
    raw['bn_dw'] = _rand_bn(ks[3], hidden)
    raw['w_proj'] = (math.sqrt(2.0 / oup)
                     * jax.random.normal(ks[4], (oup, hidden, 1, 1), jnp.float32))
    raw['bn_proj'] = _rand_bn(ks[5], oup)
    return raw, cfg


def _fold(w_io, bn):
    g, b, m, v = bn
    scale = g * jax.lax.rsqrt(v + EPS)
    return w_io * scale[None, :], b - m * scale


def fold_and_pad(raw, cfg):
    """Fold BN into weights; pad all channel dims to multiples of 128 lanes."""
    cin_p = _ceil_to(cfg['inp'], LANE)
    hid_p = _ceil_to(cfg['hidden'], LANE)
    oup_p = _ceil_to(cfg['oup'], LANE)
    cfg.update(cin_p=cin_p, hid_p=hid_p, oup_p=oup_p)

    p = {}
    if cfg['expand']:
        w = raw['w_exp'][:, :, 0, 0].T                        # (inp, hidden)
        w, sh = _fold(w, raw['bn_exp'])
        w = jnp.pad(w, ((0, cin_p - cfg['inp']), (0, hid_p - cfg['hidden'])))
        p['w_exp'] = w.astype(jnp.bfloat16)
        p['b_exp'] = _pad_last(sh[None, :], hid_p)

    g, b, m, v = raw['bn_dw']
    scale = g * jax.lax.rsqrt(v + EPS)
    w9 = jnp.transpose(raw['w_dw'][:, 0], (1, 2, 0))          # (3,3,hidden)
    w9 = (w9 * scale).reshape(9, 1, cfg['hidden'])
    p['w_dw'] = _pad_last(w9, hid_p)
    p['b_dw'] = _pad_last((b - m * scale)[None, :], hid_p)

    w = raw['w_proj'][:, :, 0, 0].T                           # (hidden, oup)
    w, sh = _fold(w, raw['bn_proj'])
    w = jnp.pad(w, ((0, hid_p - cfg['hidden']), (0, oup_p - cfg['oup'])))
    p['w_proj'] = w.astype(jnp.bfloat16)
    p['b_proj'] = _pad_last(sh[None, :], oup_p)
    return p


# ----------------------------- pure-JAX reference ---------------------------

def reference_forward(raw, cfg, x_nchw):
    def bn(y, p):
        g, b, m, v = p
        return (y - m) / jnp.sqrt(v + EPS) * g + b

    x = jnp.transpose(x_nchw, (0, 2, 3, 1)).astype(jnp.float32)
    out = x
    if cfg['expand']:
        out = jnp.einsum('nhwc,oc->nhwo', out, raw['w_exp'][:, :, 0, 0])
        out = jnp.clip(bn(out, raw['bn_exp']), 0.0, 6.0)
    s = cfg['stride']
    h, wd = out.shape[1], out.shape[2]
    ho = (h - 1) // s + 1
    wo = (wd - 1) // s + 1
    w9 = jnp.transpose(raw['w_dw'][:, 0], (1, 2, 0))
    xp = jnp.pad(out, ((0, 0), (1, 1), (1, 1), (0, 0)))
    acc = 0.0
    for dy in range(3):
        for dx in range(3):
            acc = acc + xp[:, dy:dy + (ho - 1) * s + 1:s,
                              dx:dx + (wo - 1) * s + 1:s, :] * w9[dy, dx]
    out = jnp.clip(bn(acc, raw['bn_dw']), 0.0, 6.0)
    out = jnp.einsum('nhwc,oc->nhwo', out, raw['w_proj'][:, :, 0, 0])
    out = bn(out, raw['bn_proj'])
    if cfg['use_res']:
        out = out + x
    return jnp.transpose(out, (0, 3, 1, 2))


# ----------------------------- main -----------------------------------------

if __name__ == "__main__":
    root = jax.random.PRNGKey(0)
    kx, kp1, kp2 = jax.random.split(root, 3)
    x = jax.random.normal(kx, (2, 4, 16, 16), jnp.float32)   # NCHW like PyTorch

    tests = [
        (kp1, dict(inp=4, oup=4, stride=1, expand_ratio=6), (2, 4, 16, 16)),
        (kp2, dict(inp=4, oup=8, stride=2, expand_ratio=6), (2, 8, 8, 8)),
    ]
    for key, spec, expect_shape in tests:
        raw, cfg = make_raw_params(key, **spec)
        params = fold_and_pad(raw, cfg)
        fwd = jax.jit(functools.partial(inverted_residual_forward, cfg=cfg))
        out = fwd(params, x)
        jax.block_until_ready(out)
        assert out.shape == expect_shape, (out.shape, expect_shape)
        assert bool(jnp.all(jnp.isfinite(out)))
        ref = reference_forward(raw, cfg, x)
        diff = float(jnp.max(jnp.abs(out - ref)))
        scale = float(jnp.max(jnp.abs(ref)))
        assert diff <= 5e-2 * scale + 5e-2, ("mismatch", diff, scale)

    print("KERNEL_OK")
</pallas_src>

<mosaic_0001>
module attributes {stable_mosaic.version = 11 : i64} {
  func.func @_fused_kernel(%arg0: i32, %arg1: i32, %arg2: memref<1x18x24x128xf32, #tpu.memory_space<vmem>>, %arg3: memref<128x128xbf16, #tpu.memory_space<vmem>>, %arg4: memref<1x128xf32, #tpu.memory_space<vmem>>, %arg5: memref<432x1xf32, #tpu.memory_space<vmem>>, %arg6: memref<9x1x128xf32, #tpu.memory_space<vmem>>, %arg7: memref<1x128xf32, #tpu.memory_space<vmem>>, %arg8: memref<128x128xbf16, #tpu.memory_space<vmem>>, %arg9: memref<1x128xf32, #tpu.memory_space<vmem>>, %arg10: memref<1x256x128xf32, #tpu.memory_space<vmem>>, %arg11: memref<256x128xf32, #tpu.memory_space<vmem>>) attributes {dimension_semantics = [#tpu.dimension_semantics<parallel>, #tpu.dimension_semantics<arbitrary>], iteration_bounds = array<i64: 2, 1>, scalar_prefetch = 0 : i64, scratch_operands = 1 : i64, tpu.core_type = #tpu.core_type<tc>, window_params = [{transform_indices = @transform_0, window_bounds = array<i64: 1, 18, 24, 128>}, {transform_indices = @transform_1, window_bounds = array<i64: 128, 128>}, {transform_indices = @transform_2, window_bounds = array<i64: 1, 128>}, {pipeline_mode = #tpu.pipeline_mode<synchronous>, transform_indices = @transform_3, window_bounds = array<i64: 432, 1>}, {transform_indices = @transform_4, window_bounds = array<i64: 9, 1, 128>}, {transform_indices = @transform_5, window_bounds = array<i64: 1, 128>}, {transform_indices = @transform_6, window_bounds = array<i64: 128, 128>}, {pipeline_mode = #tpu.pipeline_mode<synchronous>, transform_indices = @transform_7, window_bounds = array<i64: 1, 128>}, {transform_indices = @transform_8, window_bounds = array<i64: 1, 256, 128>}]} {
    %c0_i32 = arith.constant 0 : i32
    %0 = arith.cmpi eq, %arg1, %c0_i32 : i32
    %1 = arith.extui %0 : i1 to i32
    %c0_i32_0 = arith.constant 0 : i32
    %2 = arith.cmpi ne, %1, %c0_i32_0 : i32
    scf.if %2 {
      %cst_28 = arith.constant 0.000000e+00 : f32
      %101 = vector.broadcast %cst_28 : f32 to vector<256x128xf32>
      %c0_29 = arith.constant 0 : index
      %c0_30 = arith.constant 0 : index
      %102 = vector.load %arg11[%c0_29, %c0_30] : memref<256x128xf32, #tpu.memory_space<vmem>>, vector<256x128xf32>
      tpu.vector_store %arg11[%c0_29, %c0_30], %101 {strides = array<i32>} : memref<256x128xf32, #tpu.memory_space<vmem>>, vector<256x128xf32>,
    } else {
    }
    %c0 = arith.constant 0 : index
    %c0_1 = arith.constant 0 : index
    %c0_2 = arith.constant 0 : index
    %c0_3 = arith.constant 0 : index
    %3 = vector.load %arg2[%c0, %c0_1, %c0_2, %c0_3] : memref<1x18x24x128xf32, #tpu.memory_space<vmem>>, vector<1x18x24x128xf32>
    %4 = vector.shape_cast %3 : vector<1x18x24x128xf32> to vector<18x24x128xf32>
    %5 = vector.shape_cast %4 : vector<18x24x128xf32> to vector<432x128xf32>
    %6 = arith.truncf %5 : vector<432x128xf32> to vector<432x128xbf16>
    %c0_4 = arith.constant 0 : index
    %c0_5 = arith.constant 0 : index
    %7 = vector.load %arg3[%c0_4, %c0_5] : memref<128x128xbf16, #tpu.memory_space<vmem>>, vector<128x128xbf16>
    %cst = arith.constant dense<0.000000e+00> : vector<432x128xf32>
    %8 = tpu.matmul %6, %7, %cst {dimension_numbers = #tpu.dot_dimension_numbers<[1], [0], [0], [1], [0, 0, 1, 1], [], []>} : vector<432x128xbf16>, vector<128x128xbf16>, vector<432x128xf32> -> vector<432x128xf32>
    %c0_6 = arith.constant 0 : index
    %c0_7 = arith.constant 0 : index
    %9 = vector.load %arg4[%c0_6, %c0_7] : memref<1x128xf32, #tpu.memory_space<vmem>>, vector<1x128xf32>
    %10 = vector.broadcast %9 : vector<1x128xf32> to vector<432x128xf32>
    %11 = arith.addf %8, %10 : vector<432x128xf32>
    %cst_8 = arith.constant 0.000000e+00 : f32
    %cst_9 = arith.constant 6.000000e+00 : f32
    %12 = vector.broadcast %cst_8 : f32 to vector<432x128xf32>
    %13 = arith.maximumf %12, %11 : vector<432x128xf32>
    %14 = vector.broadcast %cst_9 : f32 to vector<432x128xf32>
    %15 = arith.minimumf %14, %13 : vector<432x128xf32>
    %c0_10 = arith.constant 0 : index
    %c0_11 = arith.constant 0 : index
    %16 = vector.load %arg5[%c0_10, %c0_11] : memref<432x1xf32, #tpu.memory_space<vmem>>, vector<432x1xf32>
    %17 = vector.broadcast %16 : vector<432x1xf32> to vector<432x128xf32>
    %18 = arith.mulf %15, %17 : vector<432x128xf32>
    %19 = vector.shape_cast %18 : vector<432x128xf32> to vector<18x24x128xf32>
    %c0_12 = arith.constant 0 : index
    %c0_13 = arith.constant 0 : index
    %c0_14 = arith.constant 0 : index
    %20 = vector.load %arg6[%c0_12, %c0_13, %c0_14] : memref<9x1x128xf32, #tpu.memory_space<vmem>>, vector<9x1x128xf32>
    %21 = vector.extract_strided_slice %19 {offsets = [0, 0, 0], sizes = [16, 16, 128], strides = [1, 1, 1]} : vector<18x24x128xf32> to vector<16x16x128xf32>
    %22 = vector.extract_strided_slice %20 {offsets = [0, 0, 0], sizes = [1, 1, 128], strides = [1, 1, 1]} : vector<9x1x128xf32> to vector<1x1x128xf32>
    %23 = vector.shape_cast %22 : vector<1x1x128xf32> to vector<1x128xf32>
    %24 = vector.shape_cast %23 : vector<1x128xf32> to vector<1x1x128xf32>
    %25 = vector.broadcast %24 : vector<1x1x128xf32> to vector<16x16x128xf32>
    %26 = arith.mulf %21, %25 : vector<16x16x128xf32>
    %27 = vector.extract_strided_slice %19 {offsets = [0, 1, 0], sizes = [16, 16, 128], strides = [1, 1, 1]} : vector<18x24x128xf32> to vector<16x16x128xf32>
    %28 = vector.extract_strided_slice %20 {offsets = [1, 0, 0], sizes = [1, 1, 128], strides = [1, 1, 1]} : vector<9x1x128xf32> to vector<1x1x128xf32>
    %29 = vector.shape_cast %28 : vector<1x1x128xf32> to vector<1x128xf32>
    %30 = vector.shape_cast %29 : vector<1x128xf32> to vector<1x1x128xf32>
    %31 = vector.broadcast %30 : vector<1x1x128xf32> to vector<16x16x128xf32>
    %32 = arith.mulf %27, %31 : vector<16x16x128xf32>
    %33 = vector.extract_strided_slice %19 {offsets = [0, 2, 0], sizes = [16, 16, 128], strides = [1, 1, 1]} : vector<18x24x128xf32> to vector<16x16x128xf32>
    %34 = vector.extract_strided_slice %20 {offsets = [2, 0, 0], sizes = [1, 1, 128], strides = [1, 1, 1]} : vector<9x1x128xf32> to vector<1x1x128xf32>
    %35 = vector.shape_cast %34 : vector<1x1x128xf32> to vector<1x128xf32>
    %36 = vector.shape_cast %35 : vector<1x128xf32> to vector<1x1x128xf32>
    %37 = vector.broadcast %36 : vector<1x1x128xf32> to vector<16x16x128xf32>
    %38 = arith.mulf %33, %37 : vector<16x16x128xf32>
    %39 = vector.extract_strided_slice %19 {offsets = [1, 0, 0], sizes = [16, 16, 128], strides = [1, 1, 1]} : vector<18x24x128xf32> to vector<16x16x128xf32>
    %40 = vector.extract_strided_slice %20 {offsets = [3, 0, 0], sizes = [1, 1, 128], strides = [1, 1, 1]} : vector<9x1x128xf32> to vector<1x1x128xf32>
    %41 = vector.shape_cast %40 : vector<1x1x128xf32> to vector<1x128xf32>
    %42 = vector.shape_cast %41 : vector<1x128xf32> to vector<1x1x128xf32>
    %43 = vector.broadcast %42 : vector<1x1x128xf32> to vector<16x16x128xf32>
    %44 = arith.mulf %39, %43 : vector<16x16x128xf32>
    %45 = vector.extract_strided_slice %19 {offsets = [1, 1, 0], sizes = [16, 16, 128], strides = [1, 1, 1]} : vector<18x24x128xf32> to vector<16x16x128xf32>
    %46 = vector.extract_strided_slice %20 {offsets = [4, 0, 0], sizes = [1, 1, 128], strides = [1, 1, 1]} : vector<9x1x128xf32> to vector<1x1x128xf32>
    %47 = vector.shape_cast %46 : vector<1x1x128xf32> to vector<1x128xf32>
    %48 = vector.shape_cast %47 : vector<1x128xf32> to vector<1x1x128xf32>
    %49 = vector.broadcast %48 : vector<1x1x128xf32> to vector<16x16x128xf32>
    %50 = arith.mulf %45, %49 : vector<16x16x128xf32>
    %51 = vector.extract_strided_slice %19 {offsets = [1, 2, 0], sizes = [16, 16, 128], strides = [1, 1, 1]} : vector<18x24x128xf32> to vector<16x16x128xf32>
    %52 = vector.extract_strided_slice %20 {offsets = [5, 0, 0], sizes = [1, 1, 128], strides = [1, 1, 1]} : vector<9x1x128xf32> to vector<1x1x128xf32>
    %53 = vector.shape_cast %52 : vector<1x1x128xf32> to vector<1x128xf32>
    %54 = vector.shape_cast %53 : vector<1x128xf32> to vector<1x1x128xf32>
    %55 = vector.broadcast %54 : vector<1x1x128xf32> to vector<16x16x128xf32>
    %56 = arith.mulf %51, %55 : vector<16x16x128xf32>
    %57 = vector.extract_strided_slice %19 {offsets = [2, 0, 0], sizes = [16, 16, 128], strides = [1, 1, 1]} : vector<18x24x128xf32> to vector<16x16x128xf32>
    %58 = vector.extract_strided_slice %20 {offsets = [6, 0, 0], sizes = [1, 1, 128], strides = [1, 1, 1]} : vector<9x1x128xf32> to vector<1x1x128xf32>
    %59 = vector.shape_cast %58 : vector<1x1x128xf32> to vector<1x128xf32>
    %60 = vector.shape_cast %59 : vector<1x128xf32> to vector<1x1x128xf32>
    %61 = vector.broadcast %60 : vector<1x1x128xf32> to vector<16x16x128xf32>
    %62 = arith.mulf %57, %61 : vector<16x16x128xf32>
    %63 = vector.extract_strided_slice %19 {offsets = [2, 1, 0], sizes = [16, 16, 128], strides = [1, 1, 1]} : vector<18x24x128xf32> to vector<16x16x128xf32>
    %64 = vector.extract_strided_slice %20 {offsets = [7, 0, 0], sizes = [1, 1, 128], strides = [1, 1, 1]} : vector<9x1x128xf32> to vector<1x1x128xf32>
    %65 = vector.shape_cast %64 : vector<1x1x128xf32> to vector<1x128xf32>
    %66 = vector.shape_cast %65 : vector<1x128xf32> to vector<1x1x128xf32>
    %67 = vector.broadcast %66 : vector<1x1x128xf32> to vector<16x16x128xf32>
    %68 = arith.mulf %63, %67 : vector<16x16x128xf32>
    %69 = vector.extract_strided_slice %19 {offsets = [2, 2, 0], sizes = [16, 16, 128], strides = [1, 1, 1]} : vector<18x24x128xf32> to vector<16x16x128xf32>
    %70 = vector.extract_strided_slice %20 {offsets = [8, 0, 0], sizes = [1, 1, 128], strides = [1, 1, 1]} : vector<9x1x128xf32> to vector<1x1x128xf32>
    %71 = vector.shape_cast %70 : vector<1x1x128xf32> to vector<1x128xf32>
    %72 = vector.shape_cast %71 : vector<1x128xf32> to vector<1x1x128xf32>
    %73 = vector.broadcast %72 : vector<1x1x128xf32> to vector<16x16x128xf32>
    %74 = arith.mulf %69, %73 : vector<16x16x128xf32>
    %75 = arith.addf %26, %32 : vector<16x16x128xf32>
    %76 = arith.addf %38, %44 : vector<16x16x128xf32>
    %77 = arith.addf %50, %56 : vector<16x16x128xf32>
    %78 = arith.addf %62, %68 : vector<16x16x128xf32>
    %79 = arith.addf %75, %76 : vector<16x16x128xf32>
    %80 = arith.addf %77, %78 : vector<16x16x128xf32>
    %81 = arith.addf %79, %80 : vector<16x16x128xf32>
    %82 = arith.addf %81, %74 : vector<16x16x128xf32>
    %c0_15 = arith.constant 0 : index
    %c0_16 = arith.constant 0 : index
    %83 = vector.load %arg7[%c0_15, %c0_16] : memref<1x128xf32, #tpu.memory_space<vmem>>, vector<1x128xf32>
    %84 = vector.shape_cast %83 : vector<1x128xf32> to vector<1x1x128xf32>
    %85 = vector.broadcast %84 : vector<1x1x128xf32> to vector<16x16x128xf32>
    %86 = arith.addf %82, %85 : vector<16x16x128xf32>
    %cst_17 = arith.constant 0.000000e+00 : f32
    %cst_18 = arith.constant 6.000000e+00 : f32
    %87 = vector.broadcast %cst_17 : f32 to vector<16x16x128xf32>
    %88 = arith.maximumf %87, %86 : vector<16x16x128xf32>
    %89 = vector.broadcast %cst_18 : f32 to vector<16x16x128xf32>
    %90 = arith.minimumf %89, %88 : vector<16x16x128xf32>
    %91 = vector.shape_cast %90 : vector<16x16x128xf32> to vector<256x128xf32>
    %92 = arith.truncf %91 : vector<256x128xf32> to vector<256x128xbf16>
    %c0_19 = arith.constant 0 : index
    %c0_20 = arith.constant 0 : index
    %93 = vector.load %arg11[%c0_19, %c0_20] : memref<256x128xf32, #tpu.memory_space<vmem>>, vector<256x128xf32>
    %c0_21 = arith.constant 0 : index
    %c0_22 = arith.constant 0 : index
    %94 = vector.load %arg8[%c0_21, %c0_22] : memref<128x128xbf16, #tpu.memory_space<vmem>>, vector<128x128xbf16>
    %cst_23 = arith.constant dense<0.000000e+00> : vector<256x128xf32>
    %95 = tpu.matmul %92, %94, %cst_23 {dimension_numbers = #tpu.dot_dimension_numbers<[1], [0], [0], [1], [0, 0, 1, 1], [], []>} : vector<256x128xbf16>, vector<128x128xbf16>, vector<256x128xf32> -> vector<256x128xf32>
    %96 = arith.addf %93, %95 : vector<256x128xf32>
    %c0_24 = arith.constant 0 : index
    %c0_25 = arith.constant 0 : index
    %97 = vector.load %arg11[%c0_24, %c0_25] : memref<256x128xf32, #tpu.memory_space<vmem>>, vector<256x128xf32>
    tpu.vector_store %arg11[%c0_24, %c0_25], %96 {strides = array<i32>} : memref<256x128xf32, #tpu.memory_space<vmem>>, vector<256x128xf32>,
    %c0_i32_26 = arith.constant 0 : i32
    %98 = arith.cmpi eq, %arg1, %c0_i32_26 : i32
    %99 = arith.extui %98 : i1 to i32
    %c0_i32_27 = arith.constant 0 : i32
    %100 = arith.cmpi ne, %99, %c0_i32_27 : i32
    scf.if %100 {
      %c0_28 = arith.constant 0 : index
      %c0_29 = arith.constant 0 : index
      %101 = vector.load %arg11[%c0_28, %c0_29] : memref<256x128xf32, #tpu.memory_space<vmem>>, vector<256x128xf32>
      %c0_30 = arith.constant 0 : index
      %c0_31 = arith.constant 0 : index
      %102 = vector.load %arg9[%c0_30, %c0_31] : memref<1x128xf32, #tpu.memory_space<vmem>>, vector<1x128xf32>
      %103 = vector.broadcast %102 : vector<1x128xf32> to vector<256x128xf32>
      %104 = arith.addf %101, %103 : vector<256x128xf32>
      %105 = vector.extract_strided_slice %4 {offsets = [1, 1, 0], sizes = [16, 16, 128], strides = [1, 1, 1]} : vector<18x24x128xf32> to vector<16x16x128xf32>
      %106 = vector.shape_cast %105 : vector<16x16x128xf32> to vector<256x128xf32>
      %107 = arith.addf %104, %106 : vector<256x128xf32>
      %c0_32 = arith.constant 0 : index
      %c0_33 = arith.constant 0 : index
      %c0_34 = arith.constant 0 : index
      %108 = vector.load %arg10[%c0_32, %c0_33, %c0_34] : memref<1x256x128xf32, #tpu.memory_space<vmem>>, vector<1x256x128xf32>
      %109 = vector.shape_cast %108 : vector<1x256x128xf32> to vector<256x128xf32>
      %110 = vector.shape_cast %107 : vector<256x128xf32> to vector<1x256x128xf32>
      tpu.vector_store %arg10[%c0_32, %c0_33, %c0_34], %110 {strides = array<i32>} : memref<1x256x128xf32, #tpu.memory_space<vmem>>, vector<1x256x128xf32>,
    } else {
    }
    return
  }
  func.func @transform_0(%arg0: i32, %arg1: i32) -> (i32, i32, i32, i32) {
    %c0_i32 = arith.constant 0 : i32
    %c0_i32_0 = arith.constant 0 : i32
    %c0_i32_1 = arith.constant 0 : i32
    %c0_i32_2 = arith.constant 0 : i32
    return %arg0, %c0_i32, %c0_i32_0, %c0_i32_1 : i32, i32, i32, i32
  }
  func.func @transform_1(%arg0: i32, %arg1: i32) -> (i32, i32) {
    %c0_i32 = arith.constant 0 : i32
    %c0_i32_0 = arith.constant 0 : i32
    return %c0_i32, %arg1 : i32, i32
  }
  func.func @transform_2(%arg0: i32, %arg1: i32) -> (i32, i32) {
    %c0_i32 = arith.constant 0 : i32
    %c0_i32_0 = arith.constant 0 : i32
    return %c0_i32, %arg1 : i32, i32
  }
  func.func @transform_3(%arg0: i32, %arg1: i32) -> (i32, i32) {
    %c0_i32 = arith.constant 0 : i32
    %c0_i32_0 = arith.constant 0 : i32
    %c0_i32_1 = arith.constant 0 : i32
    return %c0_i32, %c0_i32_0 : i32, i32
  }
  func.func @transform_4(%arg0: i32, %arg1: i32) -> (i32, i32, i32) {
    %c0_i32 = arith.constant 0 : i32
    %c0_i32_0 = arith.constant 0 : i32
    %c0_i32_1 = arith.constant 0 : i32
    return %c0_i32, %c0_i32_0, %arg1 : i32, i32, i32
  }
  func.func @transform_5(%arg0: i32, %arg1: i32) -> (i32, i32) {
    %c0_i32 = arith.constant 0 : i32
    %c0_i32_0 = arith.constant 0 : i32
    return %c0_i32, %arg1 : i32, i32
  }
  func.func @transform_6(%arg0: i32, %arg1: i32) -> (i32, i32) {
    %c0_i32 = arith.constant 0 : i32
    %c0_i32_0 = arith.constant 0 : i32
    return %arg1, %c0_i32 : i32, i32
  }
  func.func @transform_7(%arg0: i32, %arg1: i32) -> (i32, i32) {
    %c0_i32 = arith.constant 0 : i32
    %c0_i32_0 = arith.constant 0 : i32
    %c0_i32_1 = arith.constant 0 : i32
    return %c0_i32, %c0_i32_0 : i32, i32
  }
  func.func @transform_8(%arg0: i32, %arg1: i32) -> (i32, i32, i32) {
    %c0_i32 = arith.constant 0 : i32
    %c0_i32_0 = arith.constant 0 : i32
    %c0_i32_1 = arith.constant 0 : i32
    return %arg0, %c0_i32, %c0_i32_0 : i32, i32, i32
  }
}

</mosaic_0001>

<llo_original>
// kernel: inverted_residual_forward.1
$region0: #{inverted_residual_forward.1}
  #allocation0 [shape = 'u32[]', space=smem, size = 0x4, offset = 0x4, fixed_abs, tag = 'smem constant byte address 0x4 - core index']
  #allocation1 [shape = 'u32[144,128]{1,0:T(1,128)}', space=vmem, size = 0x12000, scoped, tag = 'internal scratch']
  #allocation2 [shape = 'f32[256,128]{1,0:T(8,128)}', space=vmem, size = 0x20000, scoped, tag = 'scratch operand']
  %s0 = inlined_call_operand.vmem [shape: f32[2,18,24,128], index: 0, kind: input, shape index: {}]
  %s1 = inlined_call_operand.vmem [shape: bf16[128,128], index: 1, kind: input, shape index: {}]
  %s2 = inlined_call_operand.vmem [shape: f32[1,128], index: 2, kind: input, shape index: {}]
  %s3 = inlined_call_operand.vmem [shape: f32[432,1], index: 3, kind: input, shape index: {}]
  %s4 = inlined_call_operand.vmem [shape: f32[9,1,128], index: 4, kind: input, shape index: {}]
  %s5 = inlined_call_operand.vmem [shape: f32[1,128], index: 5, kind: input, shape index: {}]
  %s6 = inlined_call_operand.vmem [shape: bf16[128,128], index: 6, kind: input, shape index: {}]
  %s7 = inlined_call_operand.vmem [shape: f32[1,128], index: 7, kind: input, shape index: {}]
  %s8 = inlined_call_operand.vmem [shape: f32[2,256,128], index: 8, kind: output, shape index: {}]
  %s9 = sld [smem:[#allocation0]]
  $region73: #{inverted_residual_forward.1} parent=0
    _
  %s11 = ssub.s32 1, %s9
  %s12 = scalar_select 0, %s11, %s9
  loop: start=0, step=1, limit=4
  $region2: #{inverted_residual_forward.1} parent=0 // loop_pre_header
    _
  $region3: #{inverted_residual_forward.1} parent=0 // loop_header
    %s14 = sphi 0, %s18
    %p15 = scmp.ge.s32.totalorder %s14, 4
    %s21 = sphi 0, %s33
    %s22 = sphi 0, %s29
    %s23 = sphi 0, %s21
    %s24 = sphi 0, %s22
    %s25 = sphi 0, %s23
    %s26 = sphi 0, %s24
    %s36 = sphi 0, %s38
    %s39 = sphi 0, %s36
    %s40 = sphi 0, %s39
    %s56 = sphi 0, %s40
    %s62 = sphi 0, %s64
    %s65 = sphi 0, %s62
    %s66 = sphi 0, %s65
    %s82 = sphi 0, %s66
    %s88 = sphi 0, %s90
    %s91 = sphi 0, %s88
    %s92 = sphi 0, %s91
    %s108 = sphi 0, %s92
    %s112 = sphi 0, %s112
    %s114 = sphi 0, %s112
    %s115 = sphi 0, %s114
    %s129 = sphi 0, %s115
    %s135 = sphi 0, %s137
    %s138 = sphi 0, %s135
    %s139 = sphi 0, %s138
    %s155 = sphi 0, %s139
    %s161 = sphi 0, %s163
    %s164 = sphi 0, %s161
    %s165 = sphi 0, %s164
    %s181 = sphi 0, %s165
    %s187 = sphi 0, %s189
    %s190 = sphi 0, %s187
    %s191 = sphi 0, %s190
    %s207 = sphi 0, %s191
    %s211 = sphi 0, %s211
    %s213 = sphi 0, %s211
    %s214 = sphi 0, %s213
    %s228 = sphi 0, %s214
    %s234 = sphi 0, %s236
    %s237 = sphi 0, %s234
    %s238 = sphi 0, %s237
    %s254 = sphi 0, %s238
  $region4: #{inverted_residual_forward.1} parent=0 // loop_header_branch
    %17 = sbr.rel (%p15) target = $region8
  $region5: #{inverted_residual_forward.1} parent=0 // loop_body
    %s19 = ssub.s32 %s14, 1
    %s20 = ssub.s32 %s14, 2
    %s27 = sadd.s32 1, %s22
    %p28 = scmp.ge.s32.totalorder %s27, 1
    %s29 = scalar_select %p28, 0, %s27
    %s30 = sadd.s32 1, %s21
    %s31 = scalar_select %p28, %s30, %s21
    %p32 = scmp.ge.s32.totalorder %s31, 2
    %s33 = scalar_select %p32, 0, %s31
    %s34 = ssub.s32 %s21, %s33
    %p35 = scmp.eq.s32.totalorder %s34, 0
    %s37 = sadd.s32 %s36, 1
    %s38 = scalar_select %p35, %s36, %s37
    %p41 = pneg %p35
    %p42 = scmp.eq.s32.totalorder %s14, 1
    %p43 = por %p41, %p42
    %p44 = scmp.ne.s32.totalorder %s36, %s39
    %p45 = scmp.eq.s32.totalorder %s14, 0
    %p46 = por %p44, %p45
    %p47 = scmp.ne.s32.totalorder %s36, %s39
    %p48 = scmp.eq.s32.totalorder %s19, 1
    %p49 = por %p47, %p48
    %p50 = scmp.ne.s32.totalorder %s39, %s40
    %p51 = scmp.eq.s32.totalorder %s19, 0
    %p52 = por %p50, %p51
    %p53 = scmp.ne.s32.totalorder %s39, %s40
    %p54 = scmp.eq.s32.totalorder %s20, 1
    %p55 = por %p53, %p54
    %p57 = scmp.ne.s32.totalorder %s40, %s56
    %p58 = scmp.eq.s32.totalorder %s20, 0
    %p59 = por %p57, %p58
    %s60 = ssub.s32 %s22, %s29
    %p61 = scmp.eq.s32.totalorder %s60, 0
    %s63 = sadd.s32 %s62, 1
    %s64 = scalar_select %p61, %s62, %s63
    %p67 = pneg %p61
    %p68 = scmp.eq.s32.totalorder %s14, 1
    %p69 = por %p67, %p68
    %p70 = scmp.ne.s32.totalorder %s62, %s65
    %p71 = scmp.eq.s32.totalorder %s14, 0
    %p72 = por %p70, %p71
    %p73 = scmp.ne.s32.totalorder %s62, %s65
    %p74 = scmp.eq.s32.totalorder %s19, 1
    %p75 = por %p73, %p74
    %p76 = scmp.ne.s32.totalorder %s65, %s66
    %p77 = scmp.eq.s32.totalorder %s19, 0
    %p78 = por %p76, %p77
    %p79 = scmp.ne.s32.totalorder %s65, %s66
    %p80 = scmp.eq.s32.totalorder %s20, 1
    %p81 = por %p79, %p80
    %p83 = scmp.ne.s32.totalorder %s66, %s82
    %p84 = scmp.eq.s32.totalorder %s20, 0
    %p85 = por %p83, %p84
    %s86 = ssub.s32 %s22, %s29
    %p87 = scmp.eq.s32.totalorder %s86, 0
    %s89 = sadd.s32 %s88, 1
    %s90 = scalar_select %p87, %s88, %s89
    %p93 = pneg %p87
    %p94 = scmp.eq.s32.totalorder %s14, 1
    %p95 = por %p93, %p94
    %p96 = scmp.ne.s32.totalorder %s88, %s91
    %p97 = scmp.eq.s32.totalorder %s14, 0
    %p98 = por %p96, %p97
    %p99 = scmp.ne.s32.totalorder %s88, %s91
    %p100 = scmp.eq.s32.totalorder %s19, 1
    %p101 = por %p99, %p100
    %p102 = scmp.ne.s32.totalorder %s91, %s92
    %p103 = scmp.eq.s32.totalorder %s19, 0
    %p104 = por %p102, %p103
    %p105 = scmp.ne.s32.totalorder %s91, %s92
    %p106 = scmp.eq.s32.totalorder %s20, 1
    %p107 = por %p105, %p106
    %p109 = scmp.ne.s32.totalorder %s92, %s108
    %p110 = scmp.eq.s32.totalorder %s20, 0
    %p111 = por %p109, %p110
    %s113 = sadd.s32 %s112, 1
    %p116 = scmp.eq.s32.totalorder %s14, 1
    %p117 = scmp.ne.s32.totalorder %s112, %s114
    %p118 = scmp.eq.s32.totalorder %s14, 0
    %p119 = por %p117, %p118
    %p120 = scmp.ne.s32.totalorder %s112, %s114
    %p121 = scmp.eq.s32.totalorder %s19, 1
    %p122 = por %p120, %p121
    %p123 = scmp.ne.s32.totalorder %s114, %s115
    %p124 = scmp.eq.s32.totalorder %s19, 0
    %p125 = por %p123, %p124
    %p126 = scmp.ne.s32.totalorder %s114, %s115
    %p127 = scmp.eq.s32.totalorder %s20, 1
    %p128 = por %p126, %p127
    %p130 = scmp.ne.s32.totalorder %s115, %s129
    %p131 = scmp.eq.s32.totalorder %s20, 0
    %p132 = por %p130, %p131
    %s133 = ssub.s32 %s22, %s29
    %p134 = scmp.eq.s32.totalorder %s133, 0
    %s136 = sadd.s32 %s135, 1
    %s137 = scalar_select %p134, %s135, %s136
    %p140 = pneg %p134
    %p141 = scmp.eq.s32.totalorder %s14, 1
    %p142 = por %p140, %p141
    %p143 = scmp.ne.s32.totalorder %s135, %s138
    %p144 = scmp.eq.s32.totalorder %s14, 0
    %p145 = por %p143, %p144
    %p146 = scmp.ne.s32.totalorder %s135, %s138
    %p147 = scmp.eq.s32.totalorder %s19, 1
    %p148 = por %p146, %p147
    %p149 = scmp.ne.s32.totalorder %s138, %s139
    %p150 = scmp.eq.s32.totalorder %s19, 0
    %p151 = por %p149, %p150
    %p152 = scmp.ne.s32.totalorder %s138, %s139
    %p153 = scmp.eq.s32.totalorder %s20, 1
    %p154 = por %p152, %p153
    %p156 = scmp.ne.s32.totalorder %s139, %s155
    %p157 = scmp.eq.s32.totalorder %s20, 0
    %p158 = por %p156, %p157
    %s159 = ssub.s32 %s22, %s29
    %p160 = scmp.eq.s32.totalorder %s159, 0
    %s162 = sadd.s32 %s161, 1
    %s163 = scalar_select %p160, %s161, %s162
    %p166 = pneg %p160
    %p167 = scmp.eq.s32.totalorder %s14, 1
    %p168 = por %p166, %p167
    %p169 = scmp.ne.s32.totalorder %s161, %s164
    %p170 = scmp.eq.s32.totalorder %s14, 0
    %p171 = por %p169, %p170
    %p172 = scmp.ne.s32.totalorder %s161, %s164
    %p173 = scmp.eq.s32.totalorder %s19, 1
    %p174 = por %p172, %p173
    %p175 = scmp.ne.s32.totalorder %s164, %s165
    %p176 = scmp.eq.s32.totalorder %s19, 0
    %p177 = por %p175, %p176
    %p178 = scmp.ne.s32.totalorder %s164, %s165
    %p179 = scmp.eq.s32.totalorder %s20, 1
    %p180 = por %p178, %p179
    %p182 = scmp.ne.s32.totalorder %s165, %s181
    %p183 = scmp.eq.s32.totalorder %s20, 0
    %p184 = por %p182, %p183
    %s185 = ssub.s32 %s22, %s29
    %p186 = scmp.eq.s32.totalorder %s185, 0
    %s188 = sadd.s32 %s187, 1
    %s189 = scalar_select %p186, %s187, %s188
    %p192 = pneg %p186
    %p193 = scmp.eq.s32.totalorder %s14, 1
    %p194 = por %p192, %p193
    %p195 = scmp.ne.s32.totalorder %s187, %s190
    %p196 = scmp.eq.s32.totalorder %s14, 0
    %p197 = por %p195, %p196
    %p198 = scmp.ne.s32.totalorder %s187, %s190
    %p199 = scmp.eq.s32.totalorder %s19, 1
    %p200 = por %p198, %p199
    %p201 = scmp.ne.s32.totalorder %s190, %s191
    %p202 = scmp.eq.s32.totalorder %s19, 0
    %p203 = por %p201, %p202
    %p204 = scmp.ne.s32.totalorder %s190, %s191
    %p205 = scmp.eq.s32.totalorder %s20, 1
    %p206 = por %p204, %p205
    %p208 = scmp.ne.s32.totalorder %s191, %s207
    %p209 = scmp.eq.s32.totalorder %s20, 0
    %p210 = por %p208, %p209
    %s212 = sadd.s32 %s211, 1
    %p215 = scmp.eq.s32.totalorder %s14, 1
    %p216 = scmp.ne.s32.totalorder %s211, %s213
    %p217 = scmp.eq.s32.totalorder %s14, 0
    %p218 = por %p216, %p217
    %p219 = scmp.ne.s32.totalorder %s211, %s213
    %p220 = scmp.eq.s32.totalorder %s19, 1
    %p221 = por %p219, %p220
    %p222 = scmp.ne.s32.totalorder %s213, %s214
    %p223 = scmp.eq.s32.totalorder %s19, 0
    %p224 = por %p222, %p223
    %p225 = scmp.ne.s32.totalorder %s213, %s214
    %p226 = scmp.eq.s32.totalorder %s20, 1
    %p227 = por %p225, %p226
    %p229 = scmp.ne.s32.totalorder %s214, %s228
    %p230 = scmp.eq.s32.totalorder %s20, 0
    %p231 = por %p229, %p230
    %s232 = ssub.s32 %s21, %s33
    %p233 = scmp.eq.s32.totalorder %s232, 0
    %s235 = sadd.s32 %s234, 1
    %s236 = scalar_select %p233, %s234, %s235
    %p239 = pneg %p233
    %p240 = scmp.eq.s32.totalorder %s14, 1
    %p241 = por %p239, %p240
    %p242 = scmp.ne.s32.totalorder %s234, %s237
    %p243 = scmp.eq.s32.totalorder %s14, 0
    %p244 = por %p242, %p243
    %p245 = scmp.ne.s32.totalorder %s234, %s237
    %p246 = scmp.eq.s32.totalorder %s19, 1
    %p247 = por %p245, %p246
    %p248 = scmp.ne.s32.totalorder %s237, %s238
    %p249 = scmp.eq.s32.totalorder %s19, 0
    %p250 = por %p248, %p249
    %p251 = scmp.ne.s32.totalorder %s237, %s238
    %p252 = scmp.eq.s32.totalorder %s20, 1
    %p253 = por %p251, %p252
    %p255 = scmp.ne.s32.totalorder %s238, %s254
    %p256 = scmp.eq.s32.totalorder %s20, 0
    %p257 = por %p255, %p256
    %p258 = scmp.le.s32.totalorder 1, %s14
    %p259 = scmp.lt.s32.totalorder %s14, 3
    %p260 = pnand %p258, %p259
    %p261 = pneg %p260
    // Predicated region
    $region9: #{inverted_residual_forward.1} parent=5 // pred_check
      _
    $region10: #{inverted_residual_forward.1} parent=5 // pred_check_branch
      %263 = sbr.rel (%p260) target = $region12
    $region11: #{inverted_residual_forward.1} parent=5 // pred_region
      %s264 = ssub.s32 %s14, 1
      // Predicated region
      $region13: #{inverted_residual_forward.1} parent=11 // pred_check
        %p265 = pneg %p78
      $region14: #{inverted_residual_forward.1} parent=11 // pred_check_branch
        %267 = sbr.rel (%p265) target = $region16
      $region15: #{inverted_residual_forward.1} parent=11 // pred_region
        %p268 = scmp.lt.s32.totalorder %s24, 0
        %s269 = scalar_select %p268, %s24, 0
        %s270 = smul.addr %s269, 4
        %s271 = scalar_lea.vmem %s1, %s270
      $region16: #{inverted_residual_forward.1} parent=11 // pred_fallthru
        _
      // Predicated region
      $region17: #{inverted_residual_forward.1} parent=11 // pred_check
        %p272 = pneg %p104
      $region18: #{inverted_residual_forward.1} parent=11 // pred_check_branch
        %274 = sbr.rel (%p272) target = $region20
      $region19: #{inverted_residual_forward.1} parent=11 // pred_region
        %p275 = scmp.lt.s32.totalorder %s24, 0
        %s276 = scalar_select %p275, %s24, 0
        %s277 = scalar_lea.vmem %s2, %s276
      $region20: #{inverted_residual_forward.1} parent=11 // pred_fallthru
        _
      // Predicated region
      $region21: #{inverted_residual_forward.1} parent=11 // pred_check
        %p278 = pneg %p125
      $region22: #{inverted_residual_forward.1} parent=11 // pred_check_branch
        %280 = sbr.rel (%p278) target = $region24
      $region23: #{inverted_residual_forward.1} parent=11 // pred_region
        _
      $region24: #{inverted_residual_forward.1} parent=11 // pred_fallthru
        _
      // Predicated region
      $region25: #{inverted_residual_forward.1} parent=11 // pred_check
        %p281 = pneg %p151
      $region26: #{inverted_residual_forward.1} parent=11 // pred_check_branch
        %283 = sbr.rel (%p281) target = $region28
      $region27: #{inverted_residual_forward.1} parent=11 // pred_region
        %p284 = scmp.lt.s32.totalorder %s24, 0
        %s285 = scalar_select %p284, %s24, 0
        %s286 = scalar_lea.vmem %s4, %s285
      $region28: #{inverted_residual_forward.1} parent=11 // pred_fallthru
        _
      // Predicated region
      $region29: #{inverted_residual_forward.1} parent=11 // pred_check
        %p287 = pneg %p177
      $region30: #{inverted_residual_forward.1} parent=11 // pred_check_branch
        %289 = sbr.rel (%p287) target = $region32
      $region31: #{inverted_residual_forward.1} parent=11 // pred_region
        %p290 = scmp.lt.s32.totalorder %s24, 0
        %s291 = scalar_select %p290, %s24, 0
        %s292 = scalar_lea.vmem %s5, %s291
      $region32: #{inverted_residual_forward.1} parent=11 // pred_fallthru
        _
      // Predicated region
      $region33: #{inverted_residual_forward.1} parent=11 // pred_check
        %p293 = pneg %p203
      $region34: #{inverted_residual_forward.1} parent=11 // pred_check_branch
        %295 = sbr.rel (%p293) target = $region36
      $region35: #{inverted_residual_forward.1} parent=11 // pred_region
        %s296 = smul.u32 16, %s24
        %p297 = scmp.lt.s32.totalorder %s296, 15
        %s298 = scalar_select %p297, %s296, 15
        %s299 = smul.addr %s298, 4
        %s300 = scalar_lea.vmem %s6, %s299
        %s301 = smul.u32 16, %s24
      $region36: #{inverted_residual_forward.1} parent=11 // pred_fallthru
        _
      // Predicated region
      $region37: #{inverted_residual_forward.1} parent=11 // pred_check
        %p302 = pneg %p224
      $region38: #{inverted_residual_forward.1} parent=11 // pred_check_branch
        %304 = sbr.rel (%p302) target = $region40
      $region39: #{inverted_residual_forward.1} parent=11 // pred_region
        _
      $region40: #{inverted_residual_forward.1} parent=11 // pred_fallthru
        _
    $region12: #{inverted_residual_forward.1} parent=5 // pred_fallthru
      _
    %p305 = scmp.lt.s32.totalorder %s14, 2
    // Predicated region
    $region41: #{inverted_residual_forward.1} parent=5 // pred_check
      %p306 = pneg %p305
    $region42: #{inverted_residual_forward.1} parent=5 // pred_check_branch
      %308 = sbr.rel (%p306) target = $region44
    $region43: #{inverted_residual_forward.1} parent=5 // pred_region
      // Predicated region
      $region45: #{inverted_residual_forward.1} parent=43 // pred_check
        %p309 = pneg %p46
      $region46: #{inverted_residual_forward.1} parent=43 // pred_check_branch
        %311 = sbr.rel (%p309) target = $region48
      $region47: #{inverted_residual_forward.1} parent=43 // pred_region
        %p312 = scmp.lt.s32.totalorder %s21, 1
        %s313 = scalar_select %p312, %s21, 1
        %s314 = smul.addr %s313, 54
        %s315 = smul.addr %s314, 8
        %s316 = scalar_lea.vmem %s0, %s315
      $region48: #{inverted_residual_forward.1} parent=43 // pred_fallthru
        _
    $region44: #{inverted_residual_forward.1} parent=5 // pred_fallthru
      _
    %p317 = scmp.le.s32.totalorder 1, %s14
    %p318 = scmp.lt.s32.totalorder %s14, 3
    %p319 = pnand %p317, %p318
    %p320 = pneg %p319
    // Predicated region
    $region49: #{inverted_residual_forward.1} parent=5 // pred_check
      _
    $region50: #{inverted_residual_forward.1} parent=5 // pred_check_branch
      %322 = sbr.rel (%p319) target = $region52
    $region51: #{inverted_residual_forward.1} parent=5 // pred_region
      %s323 = ssub.s32 %s14, 1
      %p324 = scmp.lt.s32.totalorder %s23, 1
      %s325 = scalar_select %p324, %s23, 1
      %s326 = smul.addr %s325, 54
      %s327 = smul.addr %s326, 8
      %s328 = scalar_lea.vmem %s0, %s327
      %p329 = pneg %p52
      %p330 = pneg %p49
      %p331 = scmp.lt.s32.totalorder %s24, 0
      %s332 = scalar_select %p331, %s24, 0
      %s333 = smul.addr %s332, 4
      %s334 = scalar_lea.vmem %s1, %s333
      %p335 = pneg %p78
      %p336 = pneg %p75
      %p337 = scmp.lt.s32.totalorder %s24, 0
      %s338 = scalar_select %p337, %s24, 0
      %s339 = scalar_lea.vmem %s2, %s338
      %p340 = pneg %p104
      %p341 = pneg %p101
      %p342 = pneg %p125
      %p343 = pneg %p122
      %p344 = scmp.lt.s32.totalorder %s24, 0
      %s345 = scalar_select %p344, %s24, 0
      %s346 = scalar_lea.vmem %s4, %s345
      %p347 = pneg %p151
      %p348 = pneg %p148
      %p349 = scmp.lt.s32.totalorder %s24, 0
      %s350 = scalar_select %p349, %s24, 0
      %s351 = scalar_lea.vmem %s5, %s350
      %p352 = pneg %p177
      %p353 = pneg %p174
      %s354 = smul.u32 16, %s24
      %p355 = scmp.lt.s32.totalorder %s354, 15
      %s356 = scalar_select %p355, %s354, 15
      %s357 = smul.addr %s356, 4
      %s358 = scalar_lea.vmem %s6, %s357
      %p359 = pneg %p203
      %p360 = pneg %p200
      %p361 = pneg %p224
      %p362 = pneg %p221
      %p363 = pneg %p250
      %p364 = pneg %p247
      %p365 = scmp.lt.s32.totalorder %s23, 1
      %s366 = scalar_select %p365, %s23, 1
      %s367 = smul.addr %s366, 32
      %s368 = smul.addr %s367, 8
      %s369 = scalar_lea.vmem %s8, %s368
      %p370 = scmp.lt.s32.totalorder %s23, 1
      %s371 = scalar_select %p370, %s23, 1
      %s372 = smul.addr %s371, 54
      %s373 = smul.addr %s372, 8
      %s374 = scalar_lea.vmem %s0, %s373
      %p375 = scmp.lt.s32.totalorder %s24, 0
      %s376 = scalar_select %p375, %s24, 0
      %s377 = smul.addr %s376, 4
      %s378 = scalar_lea.vmem %s1, %s377
      %p379 = scmp.lt.s32.totalorder %s24, 0
      %s380 = scalar_select %p379, %s24, 0
      %s381 = scalar_lea.vmem %s2, %s380
      %p382 = scmp.lt.s32.totalorder %s24, 0
      %s383 = scalar_select %p382, %s24, 0
      %s384 = scalar_lea.vmem %s4, %s383
      %p385 = scmp.lt.s32.totalorder %s24, 0
      %s386 = scalar_select %p385, %s24, 0
      %s387 = scalar_lea.vmem %s5, %s386
      %s388 = smul.u32 16, %s24
      %p389 = scmp.lt.s32.totalorder %s388, 15
      %s390 = scalar_select %p389, %s388, 15
      %s391 = smul.addr %s390, 4
      %s392 = scalar_lea.vmem %s6, %s391
      %s393 = smul.u32 16, %s24
      %p394 = scmp.lt.s32.totalorder %s23, 1
      %s395 = scalar_select %p394, %s23, 1
      %s396 = smul.addr %s395, 32
      %s397 = smul.addr %s396, 8
      %s398 = scalar_lea.vmem %s8, %s397
      %p400 = scmp.eq.s32.totalorder %s24, 0
      // Predicated region
      $region53: #{inverted_residual_forward.1} parent=51 // pred_check
        %p401 = pneg %p400
      $region54: #{inverted_residual_forward.1} parent=51 // pred_check_branch
        %403 = sbr.rel (%p401) target = $region56
      $region55: #{inverted_residual_forward.1} parent=51 // pred_region
        %404 = vst [vmem:[#allocation2] sm:$0xff] 0.0
        %405 = vst [vmem:[#allocation2 + $0x8] sm:$0xff] 0.0
        %406 = vst [vmem:[#allocation2 + $0x10] sm:$0xff] 0.0
        %407 = vst [vmem:[#allocation2 + $0x18] sm:$0xff] 0.0
        %408 = vst [vmem:[#allocation2 + $0x20] sm:$0xff] 0.0
        %409 = vst [vmem:[#allocation2 + $0x28] sm:$0xff] 0.0
        %410 = vst [vmem:[#allocation2 + $0x30] sm:$0xff] 0.0
        %411 = vst [vmem:[#allocation2 + $0x38] sm:$0xff] 0.0
        %412 = vst [vmem:[#allocation2 + $0x40] sm:$0xff] 0.0
        %413 = vst [vmem:[#allocation2 + $0x48] sm:$0xff] 0.0
        %414 = vst [vmem:[#allocation2 + $0x50] sm:$0xff] 0.0
        %415 = vst [vmem:[#allocation2 + $0x58] sm:$0xff] 0.0
        %416 = vst [vmem:[#allocation2 + $0x60] sm:$0xff] 0.0
        %417 = vst [vmem:[#allocation2 + $0x68] sm:$0xff] 0.0
        %418 = vst [vmem:[#allocation2 + $0x70] sm:$0xff] 0.0
        %419 = vst [vmem:[#allocation2 + $0x78] sm:$0xff] 0.0
        %420 = vst [vmem:[#allocation2 + $0x80] sm:$0xff] 0.0
        %421 = vst [vmem:[#allocation2 + $0x88] sm:$0xff] 0.0
        %422 = vst [vmem:[#allocation2 + $0x90] sm:$0xff] 0.0
        %423 = vst [vmem:[#allocation2 + $0x98] sm:$0xff] 0.0
        %424 = vst [vmem:[#allocation2 + $0xa0] sm:$0xff] 0.0
        %425 = vst [vmem:[#allocation2 + $0xa8] sm:$0xff] 0.0
        %426 = vst [vmem:[#allocation2 + $0xb0] sm:$0xff] 0.0
        %427 = vst [vmem:[#allocation2 + $0xb8] sm:$0xff] 0.0
        %428 = vst [vmem:[#allocation2 + $0xc0] sm:$0xff] 0.0
        %429 = vst [vmem:[#allocation2 + $0xc8] sm:$0xff] 0.0
        %430 = vst [vmem:[#allocation2 + $0xd0] sm:$0xff] 0.0
        %431 = vst [vmem:[#allocation2 + $0xd8] sm:$0xff] 0.0
        %432 = vst [vmem:[#allocation2 + $0xe0] sm:$0xff] 0.0
        %433 = vst [vmem:[#allocation2 + $0xe8] sm:$0xff] 0.0
        %434 = vst [vmem:[#allocation2 + $0xf0] sm:$0xff] 0.0
        %435 = vst [vmem:[#allocation2 + $0xf8] sm:$0xff] 0.0
      $region56: #{inverted_residual_forward.1} parent=51 // pred_fallthru
        _
      %v436 = vld [vmem:[%s374] sm:$0xff]
      %v437 = vld [vmem:[%s374 + $0x8] sm:$0xff]
      %v438 = vld [vmem:[%s374 + $0x10] sm:$0xff]
      %v439 = vld [vmem:[%s374 + $0x18] sm:$0xff]
      %v440 = vld [vmem:[%s374 + $0x20] sm:$0xff]
      %v441 = vld [vmem:[%s374 + $0x28] sm:$0xff]
      %v442 = vld [vmem:[%s374 + $0x30] sm:$0xff]
      %v443 = vld [vmem:[%s374 + $0x38] sm:$0xff]
      %v444 = vld [vmem:[%s374 + $0x40] sm:$0xff]
      %v445 = vld [vmem:[%s374 + $0x48] sm:$0xff]
      %v446 = vld [vmem:[%s374 + $0x50] sm:$0xff]
      %v447 = vld [vmem:[%s374 + $0x58] sm:$0xff]
      %v448 = vld [vmem:[%s374 + $0x60] sm:$0xff]
      %v449 = vld [vmem:[%s374 + $0x68] sm:$0xff]
      %v450 = vld [vmem:[%s374 + $0x70] sm:$0xff]
      %v451 = vld [vmem:[%s374 + $0x78] sm:$0xff]
      %v452 = vld [vmem:[%s374 + $0x80] sm:$0xff]
      %v453 = vld [vmem:[%s374 + $0x88] sm:$0xff]
      %v454 = vld [vmem:[%s374 + $0x90] sm:$0xff]
      %v455 = vld [vmem:[%s374 + $0x98] sm:$0xff]
      %v456 = vld [vmem:[%s374 + $0xa0] sm:$0xff]
      %v457 = vld [vmem:[%s374 + $0xa8] sm:$0xff]
      %v458 = vld [vmem:[%s374 + $0xb0] sm:$0xff]
      %v459 = vld [vmem:[%s374 + $0xb8] sm:$0xff]
      %v460 = vld [vmem:[%s374 + $0xc0] sm:$0xff]
      %v461 = vld [vmem:[%s374 + $0xc8] sm:$0xff]
      %v462 = vld [vmem:[%s374 + $0xd0] sm:$0xff]
      %v463 = vld [vmem:[%s374 + $0xd8] sm:$0xff]
      %v464 = vld [vmem:[%s374 + $0xe0] sm:$0xff]
      %v465 = vld [vmem:[%s374 + $0xe8] sm:$0xff]
      %v466 = vld [vmem:[%s374 + $0xf0] sm:$0xff]
      %v467 = vld [vmem:[%s374 + $0xf8] sm:$0xff]
      %v468 = vld [vmem:[%s374 + $0x100] sm:$0xff]
      %v469 = vld [vmem:[%s374 + $0x108] sm:$0xff]
      %v470 = vld [vmem:[%s374 + $0x110] sm:$0xff]
      %v471 = vld [vmem:[%s374 + $0x118] sm:$0xff]
      %v472 = vld [vmem:[%s374 + $0x120] sm:$0xff]
      %v473 = vld [vmem:[%s374 + $0x128] sm:$0xff]
      %v474 = vld [vmem:[%s374 + $0x130] sm:$0xff]
      %v475 = vld [vmem:[%s374 + $0x138] sm:$0xff]
      %v476 = vld [vmem:[%s374 + $0x140] sm:$0xff]
      %v477 = vld [vmem:[%s374 + $0x148] sm:$0xff]
      %v478 = vld [vmem:[%s374 + $0x150] sm:$0xff]
      %v479 = vld [vmem:[%s374 + $0x158] sm:$0xff]
      %v480 = vld [vmem:[%s374 + $0x160] sm:$0xff]
      %v481 = vld [vmem:[%s374 + $0x168] sm:$0xff]
      %v482 = vld [vmem:[%s374 + $0x170] sm:$0xff]
      %v483 = vld [vmem:[%s374 + $0x178] sm:$0xff]
      %v484 = vld [vmem:[%s374 + $0x180] sm:$0xff]
      %v485 = vld [vmem:[%s374 + $0x188] sm:$0xff]
      %v486 = vld [vmem:[%s374 + $0x190] sm:$0xff]
      %v487 = vld [vmem:[%s374 + $0x198] sm:$0xff]
      %v488 = vld [vmem:[%s374 + $0x1a0] sm:$0xff]
      %v489 = vld [vmem:[%s374 + $0x1a8] sm:$0xff]
      %v490 = vpack.c.bf16 %v437, %v436
      %v491 = vpack.c.bf16 %v439, %v438
      %v492 = vpack.c.bf16 %v441, %v440
      %v493 = vpack.c.bf16 %v443, %v442
      %v494 = vpack.c.bf16 %v445, %v444
      %v495 = vpack.c.bf16 %v447, %v446
      %v496 = vpack.c.bf16 %v449, %v448
      %v497 = vpack.c.bf16 %v451, %v450
      %v498 = vpack.c.bf16 %v453, %v452
      %v499 = vpack.c.bf16 %v455, %v454
      %v500 = vpack.c.bf16 %v457, %v456
      %v501 = vpack.c.bf16 %v459, %v458
      %v502 = vpack.c.bf16 %v461, %v460
      %v503 = vpack.c.bf16 %v463, %v462
      %v504 = vpack.c.bf16 %v465, %v464
      %v505 = vpack.c.bf16 %v467, %v466
      %v506 = vpack.c.bf16 %v469, %v468
      %v507 = vpack.c.bf16 %v471, %v470
      %v508 = vpack.c.bf16 %v473, %v472
      %v509 = vpack.c.bf16 %v475, %v474
      %v510 = vpack.c.bf16 %v477, %v476
      %v511 = vpack.c.bf16 %v479, %v478
      %v512 = vpack.c.bf16 %v481, %v480
      %v513 = vpack.c.bf16 %v483, %v482
      %v514 = vpack.c.bf16 %v485, %v484
      %v515 = vpack.c.bf16 %v487, %v486
      %v516 = vpack.c.bf16 %v489, %v488
      %v517 = vld [vmem:[%s378] sm:$0xf]
      %v518 = vld [vmem:[%s378 + $0x4] sm:$0xf]
      %v519 = vld [vmem:[%s378 + $0x8] sm:$0xf]
      %v520 = vld [vmem:[%s378 + $0xc] sm:$0xf]
      %v521 = vld [vmem:[%s378 + $0x10] sm:$0xf]
      %v522 = vld [vmem:[%s378 + $0x14] sm:$0xf]
      %v523 = vld [vmem:[%s378 + $0x18] sm:$0xf]
      %v524 = vld [vmem:[%s378 + $0x1c] sm:$0xf]
      %v525 = vld [vmem:[%s378 + $0x20] sm:$0xf]
      %v526 = vld [vmem:[%s378 + $0x24] sm:$0xf]
      %v527 = vld [vmem:[%s378 + $0x28] sm:$0xf]
      %v528 = vld [vmem:[%s378 + $0x2c] sm:$0xf]
      %v529 = vld [vmem:[%s378 + $0x30] sm:$0xf]
      %v530 = vld [vmem:[%s378 + $0x34] sm:$0xf]
      %v531 = vld [vmem:[%s378 + $0x38] sm:$0xf]
      %v532 = vld [vmem:[%s378 + $0x3c] sm:$0xf]
      %v533 = vld [vmem:[%s381] sm:$0x1]
      %v535 = vlaneseq
      %v536 = vshrl.u32 %v535, 7
      %v537 = vsub.s32 0, %v536
      %v538 = vrot.slane %v533, %v537
      %v556 = vunpack.c.l.b16 %v517
      %v557 = vunpack.c.l.b16 %v518
      %v558 = vunpack.c.l.b16 %v519
      %v559 = vunpack.c.l.b16 %v520
      %v560 = vunpack.c.l.b16 %v521
      %v561 = vunpack.c.l.b16 %v522
      %v562 = vunpack.c.l.b16 %v523
      %v563 = vunpack.c.l.b16 %v524
      %v564 = vunpack.c.l.b16 %v525
      %v565 = vunpack.c.l.b16 %v526
      %v566 = vunpack.c.l.b16 %v527
      %v567 = vunpack.c.l.b16 %v528
      %v568 = vunpack.c.l.b16 %v529
      %v569 = vunpack.c.l.b16 %v530
      %v570 = vunpack.c.l.b16 %v531
      %v571 = vunpack.c.l.b16 %v532
      %v572 = vpack.c.b16 %v557, %v556
      %v573 = vpack.c.b16 %v559, %v558
      %v574 = vpack.c.b16 %v561, %v560
      %v575 = vpack.c.b16 %v563, %v562
      %v576 = vpack.c.b16 %v565, %v564
      %v577 = vpack.c.b16 %v567, %v566
      %v578 = vpack.c.b16 %v569, %v568
      %v579 = vpack.c.b16 %v571, %v570
      %588 = vmatprep.subr.bf16.mxu0 0
      %589 = vmatpush1.bf16.msra.mxu0 %v579
      %590 = vmatprep.subr.bf16.mxu0 0
      %591 = vmatpush1.bf16.msra.mxu0 %v578
      %592 = vmatprep.subr.bf16.mxu0 0
      %593 = vmatpush1.bf16.msra.mxu0 %v577
      %594 = vmatprep.subr.bf16.mxu0 0
      %595 = vmatpush1.bf16.msra.mxu0 %v576
      %596 = vmatprep.subr.bf16.mxu0 0
      %597 = vmatpush1.bf16.msra.mxu0 %v575
      %598 = vmatprep.subr.bf16.mxu0 0
      %599 = vmatpush1.bf16.msra.mxu0 %v574
      %600 = vmatprep.subr.bf16.mxu0 0
      %601 = vmatpush1.bf16.msra.mxu0 %v573
      %602 = vmatprep.subr.bf16.mxu0 0
      %603 = vmatpush1.bf16.msra.mxu0 %v572
      %604 = vmatprep.subr.bf16.mxu0 0
      %605 = vmatpush2.bf16.msra.mxu0 0
      %606 = vmatprep.subr.bf16.mxu0 0
      %607 = vmatpush2.bf16.msra.mxu0 0
      %608 = vmatprep.subr.bf16.mxu0 0
      %609 = vmatpush2.bf16.msra.mxu0 0
      %610 = vmatprep.subr.bf16.mxu0 0
      %611 = vmatpush2.bf16.msra.mxu0 0
      %612 = vmatprep.subr.bf16.mxu0 0
      %613 = vmatpush2.bf16.msra.mxu0 0
      %614 = vmatprep.subr.bf16.mxu0 0
      %615 = vmatpush2.bf16.msra.mxu0 0
      %616 = vmatprep.subr.bf16.mxu0 0
      %617 = vmatpush2.bf16.msra.mxu0 0
      %618 = vmatprep.subr.bf16.mxu0 0
      %619 = vmatpush2.bf16.msra.mxu0 0
      %620 = vmatprep.mubr.bf16.mxu0 0
      %621 = vmatmul.mubr.bf16.gmra.mxu0 %v490
      %v622 = vpop.f32.mrf.mxu0
      %v623 = vadd.f32 %v538, %v622
      %v624 = vpop.f32.mrf.mxu0
      %v625 = vpop.f32.mrf.mxu0
      %v626 = vadd.f32 %v538, %v625
      %v627 = vpop.f32.mrf.mxu0
      %628 = vmatprep.mubr.bf16.mxu0 0
      %629 = vmatmul.mubr.bf16.gmra.mxu0 %v491
      %v630 = vpop.f32.mrf.mxu0
      %v631 = vadd.f32 %v538, %v630
      %v632 = vpop.f32.mrf.mxu0
      %v633 = vpop.f32.mrf.mxu0
      %v634 = vadd.f32 %v538, %v633
      %v635 = vpop.f32.mrf.mxu0
      %636 = vmatprep.mubr.bf16.mxu0 0
      %637 = vmatmul.mubr.bf16.gmra.mxu0 %v492
      %v638 = vpop.f32.mrf.mxu0
      %v639 = vadd.f32 %v538, %v638
      %v640 = vpop.f32.mrf.mxu0
      %v641 = vpop.f32.mrf.mxu0
      %v642 = vadd.f32 %v538, %v641
      %v643 = vpop.f32.mrf.mxu0
      %644 = vmatprep.mubr.bf16.mxu0 0
      %645 = vmatmul.mubr.bf16.gmra.mxu0 %v493
      %v646 = vpop.f32.mrf.mxu0
      %v647 = vadd.f32 %v538, %v646
      %v648 = vpop.f32.mrf.mxu0
      %v649 = vpop.f32.mrf.mxu0
      %v650 = vadd.f32 %v538, %v649
      %v651 = vpop.f32.mrf.mxu0
      %652 = vmatprep.mubr.bf16.mxu0 0
      %653 = vmatmul.mubr.bf16.gmra.mxu0 %v494
      %v654 = vpop.f32.mrf.mxu0
      %v655 = vadd.f32 %v538, %v654
      %v656 = vpop.f32.mrf.mxu0
      %v657 = vpop.f32.mrf.mxu0
      %v658 = vadd.f32 %v538, %v657
      %v659 = vpop.f32.mrf.mxu0
      %660 = vmatprep.mubr.bf16.mxu0 0
      %661 = vmatmul.mubr.bf16.gmra.mxu0 %v495
      %v662 = vpop.f32.mrf.mxu0
      %v663 = vadd.f32 %v538, %v662
      %v664 = vpop.f32.mrf.mxu0
      %v665 = vpop.f32.mrf.mxu0
      %v666 = vadd.f32 %v538, %v665
      %v667 = vpop.f32.mrf.mxu0
      %668 = vmatprep.mubr.bf16.mxu0 0
      %669 = vmatmul.mubr.bf16.gmra.mxu0 %v496
      %v670 = vpop.f32.mrf.mxu0
      %v671 = vadd.f32 %v538, %v670
      %v672 = vpop.f32.mrf.mxu0
      %v673 = vpop.f32.mrf.mxu0
      %v674 = vadd.f32 %v538, %v673
      %v675 = vpop.f32.mrf.mxu0
      %676 = vmatprep.mubr.bf16.mxu0 0
      %677 = vmatmul.mubr.bf16.gmra.mxu0 %v497
      %v678 = vpop.f32.mrf.mxu0
      %v679 = vadd.f32 %v538, %v678
      %v680 = vpop.f32.mrf.mxu0
      %v681 = vpop.f32.mrf.mxu0
      %v682 = vadd.f32 %v538, %v681
      %v683 = vpop.f32.mrf.mxu0
      %684 = vmatprep.mubr.bf16.mxu0 0
      %685 = vmatmul.mubr.bf16.gmra.mxu0 %v498
      %v686 = vpop.f32.mrf.mxu0
      %v687 = vadd.f32 %v538, %v686
      %v688 = vpop.f32.mrf.mxu0
      %v689 = vpop.f32.mrf.mxu0
      %v690 = vadd.f32 %v538, %v689
      %v691 = vpop.f32.mrf.mxu0
      %692 = vmatprep.mubr.bf16.mxu0 0
      %693 = vmatmul.mubr.bf16.gmra.mxu0 %v499
      %v694 = vpop.f32.mrf.mxu0
      %v695 = vadd.f32 %v538, %v694
      %v696 = vpop.f32.mrf.mxu0
      %v697 = vpop.f32.mrf.mxu0
      %v698 = vadd.f32 %v538, %v697
      %v699 = vpop.f32.mrf.mxu0
      %700 = vmatprep.mubr.bf16.mxu0 0
      %701 = vmatmul.mubr.bf16.gmra.mxu0 %v500
      %v702 = vpop.f32.mrf.mxu0
      %v703 = vadd.f32 %v538, %v702
      %v704 = vpop.f32.mrf.mxu0
      %v705 = vpop.f32.mrf.mxu0
      %v706 = vadd.f32 %v538, %v705
      %v707 = vpop.f32.mrf.mxu0
      %708 = vmatprep.mubr.bf16.mxu0 0
      %709 = vmatmul.mubr.bf16.gmra.mxu0 %v501
      %v710 = vpop.f32.mrf.mxu0
      %v711 = vadd.f32 %v538, %v710
      %v712 = vpop.f32.mrf.mxu0
      %v713 = vpop.f32.mrf.mxu0
      %v714 = vadd.f32 %v538, %v713
      %v715 = vpop.f32.mrf.mxu0
      %716 = vmatprep.mubr.bf16.mxu0 0
      %717 = vmatmul.mubr.bf16.gmra.mxu0 %v502
      %v718 = vpop.f32.mrf.mxu0
      %v719 = vadd.f32 %v538, %v718
      %v720 = vpop.f32.mrf.mxu0
      %v721 = vpop.f32.mrf.mxu0
      %v722 = vadd.f32 %v538, %v721
      %v723 = vpop.f32.mrf.mxu0
      %724 = vmatprep.mubr.bf16.mxu0 0
      %725 = vmatmul.mubr.bf16.gmra.mxu0 %v503
      %v726 = vpop.f32.mrf.mxu0
      %v727 = vadd.f32 %v538, %v726
      %v728 = vpop.f32.mrf.mxu0
      %v729 = vpop.f32.mrf.mxu0
      %v730 = vadd.f32 %v538, %v729
      %v731 = vpop.f32.mrf.mxu0
      %732 = vmatprep.mubr.bf16.mxu0 0
      %733 = vmatmul.mubr.bf16.gmra.mxu0 %v504
      %v734 = vpop.f32.mrf.mxu0
      %v735 = vadd.f32 %v538, %v734
      %v736 = vpop.f32.mrf.mxu0
      %v737 = vpop.f32.mrf.mxu0
      %v738 = vadd.f32 %v538, %v737
      %v739 = vpop.f32.mrf.mxu0
      %740 = vmatprep.mubr.bf16.mxu0 0
      %741 = vmatmul.mubr.bf16.gmra.mxu0 %v505
      %v742 = vpop.f32.mrf.mxu0
      %v743 = vadd.f32 %v538, %v742
      %v744 = vpop.f32.mrf.mxu0
      %v745 = vpop.f32.mrf.mxu0
      %v746 = vadd.f32 %v538, %v745
      %v747 = vpop.f32.mrf.mxu0
      %748 = vmatprep.mubr.bf16.mxu0 0
      %749 = vmatmul.mubr.bf16.gmra.mxu0 %v506
      %v750 = vpop.f32.mrf.mxu0
      %v751 = vadd.f32 %v538, %v750
      %v752 = vpop.f32.mrf.mxu0
      %v753 = vpop.f32.mrf.mxu0
      %v754 = vadd.f32 %v538, %v753
      %v755 = vpop.f32.mrf.mxu0
      %756 = vmatprep.mubr.bf16.mxu0 0
      %757 = vmatmul.mubr.bf16.gmra.mxu0 %v507
      %v758 = vpop.f32.mrf.mxu0
      %v759 = vadd.f32 %v538, %v758
      %v760 = vpop.f32.mrf.mxu0
      %v761 = vpop.f32.mrf.mxu0
      %v762 = vadd.f32 %v538, %v761
      %v763 = vpop.f32.mrf.mxu0
      %764 = vmatprep.mubr.bf16.mxu0 0
      %765 = vmatmul.mubr.bf16.gmra.mxu0 %v508
      %v766 = vpop.f32.mrf.mxu0
      %v767 = vadd.f32 %v538, %v766
      %v768 = vpop.f32.mrf.mxu0
      %v769 = vpop.f32.mrf.mxu0
      %v770 = vadd.f32 %v538, %v769
      %v771 = vpop.f32.mrf.mxu0
      %772 = vmatprep.mubr.bf16.mxu0 0
      %773 = vmatmul.mubr.bf16.gmra.mxu0 %v509
      %v774 = vpop.f32.mrf.mxu0
      %v775 = vadd.f32 %v538, %v774
      %v776 = vpop.f32.mrf.mxu0
      %v777 = vpop.f32.mrf.mxu0
      %v778 = vadd.f32 %v538, %v777
      %v779 = vpop.f32.mrf.mxu0
      %780 = vmatprep.mubr.bf16.mxu0 0
      %781 = vmatmul.mubr.bf16.gmra.mxu0 %v510
      %v782 = vpop.f32.mrf.mxu0
      %v783 = vadd.f32 %v538, %v782
      %v784 = vpop.f32.mrf.mxu0
      %v785 = vpop.f32.mrf.mxu0
      %v786 = vadd.f32 %v538, %v785
      %v787 = vpop.f32.mrf.mxu0
      %788 = vmatprep.mubr.bf16.mxu0 0
      %789 = vmatmul.mubr.bf16.gmra.mxu0 %v511
      %v790 = vpop.f32.mrf.mxu0
      %v791 = vadd.f32 %v538, %v790
      %v792 = vpop.f32.mrf.mxu0
      %v793 = vpop.f32.mrf.mxu0
      %v794 = vadd.f32 %v538, %v793
      %v795 = vpop.f32.mrf.mxu0
      %796 = vmatprep.mubr.bf16.mxu0 0
      %797 = vmatmul.mubr.bf16.gmra.mxu0 %v512
      %v798 = vpop.f32.mrf.mxu0
      %v799 = vadd.f32 %v538, %v798
      %v800 = vpop.f32.mrf.mxu0
      %v801 = vpop.f32.mrf.mxu0
      %v802 = vadd.f32 %v538, %v801
      %v803 = vpop.f32.mrf.mxu0
      %804 = vmatprep.mubr.bf16.mxu0 0
      %805 = vmatmul.mubr.bf16.gmra.mxu0 %v513
      %v806 = vpop.f32.mrf.mxu0
      %v807 = vadd.f32 %v538, %v806
      %v808 = vpop.f32.mrf.mxu0
      %v809 = vpop.f32.mrf.mxu0
      %v810 = vadd.f32 %v538, %v809
      %v811 = vpop.f32.mrf.mxu0
      %812 = vmatprep.mubr.bf16.mxu0 0
      %813 = vmatmul.mubr.bf16.gmra.mxu0 %v514
      %v814 = vpop.f32.mrf.mxu0
      %v815 = vadd.f32 %v538, %v814
      %v816 = vpop.f32.mrf.mxu0
      %v817 = vpop.f32.mrf.mxu0
      %v818 = vadd.f32 %v538, %v817
      %v819 = vpop.f32.mrf.mxu0
      %820 = vmatprep.mubr.bf16.mxu0 0
      %821 = vmatmul.mubr.bf16.gmra.mxu0 %v515
      %v822 = vpop.f32.mrf.mxu0
      %v823 = vadd.f32 %v538, %v822
      %v824 = vpop.f32.mrf.mxu0
      %v825 = vpop.f32.mrf.mxu0
      %v826 = vadd.f32 %v538, %v825
      %v827 = vpop.f32.mrf.mxu0
      %828 = vmatprep.mubr.bf16.mxu0 0
      %829 = vmatmul.mubr.bf16.gmra.mxu0 %v516
      %v830 = vpop.f32.mrf.mxu0
      %v831 = vadd.f32 %v538, %v830
      %v832 = vpop.f32.mrf.mxu0
      %v833 = vpop.f32.mrf.mxu0
      %v834 = vadd.f32 %v538, %v833
      %v835 = vpop.f32.mrf.mxu0
      %836 = vdwg.mxu0
      %v837 = vmax.f32 %v623, 0.0
      %v838 = vmax.f32 %v626, 0.0
      %v839 = vmax.f32 %v631, 0.0
      %v840 = vmax.f32 %v634, 0.0
      %v841 = vmax.f32 %v639, 0.0
      %v842 = vmax.f32 %v642, 0.0
      %v843 = vmax.f32 %v647, 0.0
      %v844 = vmax.f32 %v650, 0.0
      %v845 = vmax.f32 %v655, 0.0
      %v846 = vmax.f32 %v658, 0.0
      %v847 = vmax.f32 %v663, 0.0
      %v848 = vmax.f32 %v666, 0.0
      %v849 = vmax.f32 %v671, 0.0
      %v850 = vmax.f32 %v674, 0.0
      %v851 = vmax.f32 %v679, 0.0
      %v852 = vmax.f32 %v682, 0.0
      %v853 = vmax.f32 %v687, 0.0
      %v854 = vmax.f32 %v690, 0.0
      %v855 = vmax.f32 %v695, 0.0
      %v856 = vmax.f32 %v698, 0.0
      %v857 = vmax.f32 %v703, 0.0
      %v858 = vmax.f32 %v706, 0.0
      %v859 = vmax.f32 %v711, 0.0
      %v860 = vmax.f32 %v714, 0.0
      %v861 = vmax.f32 %v719, 0.0
      %v862 = vmax.f32 %v722, 0.0
      %v863 = vmax.f32 %v727, 0.0
      %v864 = vmax.f32 %v730, 0.0
      %v865 = vmax.f32 %v735, 0.0
      %v866 = vmax.f32 %v738, 0.0
      %v867 = vmax.f32 %v743, 0.0
      %v868 = vmax.f32 %v746, 0.0
      %v869 = vmax.f32 %v751, 0.0
      %v870 = vmax.f32 %v754, 0.0
      %v871 = vmax.f32 %v759, 0.0
      %v872 = vmax.f32 %v762, 0.0
      %v873 = vmax.f32 %v767, 0.0
      %v874 = vmax.f32 %v770, 0.0
      %v875 = vmax.f32 %v775, 0.0
      %v876 = vmax.f32 %v778, 0.0
      %v877 = vmax.f32 %v783, 0.0
      %v878 = vmax.f32 %v786, 0.0
      %v879 = vmax.f32 %v791, 0.0
      %v880 = vmax.f32 %v794, 0.0
      %v881 = vmax.f32 %v799, 0.0
      %v882 = vmax.f32 %v802, 0.0
      %v883 = vmax.f32 %v807, 0.0
      %v884 = vmax.f32 %v810, 0.0
      %v885 = vmax.f32 %v815, 0.0
      %v886 = vmax.f32 %v818, 0.0
      %v887 = vmax.f32 %v823, 0.0
      %v888 = vmax.f32 %v826, 0.0
      %v889 = vmax.f32 %v831, 0.0
      %v890 = vmax.f32 %v834, 0.0
      %v891 = vmin.f32 %v837, 6.0
      %v892 = vmin.f32 %v838, 6.0
      %v893 = vmin.f32 %v839, 6.0
      %v894 = vmin.f32 %v840, 6.0
      %v895 = vmin.f32 %v841, 6.0
      %v896 = vmin.f32 %v842, 6.0
      %v897 = vmin.f32 %v843, 6.0
      %v898 = vmin.f32 %v844, 6.0
      %v899 = vmin.f32 %v845, 6.0
      %v900 = vmin.f32 %v846, 6.0
      %v901 = vmin.f32 %v847, 6.0
      %v902 = vmin.f32 %v848, 6.0
      %v903 = vmin.f32 %v849, 6.0
      %v904 = vmin.f32 %v850, 6.0
      %v905 = vmin.f32 %v851, 6.0
      %v906 = vmin.f32 %v852, 6.0
      %v907 = vmin.f32 %v853, 6.0
      %v908 = vmin.f32 %v854, 6.0
      %v909 = vmin.f32 %v855, 6.0
      %v910 = vmin.f32 %v856, 6.0
      %v911 = vmin.f32 %v857, 6.0
      %v912 = vmin.f32 %v858, 6.0
      %v913 = vmin.f32 %v859, 6.0
      %v914 = vmin.f32 %v860, 6.0
      %v915 = vmin.f32 %v861, 6.0
      %v916 = vmin.f32 %v862, 6.0
      %v917 = vmin.f32 %v863, 6.0
      %v918 = vmin.f32 %v864, 6.0
      %v919 = vmin.f32 %v865, 6.0
      %v920 = vmin.f32 %v866, 6.0
      %v921 = vmin.f32 %v867, 6.0
      %v922 = vmin.f32 %v868, 6.0
      %v923 = vmin.f32 %v869, 6.0
      %v924 = vmin.f32 %v870, 6.0
      %v925 = vmin.f32 %v871, 6.0
      %v926 = vmin.f32 %v872, 6.0
      %v927 = vmin.f32 %v873, 6.0
      %v928 = vmin.f32 %v874, 6.0
      %v929 = vmin.f32 %v875, 6.0
      %v930 = vmin.f32 %v876, 6.0
      %v931 = vmin.f32 %v877, 6.0
      %v932 = vmin.f32 %v878, 6.0
      %v933 = vmin.f32 %v879, 6.0
      %v934 = vmin.f32 %v880, 6.0
      %v935 = vmin.f32 %v881, 6.0
      %v936 = vmin.f32 %v882, 6.0
      %v937 = vmin.f32 %v883, 6.0
      %v938 = vmin.f32 %v884, 6.0
      %v939 = vmin.f32 %v885, 6.0
      %v940 = vmin.f32 %v886, 6.0
      %v941 = vmin.f32 %v887, 6.0
      %v942 = vmin.f32 %v888, 6.0
      %v943 = vmin.f32 %v889, 6.0
      %v944 = vmin.f32 %v890, 6.0
      %v945 = vld [vmem:[%s3] sm:$0xff]
      %v946 = vld [vmem:[%s3 + $0x8] sm:$0xff]
      %v947 = vld [vmem:[%s3 + $0x10] sm:$0xff]
      %v948 = vld [vmem:[%s3 + $0x18] sm:$0xff]
      %v949 = vld [vmem:[%s3 + $0x20] sm:$0xff]
      %v950 = vld [vmem:[%s3 + $0x28] sm:$0xff]
      %v951 = vld [vmem:[%s3 + $0x30] sm:$0xff]
      %v952 = vld [vmem:[%s3 + $0x38] sm:$0xff]
      %v953 = vld [vmem:[%s3 + $0x40] sm:$0xff]
      %v954 = vld [vmem:[%s3 + $0x48] sm:$0xff]
      %v955 = vld [vmem:[%s3 + $0x50] sm:$0xff]
      %v956 = vld [vmem:[%s3 + $0x58] sm:$0xff]
      %v957 = vld [vmem:[%s3 + $0x60] sm:$0xff]
      %v958 = vld [vmem:[%s3 + $0x68] sm:$0xff]
      %v959 = vld [vmem:[%s3 + $0x70] sm:$0xff]
      %v960 = vld [vmem:[%s3 + $0x78] sm:$0xff]
      %v961 = vld [vmem:[%s3 + $0x80] sm:$0xff]
      %v962 = vld [vmem:[%s3 + $0x88] sm:$0xff]
      %v963 = vld [vmem:[%s3 + $0x90] sm:$0xff]
      %v964 = vld [vmem:[%s3 + $0x98] sm:$0xff]
      %v965 = vld [vmem:[%s3 + $0xa0] sm:$0xff]
      %v966 = vld [vmem:[%s3 + $0xa8] sm:$0xff]
      %v967 = vld [vmem:[%s3 + $0xb0] sm:$0xff]
      %v968 = vld [vmem:[%s3 + $0xb8] sm:$0xff]
      %v969 = vld [vmem:[%s3 + $0xc0] sm:$0xff]
      %v970 = vld [vmem:[%s3 + $0xc8] sm:$0xff]
      %v971 = vld [vmem:[%s3 + $0xd0] sm:$0xff]
      %v972 = vld [vmem:[%s3 + $0xd8] sm:$0xff]
      %v973 = vld [vmem:[%s3 + $0xe0] sm:$0xff]
      %v974 = vld [vmem:[%s3 + $0xe8] sm:$0xff]
      %v975 = vld [vmem:[%s3 + $0xf0] sm:$0xff]
      %v976 = vld [vmem:[%s3 + $0xf8] sm:$0xff]
      %v977 = vld [vmem:[%s3 + $0x100] sm:$0xff]
      %v978 = vld [vmem:[%s3 + $0x108] sm:$0xff]
      %v979 = vld [vmem:[%s3 + $0x110] sm:$0xff]
      %v980 = vld [vmem:[%s3 + $0x118] sm:$0xff]
      %v981 = vld [vmem:[%s3 + $0x120] sm:$0xff]
      %v982 = vld [vmem:[%s3 + $0x128] sm:$0xff]
      %v983 = vld [vmem:[%s3 + $0x130] sm:$0xff]
      %v984 = vld [vmem:[%s3 + $0x138] sm:$0xff]
      %v985 = vld [vmem:[%s3 + $0x140] sm:$0xff]
      %v986 = vld [vmem:[%s3 + $0x148] sm:$0xff]
      %v987 = vld [vmem:[%s3 + $0x150] sm:$0xff]
      %v988 = vld [vmem:[%s3 + $0x158] sm:$0xff]
      %v989 = vld [vmem:[%s3 + $0x160] sm:$0xff]
      %v990 = vld [vmem:[%s3 + $0x168] sm:$0xff]
      %v991 = vld [vmem:[%s3 + $0x170] sm:$0xff]
      %v992 = vld [vmem:[%s3 + $0x178] sm:$0xff]
      %v993 = vld [vmem:[%s3 + $0x180] sm:$0xff]
      %v994 = vld [vmem:[%s3 + $0x188] sm:$0xff]
      %v995 = vld [vmem:[%s3 + $0x190] sm:$0xff]
      %v996 = vld [vmem:[%s3 + $0x198] sm:$0xff]
      %v997 = vld [vmem:[%s3 + $0x1a0] sm:$0xff]
      %v998 = vld [vmem:[%s3 + $0x1a8] sm:$0xff]
      %1000 = vset.pattern.permute.xlu0 0
      %1001 = vperm.xlu0 %1000, %v945
      %v1002 = vpop.permute.xlu0 %1001
      %1005 = vset.pattern.permute.xlu0 0
      %1006 = vperm.xlu0 %1005, %v946
      %v1007 = vpop.permute.xlu0 %1006
      %1010 = vset.pattern.permute.xlu0 0
      %1011 = vperm.xlu0 %1010, %v947
      %v1012 = vpop.permute.xlu0 %1011
      %1015 = vset.pattern.permute.xlu0 0
      %1016 = vperm.xlu0 %1015, %v948
      %v1017 = vpop.permute.xlu0 %1016
      %1020 = vset.pattern.permute.xlu0 0
      %1021 = vperm.xlu0 %1020, %v949
      %v1022 = vpop.permute.xlu0 %1021
      %1025 = vset.pattern.permute.xlu0 0
      %1026 = vperm.xlu0 %1025, %v950
      %v1027 = vpop.permute.xlu0 %1026
      %1030 = vset.pattern.permute.xlu0 0
      %1031 = vperm.xlu0 %1030, %v951
      %v1032 = vpop.permute.xlu0 %1031
      %1035 = vset.pattern.permute.xlu0 0
      %1036 = vperm.xlu0 %1035, %v952
      %v1037 = vpop.permute.xlu0 %1036
      %1040 = vset.pattern.permute.xlu0 0
      %1041 = vperm.xlu0 %1040, %v953
      %v1042 = vpop.permute.xlu0 %1041
      %1045 = vset.pattern.permute.xlu0 0
      %1046 = vperm.xlu0 %1045, %v954
      %v1047 = vpop.permute.xlu0 %1046
      %1050 = vset.pattern.permute.xlu0 0
      %1051 = vperm.xlu0 %1050, %v955
      %v1052 = vpop.permute.xlu0 %1051
      %1055 = vset.pattern.permute.xlu0 0
      %1056 = vperm.xlu0 %1055, %v956
      %v1057 = vpop.permute.xlu0 %1056
      %1060 = vset.pattern.permute.xlu0 0
      %1061 = vperm.xlu0 %1060, %v957
      %v1062 = vpop.permute.xlu0 %1061
      %1065 = vset.pattern.permute.xlu0 0
      %1066 = vperm.xlu0 %1065, %v958
      %v1067 = vpop.permute.xlu0 %1066
      %1070 = vset.pattern.permute.xlu0 0
      %1071 = vperm.xlu0 %1070, %v959
      %v1072 = vpop.permute.xlu0 %1071
      %1075 = vset.pattern.permute.xlu0 0
      %1076 = vperm.xlu0 %1075, %v960
      %v1077 = vpop.permute.xlu0 %1076
      %1080 = vset.pattern.permute.xlu0 0
      %1081 = vperm.xlu0 %1080, %v961
      %v1082 = vpop.permute.xlu0 %1081
      %1085 = vset.pattern.permute.xlu0 0
      %1086 = vperm.xlu0 %1085, %v962
      %v1087 = vpop.permute.xlu0 %1086
      %1090 = vset.pattern.permute.xlu0 0
      %1091 = vperm.xlu0 %1090, %v963
      %v1092 = vpop.permute.xlu0 %1091
      %1095 = vset.pattern.permute.xlu0 0
      %1096 = vperm.xlu0 %1095, %v964
      %v1097 = vpop.permute.xlu0 %1096
      %1100 = vset.pattern.permute.xlu0 0
      %1101 = vperm.xlu0 %1100, %v965
      %v1102 = vpop.permute.xlu0 %1101
      %1105 = vset.pattern.permute.xlu0 0
      %1106 = vperm.xlu0 %1105, %v966
      %v1107 = vpop.permute.xlu0 %1106
      %1110 = vset.pattern.permute.xlu0 0
      %1111 = vperm.xlu0 %1110, %v967
      %v1112 = vpop.permute.xlu0 %1111
      %1115 = vset.pattern.permute.xlu0 0
      %1116 = vperm.xlu0 %1115, %v968
      %v1117 = vpop.permute.xlu0 %1116
      %1120 = vset.pattern.permute.xlu0 0
      %1121 = vperm.xlu0 %1120, %v969
      %v1122 = vpop.permute.xlu0 %1121
      %1125 = vset.pattern.permute.xlu0 0
      %1126 = vperm.xlu0 %1125, %v970
      %v1127 = vpop.permute.xlu0 %1126
      %1130 = vset.pattern.permute.xlu0 0
      %1131 = vperm.xlu0 %1130, %v971
      %v1132 = vpop.permute.xlu0 %1131
      %1135 = vset.pattern.permute.xlu0 0
      %1136 = vperm.xlu0 %1135, %v972
      %v1137 = vpop.permute.xlu0 %1136
      %1140 = vset.pattern.permute.xlu0 0
      %1141 = vperm.xlu0 %1140, %v973
      %v1142 = vpop.permute.xlu0 %1141
      %1145 = vset.pattern.permute.xlu0 0
      %1146 = vperm.xlu0 %1145, %v974
      %v1147 = vpop.permute.xlu0 %1146
      %1150 = vset.pattern.permute.xlu0 0
      %1151 = vperm.xlu0 %1150, %v975
      %v1152 = vpop.permute.xlu0 %1151
      %1155 = vset.pattern.permute.xlu0 0
      %1156 = vperm.xlu0 %1155, %v976
      %v1157 = vpop.permute.xlu0 %1156
      %1160 = vset.pattern.permute.xlu0 0
      %1161 = vperm.xlu0 %1160, %v977
      %v1162 = vpop.permute.xlu0 %1161
      %1165 = vset.pattern.permute.xlu0 0
      %1166 = vperm.xlu0 %1165, %v978
      %v1167 = vpop.permute.xlu0 %1166
      %1170 = vset.pattern.permute.xlu0 0
      %1171 = vperm.xlu0 %1170, %v979
      %v1172 = vpop.permute.xlu0 %1171
      %1175 = vset.pattern.permute.xlu0 0
      %1176 = vperm.xlu0 %1175, %v980
      %v1177 = vpop.permute.xlu0 %1176
      %1180 = vset.pattern.permute.xlu0 0
      %1181 = vperm.xlu0 %1180, %v981
      %v1182 = vpop.permute.xlu0 %1181
      %1185 = vset.pattern.permute.xlu0 0
      %1186 = vperm.xlu0 %1185, %v982
      %v1187 = vpop.permute.xlu0 %1186
      %1190 = vset.pattern.permute.xlu0 0
      %1191 = vperm.xlu0 %1190, %v983
      %v1192 = vpop.permute.xlu0 %1191
      %1195 = vset.pattern.permute.xlu0 0
      %1196 = vperm.xlu0 %1195, %v984
      %v1197 = vpop.permute.xlu0 %1196
      %1200 = vset.pattern.permute.xlu0 0
      %1201 = vperm.xlu0 %1200, %v985
      %v1202 = vpop.permute.xlu0 %1201
      %1205 = vset.pattern.permute.xlu0 0
      %1206 = vperm.xlu0 %1205, %v986
      %v1207 = vpop.permute.xlu0 %1206
      %1210 = vset.pattern.permute.xlu0 0
      %1211 = vperm.xlu0 %1210, %v987
      %v1212 = vpop.permute.xlu0 %1211
      %1215 = vset.pattern.permute.xlu0 0
      %1216 = vperm.xlu0 %1215, %v988
      %v1217 = vpop.permute.xlu0 %1216
      %1220 = vset.pattern.permute.xlu0 0
      %1221 = vperm.xlu0 %1220, %v989
      %v1222 = vpop.permute.xlu0 %1221
      %1225 = vset.pattern.permute.xlu0 0
      %1226 = vperm.xlu0 %1225, %v990
      %v1227 = vpop.permute.xlu0 %1226
      %1230 = vset.pattern.permute.xlu0 0
      %1231 = vperm.xlu0 %1230, %v991
      %v1232 = vpop.permute.xlu0 %1231
      %1235 = vset.pattern.permute.xlu0 0
      %1236 = vperm.xlu0 %1235, %v992
      %v1237 = vpop.permute.xlu0 %1236
      %1240 = vset.pattern.permute.xlu0 0
      %1241 = vperm.xlu0 %1240, %v993
      %v1242 = vpop.permute.xlu0 %1241
      %1245 = vset.pattern.permute.xlu0 0
      %1246 = vperm.xlu0 %1245, %v994
      %v1247 = vpop.permute.xlu0 %1246
      %1250 = vset.pattern.permute.xlu0 0
      %1251 = vperm.xlu0 %1250, %v995
      %v1252 = vpop.permute.xlu0 %1251
      %1255 = vset.pattern.permute.xlu0 0
      %1256 = vperm.xlu0 %1255, %v996
      %v1257 = vpop.permute.xlu0 %1256
      %1260 = vset.pattern.permute.xlu0 0
      %1261 = vperm.xlu0 %1260, %v997
      %v1262 = vpop.permute.xlu0 %1261
      %1265 = vset.pattern.permute.xlu0 0
      %1266 = vperm.xlu0 %1265, %v998
      %v1267 = vpop.permute.xlu0 %1266
      %v1269 = vmul.f32 %v891, %v1002
      %v1270 = vmul.f32 %v892, %v1007
      %v1271 = vmul.f32 %v893, %v1012
      %v1272 = vmul.f32 %v894, %v1017
      %v1273 = vmul.f32 %v895, %v1022
      %v1274 = vmul.f32 %v896, %v1027
      %v1275 = vmul.f32 %v897, %v1032
      %v1276 = vmul.f32 %v898, %v1037
      %v1277 = vmul.f32 %v899, %v1042
      %v1278 = vmul.f32 %v900, %v1047
      %v1279 = vmul.f32 %v901, %v1052
      %v1280 = vmul.f32 %v902, %v1057
      %v1281 = vmul.f32 %v903, %v1062
      %v1282 = vmul.f32 %v904, %v1067
      %v1283 = vmul.f32 %v905, %v1072
      %v1284 = vmul.f32 %v906, %v1077
      %v1285 = vmul.f32 %v907, %v1082
      %v1286 = vmul.f32 %v908, %v1087
      %v1287 = vmul.f32 %v909, %v1092
      %v1288 = vmul.f32 %v910, %v1097
      %v1289 = vmul.f32 %v911, %v1102
      %v1290 = vmul.f32 %v912, %v1107
      %v1291 = vmul.f32 %v913, %v1112
      %v1292 = vmul.f32 %v914, %v1117
      %v1293 = vmul.f32 %v915, %v1122
      %v1294 = vmul.f32 %v916, %v1127
      %v1295 = vmul.f32 %v917, %v1132
      %v1296 = vmul.f32 %v918, %v1137
      %v1297 = vmul.f32 %v919, %v1142
      %v1298 = vmul.f32 %v920, %v1147
      %v1299 = vmul.f32 %v921, %v1152
      %v1300 = vmul.f32 %v922, %v1157
      %v1301 = vmul.f32 %v923, %v1162
      %v1302 = vmul.f32 %v924, %v1167
      %v1303 = vmul.f32 %v925, %v1172
      %v1304 = vmul.f32 %v926, %v1177
      %v1305 = vmul.f32 %v927, %v1182
      %v1306 = vmul.f32 %v928, %v1187
      %v1307 = vmul.f32 %v929, %v1192
      %v1308 = vmul.f32 %v930, %v1197
      %v1309 = vmul.f32 %v931, %v1202
      %v1310 = vmul.f32 %v932, %v1207
      %v1311 = vmul.f32 %v933, %v1212
      %v1312 = vmul.f32 %v934, %v1217
      %v1313 = vmul.f32 %v935, %v1222
      %v1314 = vmul.f32 %v936, %v1227
      %v1315 = vmul.f32 %v937, %v1232
      %v1316 = vmul.f32 %v938, %v1237
      %v1317 = vmul.f32 %v939, %v1242
      %v1318 = vmul.f32 %v940, %v1247
      %v1319 = vmul.f32 %v941, %v1252
      %v1320 = vmul.f32 %v942, %v1257
      %v1321 = vmul.f32 %v943, %v1262
      %v1322 = vmul.f32 %v944, %v1267
      %v1323 = vld [vmem:[%s384] sm:$0x1]
      %v1324 = vld [vmem:[%s384 + $0x1] sm:$0x1]
      %v1325 = vld [vmem:[%s384 + $0x2] sm:$0x1]
      %v1326 = vld [vmem:[%s384 + $0x3] sm:$0x1]
      %v1327 = vld [vmem:[%s384 + $0x4] sm:$0x1]
      %v1328 = vld [vmem:[%s384 + $0x5] sm:$0x1]
      %v1329 = vld [vmem:[%s384 + $0x6] sm:$0x1]
      %v1330 = vld [vmem:[%s384 + $0x7] sm:$0x1]
      %v1331 = vld [vmem:[%s384 + $0x8] sm:$0x1]
      %v1333 = vlaneseq
      %v1334 = vshrl.u32 %v1333, 7
      %v1335 = vsub.s32 0, %v1334
      %v1336 = vrot.slane %v1323, %v1335
      %v1338 = vmul.f32 %v1269, %v1336
      %v1339 = vmul.f32 %v1270, %v1336
      %v1340 = vmul.f32 %v1272, %v1336
      %v1341 = vmul.f32 %v1273, %v1336
      %v1342 = vmul.f32 %v1275, %v1336
      %v1343 = vmul.f32 %v1276, %v1336
      %v1344 = vmul.f32 %v1278, %v1336
      %v1345 = vmul.f32 %v1279, %v1336
      %v1346 = vmul.f32 %v1281, %v1336
      %v1347 = vmul.f32 %v1282, %v1336
      %v1348 = vmul.f32 %v1284, %v1336
      %v1349 = vmul.f32 %v1285, %v1336
      %v1350 = vmul.f32 %v1287, %v1336
      %v1351 = vmul.f32 %v1288, %v1336
      %v1352 = vmul.f32 %v1290, %v1336
      %v1353 = vmul.f32 %v1291, %v1336
      %v1354 = vmul.f32 %v1293, %v1336
      %v1355 = vmul.f32 %v1294, %v1336
      %v1356 = vmul.f32 %v1296, %v1336
      %v1357 = vmul.f32 %v1297, %v1336
      %v1358 = vmul.f32 %v1299, %v1336
      %v1359 = vmul.f32 %v1300, %v1336
      %v1360 = vmul.f32 %v1302, %v1336
      %v1361 = vmul.f32 %v1303, %v1336
      %v1362 = vmul.f32 %v1305, %v1336
      %v1363 = vmul.f32 %v1306, %v1336
      %v1364 = vmul.f32 %v1308, %v1336
      %v1365 = vmul.f32 %v1309, %v1336
      %v1366 = vmul.f32 %v1311, %v1336
      %v1367 = vmul.f32 %v1312, %v1336
      %v1368 = vmul.f32 %v1314, %v1336
      %v1369 = vmul.f32 %v1315, %v1336
      %v1371 = vlaneseq
      %v1372 = vshrl.u32 %v1371, 7
      %v1373 = vsub.s32 0, %v1372
      %v1374 = vrot.slane %v1324, %v1373
      %v1376 = vmul.f32 %v1269, %v1374
      %v1377 = vmul.f32 %v1270, %v1374
      %v1378 = vmul.f32 %v1271, %v1374
      %v1379 = vmul.f32 %v1272, %v1374
      %v1380 = vmul.f32 %v1273, %v1374
      %v1381 = vmul.f32 %v1274, %v1374
      %v1382 = vmul.f32 %v1275, %v1374
      %v1383 = vmul.f32 %v1276, %v1374
      %v1384 = vmul.f32 %v1277, %v1374
      %v1385 = vmul.f32 %v1278, %v1374
      %v1386 = vmul.f32 %v1279, %v1374
      %v1387 = vmul.f32 %v1280, %v1374
      %v1388 = vmul.f32 %v1281, %v1374
      %v1389 = vmul.f32 %v1282, %v1374
      %v1390 = vmul.f32 %v1283, %v1374
      %v1391 = vmul.f32 %v1284, %v1374
      %v1392 = vmul.f32 %v1285, %v1374
      %v1393 = vmul.f32 %v1286, %v1374
      %v1394 = vmul.f32 %v1287, %v1374
      %v1395 = vmul.f32 %v1288, %v1374
      %v1396 = vmul.f32 %v1289, %v1374
      %v1397 = vmul.f32 %v1290, %v1374
      %v1398 = vmul.f32 %v1291, %v1374
      %v1399 = vmul.f32 %v1292, %v1374
      %v1400 = vmul.f32 %v1293, %v1374
      %v1401 = vmul.f32 %v1294, %v1374
      %v1402 = vmul.f32 %v1295, %v1374
      %v1403 = vmul.f32 %v1296, %v1374
      %v1404 = vmul.f32 %v1297, %v1374
      %v1405 = vmul.f32 %v1298, %v1374
      %v1406 = vmul.f32 %v1299, %v1374
      %v1407 = vmul.f32 %v1300, %v1374
      %v1408 = vmul.f32 %v1301, %v1374
      %v1409 = vmul.f32 %v1302, %v1374
      %v1410 = vmul.f32 %v1303, %v1374
      %v1411 = vmul.f32 %v1304, %v1374
      %v1412 = vmul.f32 %v1305, %v1374
      %v1413 = vmul.f32 %v1306, %v1374
      %v1414 = vmul.f32 %v1307, %v1374
      %v1415 = vmul.f32 %v1308, %v1374
      %v1416 = vmul.f32 %v1309, %v1374
      %v1417 = vmul.f32 %v1310, %v1374
      %v1418 = vmul.f32 %v1311, %v1374
      %v1419 = vmul.f32 %v1312, %v1374
      %v1420 = vmul.f32 %v1313, %v1374
      %v1421 = vmul.f32 %v1314, %v1374
      %v1422 = vmul.f32 %v1315, %v1374
      %v1423 = vmul.f32 %v1316, %v1374
      %v1425 = vlaneseq
      %v1426 = vshrl.u32 %v1425, 7
      %v1427 = vsub.s32 0, %v1426
      %v1428 = vrot.slane %v1325, %v1427
      %v1430 = vmul.f32 %v1269, %v1428
      %v1431 = vmul.f32 %v1270, %v1428
      %v1432 = vmul.f32 %v1271, %v1428
      %v1433 = vmul.f32 %v1272, %v1428
      %v1434 = vmul.f32 %v1273, %v1428
      %v1435 = vmul.f32 %v1274, %v1428
      %v1436 = vmul.f32 %v1275, %v1428
      %v1437 = vmul.f32 %v1276, %v1428
      %v1438 = vmul.f32 %v1277, %v1428
      %v1439 = vmul.f32 %v1278, %v1428
      %v1440 = vmul.f32 %v1279, %v1428
      %v1441 = vmul.f32 %v1280, %v1428
      %v1442 = vmul.f32 %v1281, %v1428
      %v1443 = vmul.f32 %v1282, %v1428
      %v1444 = vmul.f32 %v1283, %v1428
      %v1445 = vmul.f32 %v1284, %v1428
      %v1446 = vmul.f32 %v1285, %v1428
      %v1447 = vmul.f32 %v1286, %v1428
      %v1448 = vmul.f32 %v1287, %v1428
      %v1449 = vmul.f32 %v1288, %v1428
      %v1450 = vmul.f32 %v1289, %v1428
      %v1451 = vmul.f32 %v1290, %v1428
      %v1452 = vmul.f32 %v1291, %v1428
      %v1453 = vmul.f32 %v1292, %v1428
      %v1454 = vmul.f32 %v1293, %v1428
      %v1455 = vmul.f32 %v1294, %v1428
      %v1456 = vmul.f32 %v1295, %v1428
      %v1457 = vmul.f32 %v1296, %v1428
      %v1458 = vmul.f32 %v1297, %v1428
      %v1459 = vmul.f32 %v1298, %v1428
      %v1460 = vmul.f32 %v1299, %v1428
      %v1461 = vmul.f32 %v1300, %v1428
      %v1462 = vmul.f32 %v1301, %v1428
      %v1463 = vmul.f32 %v1302, %v1428
      %v1464 = vmul.f32 %v1303, %v1428
      %v1465 = vmul.f32 %v1304, %v1428
      %v1466 = vmul.f32 %v1305, %v1428
      %v1467 = vmul.f32 %v1306, %v1428
      %v1468 = vmul.f32 %v1307, %v1428
      %v1469 = vmul.f32 %v1308, %v1428
      %v1470 = vmul.f32 %v1309, %v1428
      %v1471 = vmul.f32 %v1310, %v1428
      %v1472 = vmul.f32 %v1311, %v1428
      %v1473 = vmul.f32 %v1312, %v1428
      %v1474 = vmul.f32 %v1313, %v1428
      %v1475 = vmul.f32 %v1314, %v1428
      %v1476 = vmul.f32 %v1315, %v1428
      %v1477 = vmul.f32 %v1316, %v1428
      %v1479 = vlaneseq
      %v1480 = vshrl.u32 %v1479, 7
      %v1481 = vsub.s32 0, %v1480
      %v1482 = vrot.slane %v1326, %v1481
      %v1484 = vmul.f32 %v1272, %v1482
      %v1485 = vmul.f32 %v1273, %v1482
      %v1486 = vmul.f32 %v1275, %v1482
      %v1487 = vmul.f32 %v1276, %v1482
      %v1488 = vmul.f32 %v1278, %v1482
      %v1489 = vmul.f32 %v1279, %v1482
      %v1490 = vmul.f32 %v1281, %v1482
      %v1491 = vmul.f32 %v1282, %v1482
      %v1492 = vmul.f32 %v1284, %v1482
      %v1493 = vmul.f32 %v1285, %v1482
      %v1494 = vmul.f32 %v1287, %v1482
      %v1495 = vmul.f32 %v1288, %v1482
      %v1496 = vmul.f32 %v1290, %v1482
      %v1497 = vmul.f32 %v1291, %v1482
      %v1498 = vmul.f32 %v1293, %v1482
      %v1499 = vmul.f32 %v1294, %v1482
      %v1500 = vmul.f32 %v1296, %v1482
      %v1501 = vmul.f32 %v1297, %v1482
      %v1502 = vmul.f32 %v1299, %v1482
      %v1503 = vmul.f32 %v1300, %v1482
      %v1504 = vmul.f32 %v1302, %v1482
      %v1505 = vmul.f32 %v1303, %v1482
      %v1506 = vmul.f32 %v1305, %v1482
      %v1507 = vmul.f32 %v1306, %v1482
      %v1508 = vmul.f32 %v1308, %v1482
      %v1509 = vmul.f32 %v1309, %v1482
      %v1510 = vmul.f32 %v1311, %v1482
      %v1511 = vmul.f32 %v1312, %v1482
      %v1512 = vmul.f32 %v1314, %v1482
      %v1513 = vmul.f32 %v1315, %v1482
      %v1514 = vmul.f32 %v1317, %v1482
      %v1515 = vmul.f32 %v1318, %v1482
      %v1517 = vlaneseq
      %v1518 = vshrl.u32 %v1517, 7
      %v1519 = vsub.s32 0, %v1518
      %v1520 = vrot.slane %v1327, %v1519
      %v1522 = vmul.f32 %v1272, %v1520
      %v1523 = vmul.f32 %v1273, %v1520
      %v1524 = vmul.f32 %v1274, %v1520
      %v1525 = vmul.f32 %v1275, %v1520
      %v1526 = vmul.f32 %v1276, %v1520
      %v1527 = vmul.f32 %v1277, %v1520
      %v1528 = vmul.f32 %v1278, %v1520
      %v1529 = vmul.f32 %v1279, %v1520
      %v1530 = vmul.f32 %v1280, %v1520
      %v1531 = vmul.f32 %v1281, %v1520
      %v1532 = vmul.f32 %v1282, %v1520
      %v1533 = vmul.f32 %v1283, %v1520
      %v1534 = vmul.f32 %v1284, %v1520
      %v1535 = vmul.f32 %v1285, %v1520
      %v1536 = vmul.f32 %v1286, %v1520
      %v1537 = vmul.f32 %v1287, %v1520
      %v1538 = vmul.f32 %v1288, %v1520
      %v1539 = vmul.f32 %v1289, %v1520
      %v1540 = vmul.f32 %v1290, %v1520
      %v1541 = vmul.f32 %v1291, %v1520
      %v1542 = vmul.f32 %v1292, %v1520
      %v1543 = vmul.f32 %v1293, %v1520
      %v1544 = vmul.f32 %v1294, %v1520
      %v1545 = vmul.f32 %v1295, %v1520
      %v1546 = vmul.f32 %v1296, %v1520
      %v1547 = vmul.f32 %v1297, %v1520
      %v1548 = vmul.f32 %v1298, %v1520
      %v1549 = vmul.f32 %v1299, %v1520
      %v1550 = vmul.f32 %v1300, %v1520
      %v1551 = vmul.f32 %v1301, %v1520
      %v1552 = vmul.f32 %v1302, %v1520
      %v1553 = vmul.f32 %v1303, %v1520
      %v1554 = vmul.f32 %v1304, %v1520
      %v1555 = vmul.f32 %v1305, %v1520
      %v1556 = vmul.f32 %v1306, %v1520
      %v1557 = vmul.f32 %v1307, %v1520
      %v1558 = vmul.f32 %v1308, %v1520
      %v1559 = vmul.f32 %v1309, %v1520
      %v1560 = vmul.f32 %v1310, %v1520
      %v1561 = vmul.f32 %v1311, %v1520
      %v1562 = vmul.f32 %v1312, %v1520
      %v1563 = vmul.f32 %v1313, %v1520
      %v1564 = vmul.f32 %v1314, %v1520
      %v1565 = vmul.f32 %v1315, %v1520
      %v1566 = vmul.f32 %v1316, %v1520
      %v1567 = vmul.f32 %v1317, %v1520
      %v1568 = vmul.f32 %v1318, %v1520
      %v1569 = vmul.f32 %v1319, %v1520
      %v1571 = vlaneseq
      %v1572 = vshrl.u32 %v1571, 7
      %v1573 = vsub.s32 0, %v1572
      %v1574 = vrot.slane %v1328, %v1573
      %v1576 = vmul.f32 %v1272, %v1574
      %v1577 = vmul.f32 %v1273, %v1574
      %v1578 = vmul.f32 %v1274, %v1574
      %v1579 = vmul.f32 %v1275, %v1574
      %v1580 = vmul.f32 %v1276, %v1574
      %v1581 = vmul.f32 %v1277, %v1574
      %v1582 = vmul.f32 %v1278, %v1574
      %v1583 = vmul.f32 %v1279, %v1574
      %v1584 = vmul.f32 %v1280, %v1574
      %v1585 = vmul.f32 %v1281, %v1574
      %v1586 = vmul.f32 %v1282, %v1574
      %v1587 = vmul.f32 %v1283, %v1574
      %v1588 = vmul.f32 %v1284, %v1574
      %v1589 = vmul.f32 %v1285, %v1574
      %v1590 = vmul.f32 %v1286, %v1574
      %v1591 = vmul.f32 %v1287, %v1574
      %v1592 = vmul.f32 %v1288, %v1574
      %v1593 = vmul.f32 %v1289, %v1574
      %v1594 = vmul.f32 %v1290, %v1574
      %v1595 = vmul.f32 %v1291, %v1574
      %v1596 = vmul.f32 %v1292, %v1574
      %v1597 = vmul.f32 %v1293, %v1574
      %v1598 = vmul.f32 %v1294, %v1574
      %v1599 = vmul.f32 %v1295, %v1574
      %v1600 = vmul.f32 %v1296, %v1574
      %v1601 = vmul.f32 %v1297, %v1574
      %v1602 = vmul.f32 %v1298, %v1574
      %v1603 = vmul.f32 %v1299, %v1574
      %v1604 = vmul.f32 %v1300, %v1574
      %v1605 = vmul.f32 %v1301, %v1574
      %v1606 = vmul.f32 %v1302, %v1574
      %v1607 = vmul.f32 %v1303, %v1574
      %v1608 = vmul.f32 %v1304, %v1574
      %v1609 = vmul.f32 %v1305, %v1574
      %v1610 = vmul.f32 %v1306, %v1574
      %v1611 = vmul.f32 %v1307, %v1574
      %v1612 = vmul.f32 %v1308, %v1574
      %v1613 = vmul.f32 %v1309, %v1574
      %v1614 = vmul.f32 %v1310, %v1574
      %v1615 = vmul.f32 %v1311, %v1574
      %v1616 = vmul.f32 %v1312, %v1574
      %v1617 = vmul.f32 %v1313, %v1574
      %v1618 = vmul.f32 %v1314, %v1574
      %v1619 = vmul.f32 %v1315, %v1574
      %v1620 = vmul.f32 %v1316, %v1574
      %v1621 = vmul.f32 %v1317, %v1574
      %v1622 = vmul.f32 %v1318, %v1574
      %v1623 = vmul.f32 %v1319, %v1574
      %v1625 = vlaneseq
      %v1626 = vshrl.u32 %v1625, 7
      %v1627 = vsub.s32 0, %v1626
      %v1628 = vrot.slane %v1329, %v1627
      %v1630 = vmul.f32 %v1275, %v1628
      %v1631 = vmul.f32 %v1276, %v1628
      %v1632 = vmul.f32 %v1278, %v1628
      %v1633 = vmul.f32 %v1279, %v1628
      %v1634 = vmul.f32 %v1281, %v1628
      %v1635 = vmul.f32 %v1282, %v1628
      %v1636 = vmul.f32 %v1284, %v1628
      %v1637 = vmul.f32 %v1285, %v1628
      %v1638 = vmul.f32 %v1287, %v1628
      %v1639 = vmul.f32 %v1288, %v1628
      %v1640 = vmul.f32 %v1290, %v1628
      %v1641 = vmul.f32 %v1291, %v1628
      %v1642 = vmul.f32 %v1293, %v1628
      %v1643 = vmul.f32 %v1294, %v1628
      %v1644 = vmul.f32 %v1296, %v1628
      %v1645 = vmul.f32 %v1297, %v1628
      %v1646 = vmul.f32 %v1299, %v1628
      %v1647 = vmul.f32 %v1300, %v1628
      %v1648 = vmul.f32 %v1302, %v1628
      %v1649 = vmul.f32 %v1303, %v1628
      %v1650 = vmul.f32 %v1305, %v1628
      %v1651 = vmul.f32 %v1306, %v1628
      %v1652 = vmul.f32 %v1308, %v1628
      %v1653 = vmul.f32 %v1309, %v1628
      %v1654 = vmul.f32 %v1311, %v1628
      %v1655 = vmul.f32 %v1312, %v1628
      %v1656 = vmul.f32 %v1314, %v1628
      %v1657 = vmul.f32 %v1315, %v1628
      %v1658 = vmul.f32 %v1317, %v1628
      %v1659 = vmul.f32 %v1318, %v1628
      %v1660 = vmul.f32 %v1320, %v1628
      %v1661 = vmul.f32 %v1321, %v1628
      %v1663 = vlaneseq
      %v1664 = vshrl.u32 %v1663, 7
      %v1665 = vsub.s32 0, %v1664
      %v1666 = vrot.slane %v1330, %v1665
      %v1668 = vmul.f32 %v1275, %v1666
      %v1669 = vmul.f32 %v1276, %v1666
      %v1670 = vmul.f32 %v1277, %v1666
      %v1671 = vmul.f32 %v1278, %v1666
      %v1672 = vmul.f32 %v1279, %v1666
      %v1673 = vmul.f32 %v1280, %v1666
      %v1674 = vmul.f32 %v1281, %v1666
      %v1675 = vmul.f32 %v1282, %v1666
      %v1676 = vmul.f32 %v1283, %v1666
      %v1677 = vmul.f32 %v1284, %v1666
      %v1678 = vmul.f32 %v1285, %v1666
      %v1679 = vmul.f32 %v1286, %v1666
      %v1680 = vmul.f32 %v1287, %v1666
      %v1681 = vmul.f32 %v1288, %v1666
      %v1682 = vmul.f32 %v1289, %v1666
      %v1683 = vmul.f32 %v1290, %v1666
      %v1684 = vmul.f32 %v1291, %v1666
      %v1685 = vmul.f32 %v1292, %v1666
      %v1686 = vmul.f32 %v1293, %v1666
      %v1687 = vmul.f32 %v1294, %v1666
      %v1688 = vmul.f32 %v1295, %v1666
      %v1689 = vmul.f32 %v1296, %v1666
      %v1690 = vmul.f32 %v1297, %v1666
      %v1691 = vmul.f32 %v1298, %v1666
      %v1692 = vmul.f32 %v1299, %v1666
      %v1693 = vmul.f32 %v1300, %v1666
      %v1694 = vmul.f32 %v1301, %v1666
      %v1695 = vmul.f32 %v1302, %v1666
      %v1696 = vmul.f32 %v1303, %v1666
      %v1697 = vmul.f32 %v1304, %v1666
      %v1698 = vmul.f32 %v1305, %v1666
      %v1699 = vmul.f32 %v1306, %v1666
      %v1700 = vmul.f32 %v1307, %v1666
      %v1701 = vmul.f32 %v1308, %v1666
      %v1702 = vmul.f32 %v1309, %v1666
      %v1703 = vmul.f32 %v1310, %v1666
      %v1704 = vmul.f32 %v1311, %v1666
      %v1705 = vmul.f32 %v1312, %v1666
      %v1706 = vmul.f32 %v1313, %v1666
      %v1707 = vmul.f32 %v1314, %v1666
      %v1708 = vmul.f32 %v1315, %v1666
      %v1709 = vmul.f32 %v1316, %v1666
      %v1710 = vmul.f32 %v1317, %v1666
      %v1711 = vmul.f32 %v1318, %v1666
      %v1712 = vmul.f32 %v1319, %v1666
      %v1713 = vmul.f32 %v1320, %v1666
      %v1714 = vmul.f32 %v1321, %v1666
      %v1715 = vmul.f32 %v1322, %v1666
      %v1717 = vlaneseq
      %v1718 = vshrl.u32 %v1717, 7
      %v1719 = vsub.s32 0, %v1718
      %v1720 = vrot.slane %v1331, %v1719
      %v1722 = vmul.f32 %v1275, %v1720
      %v1723 = vmul.f32 %v1276, %v1720
      %v1724 = vmul.f32 %v1277, %v1720
      %v1725 = vmul.f32 %v1278, %v1720
      %v1726 = vmul.f32 %v1279, %v1720
      %v1727 = vmul.f32 %v1280, %v1720
      %v1728 = vmul.f32 %v1281, %v1720
      %v1729 = vmul.f32 %v1282, %v1720
      %v1730 = vmul.f32 %v1283, %v1720
      %v1731 = vmul.f32 %v1284, %v1720
      %v1732 = vmul.f32 %v1285, %v1720
      %v1733 = vmul.f32 %v1286, %v1720
      %v1734 = vmul.f32 %v1287, %v1720
      %v1735 = vmul.f32 %v1288, %v1720
      %v1736 = vmul.f32 %v1289, %v1720
      %v1737 = vmul.f32 %v1290, %v1720
      %v1738 = vmul.f32 %v1291, %v1720
      %v1739 = vmul.f32 %v1292, %v1720
      %v1740 = vmul.f32 %v1293, %v1720
      %v1741 = vmul.f32 %v1294, %v1720
      %v1742 = vmul.f32 %v1295, %v1720
      %v1743 = vmul.f32 %v1296, %v1720
      %v1744 = vmul.f32 %v1297, %v1720
      %v1745 = vmul.f32 %v1298, %v1720
      %v1746 = vmul.f32 %v1299, %v1720
      %v1747 = vmul.f32 %v1300, %v1720
      %v1748 = vmul.f32 %v1301, %v1720
      %v1749 = vmul.f32 %v1302, %v1720
      %v1750 = vmul.f32 %v1303, %v1720
      %v1751 = vmul.f32 %v1304, %v1720
      %v1752 = vmul.f32 %v1305, %v1720
      %v1753 = vmul.f32 %v1306, %v1720
      %v1754 = vmul.f32 %v1307, %v1720
      %v1755 = vmul.f32 %v1308, %v1720
      %v1756 = vmul.f32 %v1309, %v1720
      %v1757 = vmul.f32 %v1310, %v1720
      %v1758 = vmul.f32 %v1311, %v1720
      %v1759 = vmul.f32 %v1312, %v1720
      %v1760 = vmul.f32 %v1313, %v1720
      %v1761 = vmul.f32 %v1314, %v1720
      %v1762 = vmul.f32 %v1315, %v1720
      %v1763 = vmul.f32 %v1316, %v1720
      %v1764 = vmul.f32 %v1317, %v1720
      %v1765 = vmul.f32 %v1318, %v1720
      %v1766 = vmul.f32 %v1319, %v1720
      %v1767 = vmul.f32 %v1320, %v1720
      %v1768 = vmul.f32 %v1321, %v1720
      %v1769 = vmul.f32 %v1322, %v1720
      %vm1818 = vcmask 1046528
      %v1819 = vrot.slane %v1376, 1
      %v1820 = vrot.slane %v1377, 1
      %v1821 = vsel %vm1818, %v1819, %v1820
      %v1822 = vrot.slane %v1378, 1
      %v1823 = vsel %vm1818, %v1820, %v1822
      %v1824 = vrot.slane %v1379, 1
      %v1825 = vrot.slane %v1380, 1
      %v1826 = vsel %vm1818, %v1824, %v1825
      %v1827 = vrot.slane %v1381, 1
      %v1828 = vsel %vm1818, %v1825, %v1827
      %v1829 = vrot.slane %v1382, 1
      %v1830 = vrot.slane %v1383, 1
      %v1831 = vsel %vm1818, %v1829, %v1830
      %v1832 = vrot.slane %v1384, 1
      %v1833 = vsel %vm1818, %v1830, %v1832
      %v1834 = vrot.slane %v1385, 1
      %v1835 = vrot.slane %v1386, 1
      %v1836 = vsel %vm1818, %v1834, %v1835
      %v1837 = vrot.slane %v1387, 1
      %v1838 = vsel %vm1818, %v1835, %v1837
      %v1839 = vrot.slane %v1388, 1
      %v1840 = vrot.slane %v1389, 1
      %v1841 = vsel %vm1818, %v1839, %v1840
      %v1842 = vrot.slane %v1390, 1
      %v1843 = vsel %vm1818, %v1840, %v1842
      %v1844 = vrot.slane %v1391, 1
      %v1845 = vrot.slane %v1392, 1
      %v1846 = vsel %vm1818, %v1844, %v1845
      %v1847 = vrot.slane %v1393, 1
      %v1848 = vsel %vm1818, %v1845, %v1847
      %v1849 = vrot.slane %v1394, 1
      %v1850 = vrot.slane %v1395, 1
      %v1851 = vsel %vm1818, %v1849, %v1850
      %v1852 = vrot.slane %v1396, 1
      %v1853 = vsel %vm1818, %v1850, %v1852
      %v1854 = vrot.slane %v1397, 1
      %v1855 = vrot.slane %v1398, 1
      %v1856 = vsel %vm1818, %v1854, %v1855
      %v1857 = vrot.slane %v1399, 1
      %v1858 = vsel %vm1818, %v1855, %v1857
      %v1859 = vrot.slane %v1400, 1
      %v1860 = vrot.slane %v1401, 1
      %v1861 = vsel %vm1818, %v1859, %v1860
      %v1862 = vrot.slane %v1402, 1
      %v1863 = vsel %vm1818, %v1860, %v1862
      %v1864 = vrot.slane %v1403, 1
      %v1865 = vrot.slane %v1404, 1
      %v1866 = vsel %vm1818, %v1864, %v1865
      %v1867 = vrot.slane %v1405, 1
      %v1868 = vsel %vm1818, %v1865, %v1867
      %v1869 = vrot.slane %v1406, 1
      %v1870 = vrot.slane %v1407, 1
      %v1871 = vsel %vm1818, %v1869, %v1870
      %v1872 = vrot.slane %v1408, 1
      %v1873 = vsel %vm1818, %v1870, %v1872
      %v1874 = vrot.slane %v1409, 1
      %v1875 = vrot.slane %v1410, 1
      %v1876 = vsel %vm1818, %v1874, %v1875
      %v1877 = vrot.slane %v1411, 1
      %v1878 = vsel %vm1818, %v1875, %v1877
      %v1879 = vrot.slane %v1412, 1
      %v1880 = vrot.slane %v1413, 1
      %v1881 = vsel %vm1818, %v1879, %v1880
      %v1882 = vrot.slane %v1414, 1
      %v1883 = vsel %vm1818, %v1880, %v1882
      %v1884 = vrot.slane %v1415, 1
      %v1885 = vrot.slane %v1416, 1
      %v1886 = vsel %vm1818, %v1884, %v1885
      %v1887 = vrot.slane %v1417, 1
      %v1888 = vsel %vm1818, %v1885, %v1887
      %v1889 = vrot.slane %v1418, 1
      %v1890 = vrot.slane %v1419, 1
      %v1891 = vsel %vm1818, %v1889, %v1890
      %v1892 = vrot.slane %v1420, 1
      %v1893 = vsel %vm1818, %v1890, %v1892
      %v1894 = vrot.slane %v1421, 1
      %v1895 = vrot.slane %v1422, 1
      %v1896 = vsel %vm1818, %v1894, %v1895
      %v1897 = vrot.slane %v1423, 1
      %v1898 = vsel %vm1818, %v1895, %v1897
      %v1931 = vadd.f32 %v1338, %v1821
      %v1932 = vadd.f32 %v1339, %v1823
      %v1933 = vadd.f32 %v1340, %v1826
      %v1934 = vadd.f32 %v1341, %v1828
      %v1935 = vadd.f32 %v1342, %v1831
      %v1936 = vadd.f32 %v1343, %v1833
      %v1937 = vadd.f32 %v1344, %v1836
      %v1938 = vadd.f32 %v1345, %v1838
      %v1939 = vadd.f32 %v1346, %v1841
      %v1940 = vadd.f32 %v1347, %v1843
      %v1941 = vadd.f32 %v1348, %v1846
      %v1942 = vadd.f32 %v1349, %v1848
      %v1943 = vadd.f32 %v1350, %v1851
      %v1944 = vadd.f32 %v1351, %v1853
      %v1945 = vadd.f32 %v1352, %v1856
      %v1946 = vadd.f32 %v1353, %v1858
      %v1947 = vadd.f32 %v1354, %v1861
      %v1948 = vadd.f32 %v1355, %v1863
      %v1949 = vadd.f32 %v1356, %v1866
      %v1950 = vadd.f32 %v1357, %v1868
      %v1951 = vadd.f32 %v1358, %v1871
      %v1952 = vadd.f32 %v1359, %v1873
      %v1953 = vadd.f32 %v1360, %v1876
      %v1954 = vadd.f32 %v1361, %v1878
      %v1955 = vadd.f32 %v1362, %v1881
      %v1956 = vadd.f32 %v1363, %v1883
      %v1957 = vadd.f32 %v1364, %v1886
      %v1958 = vadd.f32 %v1365, %v1888
      %v1959 = vadd.f32 %v1366, %v1891
      %v1960 = vadd.f32 %v1367, %v1893
      %v1961 = vadd.f32 %v1368, %v1896
      %v1962 = vadd.f32 %v1369, %v1898
      %vm1995 = vcmask 1041408
      %v1996 = vrot.slane %v1484, 6
      %v1997 = vrot.slane %v1485, 6
      %v1998 = vsel %vm1995, %v1996, %v1997
      %v1999 = vrot.slane %v1486, 6
      %v2000 = vrot.slane %v1487, 6
      %v2001 = vsel %vm1995, %v1999, %v2000
      %v2002 = vrot.slane %v1488, 6
      %v2003 = vrot.slane %v1489, 6
      %v2004 = vsel %vm1995, %v2002, %v2003
      %v2005 = vrot.slane %v1490, 6
      %v2006 = vrot.slane %v1491, 6
      %v2007 = vsel %vm1995, %v2005, %v2006
      %v2008 = vrot.slane %v1492, 6
      %v2009 = vrot.slane %v1493, 6
      %v2010 = vsel %vm1995, %v2008, %v2009
      %v2011 = vrot.slane %v1494, 6
      %v2012 = vrot.slane %v1495, 6
      %v2013 = vsel %vm1995, %v2011, %v2012
      %v2014 = vrot.slane %v1496, 6
      %v2015 = vrot.slane %v1497, 6
      %v2016 = vsel %vm1995, %v2014, %v2015
      %v2017 = vrot.slane %v1498, 6
      %v2018 = vrot.slane %v1499, 6
      %v2019 = vsel %vm1995, %v2017, %v2018
      %v2020 = vrot.slane %v1500, 6
      %v2021 = vrot.slane %v1501, 6
      %v2022 = vsel %vm1995, %v2020, %v2021
      %v2023 = vrot.slane %v1502, 6
      %v2024 = vrot.slane %v1503, 6
      %v2025 = vsel %vm1995, %v2023, %v2024
      %v2026 = vrot.slane %v1504, 6
      %v2027 = vrot.slane %v1505, 6
      %v2028 = vsel %vm1995, %v2026, %v2027
      %v2029 = vrot.slane %v1506, 6
      %v2030 = vrot.slane %v1507, 6
      %v2031 = vsel %vm1995, %v2029, %v2030
      %v2032 = vrot.slane %v1508, 6
      %v2033 = vrot.slane %v1509, 6
      %v2034 = vsel %vm1995, %v2032, %v2033
      %v2035 = vrot.slane %v1510, 6
      %v2036 = vrot.slane %v1511, 6
      %v2037 = vsel %vm1995, %v2035, %v2036
      %v2038 = vrot.slane %v1512, 6
      %v2039 = vrot.slane %v1513, 6
      %v2040 = vsel %vm1995, %v2038, %v2039
      %v2041 = vrot.slane %v1514, 6
      %v2042 = vrot.slane %v1515, 6
      %v2043 = vsel %vm1995, %v2041, %v2042
      %v2092 = vadd.f32 %v1430, %v1996
      %v2093 = vadd.f32 %v1431, %v1998
      %v2094 = vadd.f32 %v1432, %v1997
      %v2095 = vadd.f32 %v1433, %v1999
      %v2096 = vadd.f32 %v1434, %v2001
      %v2097 = vadd.f32 %v1435, %v2000
      %v2098 = vadd.f32 %v1436, %v2002
      %v2099 = vadd.f32 %v1437, %v2004
      %v2100 = vadd.f32 %v1438, %v2003
      %v2101 = vadd.f32 %v1439, %v2005
      %v2102 = vadd.f32 %v1440, %v2007
      %v2103 = vadd.f32 %v1441, %v2006
      %v2104 = vadd.f32 %v1442, %v2008
      %v2105 = vadd.f32 %v1443, %v2010
      %v2106 = vadd.f32 %v1444, %v2009
      %v2107 = vadd.f32 %v1445, %v2011
      %v2108 = vadd.f32 %v1446, %v2013
      %v2109 = vadd.f32 %v1447, %v2012
      %v2110 = vadd.f32 %v1448, %v2014
      %v2111 = vadd.f32 %v1449, %v2016
      %v2112 = vadd.f32 %v1450, %v2015
      %v2113 = vadd.f32 %v1451, %v2017
      %v2114 = vadd.f32 %v1452, %v2019
      %v2115 = vadd.f32 %v1453, %v2018
      %v2116 = vadd.f32 %v1454, %v2020
      %v2117 = vadd.f32 %v1455, %v2022
      %v2118 = vadd.f32 %v1456, %v2021
      %v2119 = vadd.f32 %v1457, %v2023
      %v2120 = vadd.f32 %v1458, %v2025
      %v2121 = vadd.f32 %v1459, %v2024
      %v2122 = vadd.f32 %v1460, %v2026
      %v2123 = vadd.f32 %v1461, %v2028
      %v2124 = vadd.f32 %v1462, %v2027
      %v2125 = vadd.f32 %v1463, %v2029
      %v2126 = vadd.f32 %v1464, %v2031
      %v2127 = vadd.f32 %v1465, %v2030
      %v2128 = vadd.f32 %v1466, %v2032
      %v2129 = vadd.f32 %v1467, %v2034
      %v2130 = vadd.f32 %v1468, %v2033
      %v2131 = vadd.f32 %v1469, %v2035
      %v2132 = vadd.f32 %v1470, %v2037
      %v2133 = vadd.f32 %v1471, %v2036
      %v2134 = vadd.f32 %v1472, %v2038
      %v2135 = vadd.f32 %v1473, %v2040
      %v2136 = vadd.f32 %v1474, %v2039
      %v2137 = vadd.f32 %v1475, %v2041
      %v2138 = vadd.f32 %v1476, %v2043
      %v2139 = vadd.f32 %v1477, %v2042
      %v2188 = vrot.slane %v1576, 1
      %v2189 = vrot.slane %v1577, 1
      %v2190 = vsel %vm1818, %v2188, %v2189
      %v2191 = vrot.slane %v1578, 1
      %v2192 = vsel %vm1818, %v2189, %v2191
      %v2193 = vrot.slane %v1579, 1
      %v2194 = vrot.slane %v1580, 1
      %v2195 = vsel %vm1818, %v2193, %v2194
      %v2196 = vrot.slane %v1581, 1
      %v2197 = vsel %vm1818, %v2194, %v2196
      %v2198 = vrot.slane %v1582, 1
      %v2199 = vrot.slane %v1583, 1
      %v2200 = vsel %vm1818, %v2198, %v2199
      %v2201 = vrot.slane %v1584, 1
      %v2202 = vsel %vm1818, %v2199, %v2201
      %v2203 = vrot.slane %v1585, 1
      %v2204 = vrot.slane %v1586, 1
      %v2205 = vsel %vm1818, %v2203, %v2204
      %v2206 = vrot.slane %v1587, 1
      %v2207 = vsel %vm1818, %v2204, %v2206
      %v2208 = vrot.slane %v1588, 1
      %v2209 = vrot.slane %v1589, 1
      %v2210 = vsel %vm1818, %v2208, %v2209
      %v2211 = vrot.slane %v1590, 1
      %v2212 = vsel %vm1818, %v2209, %v2211
      %v2213 = vrot.slane %v1591, 1
      %v2214 = vrot.slane %v1592, 1
      %v2215 = vsel %vm1818, %v2213, %v2214
      %v2216 = vrot.slane %v1593, 1
      %v2217 = vsel %vm1818, %v2214, %v2216
      %v2218 = vrot.slane %v1594, 1
      %v2219 = vrot.slane %v1595, 1
      %v2220 = vsel %vm1818, %v2218, %v2219
      %v2221 = vrot.slane %v1596, 1
      %v2222 = vsel %vm1818, %v2219, %v2221
      %v2223 = vrot.slane %v1597, 1
      %v2224 = vrot.slane %v1598, 1
      %v2225 = vsel %vm1818, %v2223, %v2224
      %v2226 = vrot.slane %v1599, 1
      %v2227 = vsel %vm1818, %v2224, %v2226
      %v2228 = vrot.slane %v1600, 1
      %v2229 = vrot.slane %v1601, 1
      %v2230 = vsel %vm1818, %v2228, %v2229
      %v2231 = vrot.slane %v1602, 1
      %v2232 = vsel %vm1818, %v2229, %v2231
      %v2233 = vrot.slane %v1603, 1
      %v2234 = vrot.slane %v1604, 1
      %v2235 = vsel %vm1818, %v2233, %v2234
      %v2236 = vrot.slane %v1605, 1
      %v2237 = vsel %vm1818, %v2234, %v2236
      %v2238 = vrot.slane %v1606, 1
      %v2239 = vrot.slane %v1607, 1
      %v2240 = vsel %vm1818, %v2238, %v2239
      %v2241 = vrot.slane %v1608, 1
      %v2242 = vsel %vm1818, %v2239, %v2241
      %v2243 = vrot.slane %v1609, 1
      %v2244 = vrot.slane %v1610, 1
      %v2245 = vsel %vm1818, %v2243, %v2244
      %v2246 = vrot.slane %v1611, 1
      %v2247 = vsel %vm1818, %v2244, %v2246
      %v2248 = vrot.slane %v1612, 1
      %v2249 = vrot.slane %v1613, 1
      %v2250 = vsel %vm1818, %v2248, %v2249
      %v2251 = vrot.slane %v1614, 1
      %v2252 = vsel %vm1818, %v2249, %v2251
      %v2253 = vrot.slane %v1615, 1
      %v2254 = vrot.slane %v1616, 1
      %v2255 = vsel %vm1818, %v2253, %v2254
      %v2256 = vrot.slane %v1617, 1
      %v2257 = vsel %vm1818, %v2254, %v2256
      %v2258 = vrot.slane %v1618, 1
      %v2259 = vrot.slane %v1619, 1
      %v2260 = vsel %vm1818, %v2258, %v2259
      %v2261 = vrot.slane %v1620, 1
      %v2262 = vsel %vm1818, %v2259, %v2261
      %v2263 = vrot.slane %v1621, 1
      %v2264 = vrot.slane %v1622, 1
      %v2265 = vsel %vm1818, %v2263, %v2264
      %v2266 = vrot.slane %v1623, 1
      %v2267 = vsel %vm1818, %v2264, %v2266
      %v2316 = vadd.f32 %v1522, %v2190
      %v2317 = vadd.f32 %v1523, %v2192
      %v2318 = vadd.f32 %v1524, %v2191
      %v2319 = vadd.f32 %v1525, %v2195
      %v2320 = vadd.f32 %v1526, %v2197
      %v2321 = vadd.f32 %v1527, %v2196
      %v2322 = vadd.f32 %v1528, %v2200
      %v2323 = vadd.f32 %v1529, %v2202
      %v2324 = vadd.f32 %v1530, %v2201
      %v2325 = vadd.f32 %v1531, %v2205
      %v2326 = vadd.f32 %v1532, %v2207
      %v2327 = vadd.f32 %v1533, %v2206
      %v2328 = vadd.f32 %v1534, %v2210
      %v2329 = vadd.f32 %v1535, %v2212
      %v2330 = vadd.f32 %v1536, %v2211
      %v2331 = vadd.f32 %v1537, %v2215
      %v2332 = vadd.f32 %v1538, %v2217
      %v2333 = vadd.f32 %v1539, %v2216
      %v2334 = vadd.f32 %v1540, %v2220
      %v2335 = vadd.f32 %v1541, %v2222
      %v2336 = vadd.f32 %v1542, %v2221
      %v2337 = vadd.f32 %v1543, %v2225
      %v2338 = vadd.f32 %v1544, %v2227
      %v2339 = vadd.f32 %v1545, %v2226
      %v2340 = vadd.f32 %v1546, %v2230
      %v2341 = vadd.f32 %v1547, %v2232
      %v2342 = vadd.f32 %v1548, %v2231
      %v2343 = vadd.f32 %v1549, %v2235
      %v2344 = vadd.f32 %v1550, %v2237
      %v2345 = vadd.f32 %v1551, %v2236
      %v2346 = vadd.f32 %v1552, %v2240
      %v2347 = vadd.f32 %v1553, %v2242
      %v2348 = vadd.f32 %v1554, %v2241
      %v2349 = vadd.f32 %v1555, %v2245
      %v2350 = vadd.f32 %v1556, %v2247
      %v2351 = vadd.f32 %v1557, %v2246
      %v2352 = vadd.f32 %v1558, %v2250
      %v2353 = vadd.f32 %v1559, %v2252
      %v2354 = vadd.f32 %v1560, %v2251
      %v2355 = vadd.f32 %v1561, %v2255
      %v2356 = vadd.f32 %v1562, %v2257
      %v2357 = vadd.f32 %v1563, %v2256
      %v2358 = vadd.f32 %v1564, %v2260
      %v2359 = vadd.f32 %v1565, %v2262
      %v2360 = vadd.f32 %v1566, %v2261
      %v2361 = vadd.f32 %v1567, %v2265
      %v2362 = vadd.f32 %v1568, %v2267
      %v2363 = vadd.f32 %v1569, %v2266
      %v2412 = vrot.slane %v1668, 1
      %v2413 = vrot.slane %v1669, 1
      %v2414 = vsel %vm1818, %v2412, %v2413
      %v2415 = vrot.slane %v1670, 1
      %v2416 = vsel %vm1818, %v2413, %v2415
      %v2417 = vrot.slane %v1671, 1
      %v2418 = vrot.slane %v1672, 1
      %v2419 = vsel %vm1818, %v2417, %v2418
      %v2420 = vrot.slane %v1673, 1
      %v2421 = vsel %vm1818, %v2418, %v2420
      %v2422 = vrot.slane %v1674, 1
      %v2423 = vrot.slane %v1675, 1
      %v2424 = vsel %vm1818, %v2422, %v2423
      %v2425 = vrot.slane %v1676, 1
      %v2426 = vsel %vm1818, %v2423, %v2425
      %v2427 = vrot.slane %v1677, 1
      %v2428 = vrot.slane %v1678, 1
      %v2429 = vsel %vm1818, %v2427, %v2428
      %v2430 = vrot.slane %v1679, 1
      %v2431 = vsel %vm1818, %v2428, %v2430
      %v2432 = vrot.slane %v1680, 1
      %v2433 = vrot.slane %v1681, 1
      %v2434 = vsel %vm1818, %v2432, %v2433
      %v2435 = vrot.slane %v1682, 1
      %v2436 = vsel %vm1818, %v2433, %v2435
      %v2437 = vrot.slane %v1683, 1
      %v2438 = vrot.slane %v1684, 1
      %v2439 = vsel %vm1818, %v2437, %v2438
      %v2440 = vrot.slane %v1685, 1
      %v2441 = vsel %vm1818, %v2438, %v2440
      %v2442 = vrot.slane %v1686, 1
      %v2443 = vrot.slane %v1687, 1
      %v2444 = vsel %vm1818, %v2442, %v2443
      %v2445 = vrot.slane %v1688, 1
      %v2446 = vsel %vm1818, %v2443, %v2445
      %v2447 = vrot.slane %v1689, 1
      %v2448 = vrot.slane %v1690, 1
      %v2449 = vsel %vm1818, %v2447, %v2448
      %v2450 = vrot.slane %v1691, 1
      %v2451 = vsel %vm1818, %v2448, %v2450
      %v2452 = vrot.slane %v1692, 1
      %v2453 = vrot.slane %v1693, 1
      %v2454 = vsel %vm1818, %v2452, %v2453
      %v2455 = vrot.slane %v1694, 1
      %v2456 = vsel %vm1818, %v2453, %v2455
      %v2457 = vrot.slane %v1695, 1
      %v2458 = vrot.slane %v1696, 1
      %v2459 = vsel %vm1818, %v2457, %v2458
      %v2460 = vrot.slane %v1697, 1
      %v2461 = vsel %vm1818, %v2458, %v2460
      %v2462 = vrot.slane %v1698, 1
      %v2463 = vrot.slane %v1699, 1
      %v2464 = vsel %vm1818, %v2462, %v2463
      %v2465 = vrot.slane %v1700, 1
      %v2466 = vsel %vm1818, %v2463, %v2465
      %v2467 = vrot.slane %v1701, 1
      %v2468 = vrot.slane %v1702, 1
      %v2469 = vsel %vm1818, %v2467, %v2468
      %v2470 = vrot.slane %v1703, 1
      %v2471 = vsel %vm1818, %v2468, %v2470
      %v2472 = vrot.slane %v1704, 1
      %v2473 = vrot.slane %v1705, 1
      %v2474 = vsel %vm1818, %v2472, %v2473
      %v2475 = vrot.slane %v1706, 1
      %v2476 = vsel %vm1818, %v2473, %v2475
      %v2477 = vrot.slane %v1707, 1
      %v2478 = vrot.slane %v1708, 1
      %v2479 = vsel %vm1818, %v2477, %v2478
      %v2480 = vrot.slane %v1709, 1
      %v2481 = vsel %vm1818, %v2478, %v2480
      %v2482 = vrot.slane %v1710, 1
      %v2483 = vrot.slane %v1711, 1
      %v2484 = vsel %vm1818, %v2482, %v2483
      %v2485 = vrot.slane %v1712, 1
      %v2486 = vsel %vm1818, %v2483, %v2485
      %v2487 = vrot.slane %v1713, 1
      %v2488 = vrot.slane %v1714, 1
      %v2489 = vsel %vm1818, %v2487, %v2488
      %v2490 = vrot.slane %v1715, 1
      %v2491 = vsel %vm1818, %v2488, %v2490
      %v2524 = vadd.f32 %v1630, %v2414
      %v2525 = vadd.f32 %v1631, %v2416
      %v2526 = vadd.f32 %v1632, %v2419
      %v2527 = vadd.f32 %v1633, %v2421
      %v2528 = vadd.f32 %v1634, %v2424
      %v2529 = vadd.f32 %v1635, %v2426
      %v2530 = vadd.f32 %v1636, %v2429
      %v2531 = vadd.f32 %v1637, %v2431
      %v2532 = vadd.f32 %v1638, %v2434
      %v2533 = vadd.f32 %v1639, %v2436
      %v2534 = vadd.f32 %v1640, %v2439
      %v2535 = vadd.f32 %v1641, %v2441
      %v2536 = vadd.f32 %v1642, %v2444
      %v2537 = vadd.f32 %v1643, %v2446
      %v2538 = vadd.f32 %v1644, %v2449
      %v2539 = vadd.f32 %v1645, %v2451
      %v2540 = vadd.f32 %v1646, %v2454
      %v2541 = vadd.f32 %v1647, %v2456
      %v2542 = vadd.f32 %v1648, %v2459
      %v2543 = vadd.f32 %v1649, %v2461
      %v2544 = vadd.f32 %v1650, %v2464
      %v2545 = vadd.f32 %v1651, %v2466
      %v2546 = vadd.f32 %v1652, %v2469
      %v2547 = vadd.f32 %v1653, %v2471
      %v2548 = vadd.f32 %v1654, %v2474
      %v2549 = vadd.f32 %v1655, %v2476
      %v2550 = vadd.f32 %v1656, %v2479
      %v2551 = vadd.f32 %v1657, %v2481
      %v2552 = vadd.f32 %v1658, %v2484
      %v2553 = vadd.f32 %v1659, %v2486
      %v2554 = vadd.f32 %v1660, %v2489
      %v2555 = vadd.f32 %v1661, %v2491
      %vm2604 = vcmask 1045504
      %v2605 = vrot.slane %v2092, 2
      %v2606 = vrot.slane %v2093, 2
      %v2607 = vsel %vm2604, %v2605, %v2606
      %v2608 = vrot.slane %v2094, 2
      %v2609 = vsel %vm2604, %v2606, %v2608
      %v2610 = vrot.slane %v2095, 2
      %v2611 = vrot.slane %v2096, 2
      %v2612 = vsel %vm2604, %v2610, %v2611
      %v2613 = vrot.slane %v2097, 2
      %v2614 = vsel %vm2604, %v2611, %v2613
      %v2615 = vrot.slane %v2098, 2
      %v2616 = vrot.slane %v2099, 2
      %v2617 = vsel %vm2604, %v2615, %v2616
      %v2618 = vrot.slane %v2100, 2
      %v2619 = vsel %vm2604, %v2616, %v2618
      %v2620 = vrot.slane %v2101, 2
      %v2621 = vrot.slane %v2102, 2
      %v2622 = vsel %vm2604, %v2620, %v2621
      %v2623 = vrot.slane %v2103, 2
      %v2624 = vsel %vm2604, %v2621, %v2623
      %v2625 = vrot.slane %v2104, 2
      %v2626 = vrot.slane %v2105, 2
      %v2627 = vsel %vm2604, %v2625, %v2626
      %v2628 = vrot.slane %v2106, 2
      %v2629 = vsel %vm2604, %v2626, %v2628
      %v2630 = vrot.slane %v2107, 2
      %v2631 = vrot.slane %v2108, 2
      %v2632 = vsel %vm2604, %v2630, %v2631
      %v2633 = vrot.slane %v2109, 2
      %v2634 = vsel %vm2604, %v2631, %v2633
      %v2635 = vrot.slane %v2110, 2
      %v2636 = vrot.slane %v2111, 2
      %v2637 = vsel %vm2604, %v2635, %v2636
      %v2638 = vrot.slane %v2112, 2
      %v2639 = vsel %vm2604, %v2636, %v2638
      %v2640 = vrot.slane %v2113, 2
      %v2641 = vrot.slane %v2114, 2
      %v2642 = vsel %vm2604, %v2640, %v2641
      %v2643 = vrot.slane %v2115, 2
      %v2644 = vsel %vm2604, %v2641, %v2643
      %v2645 = vrot.slane %v2116, 2
      %v2646 = vrot.slane %v2117, 2
      %v2647 = vsel %vm2604, %v2645, %v2646
      %v2648 = vrot.slane %v2118, 2
      %v2649 = vsel %vm2604, %v2646, %v2648
      %v2650 = vrot.slane %v2119, 2
      %v2651 = vrot.slane %v2120, 2
      %v2652 = vsel %vm2604, %v2650, %v2651
      %v2653 = vrot.slane %v2121, 2
      %v2654 = vsel %vm2604, %v2651, %v2653
      %v2655 = vrot.slane %v2122, 2
      %v2656 = vrot.slane %v2123, 2
      %v2657 = vsel %vm2604, %v2655, %v2656
      %v2658 = vrot.slane %v2124, 2
      %v2659 = vsel %vm2604, %v2656, %v2658
      %v2660 = vrot.slane %v2125, 2
      %v2661 = vrot.slane %v2126, 2
      %v2662 = vsel %vm2604, %v2660, %v2661
      %v2663 = vrot.slane %v2127, 2
      %v2664 = vsel %vm2604, %v2661, %v2663
      %v2665 = vrot.slane %v2128, 2
      %v2666 = vrot.slane %v2129, 2
      %v2667 = vsel %vm2604, %v2665, %v2666
      %v2668 = vrot.slane %v2130, 2
      %v2669 = vsel %vm2604, %v2666, %v2668
      %v2670 = vrot.slane %v2131, 2
      %v2671 = vrot.slane %v2132, 2
      %v2672 = vsel %vm2604, %v2670, %v2671
      %v2673 = vrot.slane %v2133, 2
      %v2674 = vsel %vm2604, %v2671, %v2673
      %v2675 = vrot.slane %v2134, 2
      %v2676 = vrot.slane %v2135, 2
      %v2677 = vsel %vm2604, %v2675, %v2676
      %v2678 = vrot.slane %v2136, 2
      %v2679 = vsel %vm2604, %v2676, %v2678
      %v2680 = vrot.slane %v2137, 2
      %v2681 = vrot.slane %v2138, 2
      %v2682 = vsel %vm2604, %v2680, %v2681
      %v2683 = vrot.slane %v2139, 2
      %v2684 = vsel %vm2604, %v2681, %v2683
      %v2717 = vadd.f32 %v1931, %v2607
      %v2718 = vadd.f32 %v1932, %v2609
      %v2719 = vadd.f32 %v1933, %v2612
      %v2720 = vadd.f32 %v1934, %v2614
      %v2721 = vadd.f32 %v1935, %v2617
      %v2722 = vadd.f32 %v1936, %v2619
      %v2723 = vadd.f32 %v1937, %v2622
      %v2724 = vadd.f32 %v1938, %v2624
      %v2725 = vadd.f32 %v1939, %v2627
      %v2726 = vadd.f32 %v1940, %v2629
      %v2727 = vadd.f32 %v1941, %v2632
      %v2728 = vadd.f32 %v1942, %v2634
      %v2729 = vadd.f32 %v1943, %v2637
      %v2730 = vadd.f32 %v1944, %v2639
      %v2731 = vadd.f32 %v1945, %v2642
      %v2732 = vadd.f32 %v1946, %v2644
      %v2733 = vadd.f32 %v1947, %v2647
      %v2734 = vadd.f32 %v1948, %v2649
      %v2735 = vadd.f32 %v1949, %v2652
      %v2736 = vadd.f32 %v1950, %v2654
      %v2737 = vadd.f32 %v1951, %v2657
      %v2738 = vadd.f32 %v1952, %v2659
      %v2739 = vadd.f32 %v1953, %v2662
      %v2740 = vadd.f32 %v1954, %v2664
      %v2741 = vadd.f32 %v1955, %v2667
      %v2742 = vadd.f32 %v1956, %v2669
      %v2743 = vadd.f32 %v1957, %v2672
      %v2744 = vadd.f32 %v1958, %v2674
      %v2745 = vadd.f32 %v1959, %v2677
      %v2746 = vadd.f32 %v1960, %v2679
      %v2747 = vadd.f32 %v1961, %v2682
      %v2748 = vadd.f32 %v1962, %v2684
      %vm2781 = vcmask 1040384
      %v2782 = vrot.slane %v2524, 7
      %v2783 = vrot.slane %v2525, 7
      %v2784 = vsel %vm2781, %v2782, %v2783
      %v2785 = vrot.slane %v2526, 7
      %v2786 = vrot.slane %v2527, 7
      %v2787 = vsel %vm2781, %v2785, %v2786
      %v2788 = vrot.slane %v2528, 7
      %v2789 = vrot.slane %v2529, 7
      %v2790 = vsel %vm2781, %v2788, %v2789
      %v2791 = vrot.slane %v2530, 7
      %v2792 = vrot.slane %v2531, 7
      %v2793 = vsel %vm2781, %v2791, %v2792
      %v2794 = vrot.slane %v2532, 7
      %v2795 = vrot.slane %v2533, 7
      %v2796 = vsel %vm2781, %v2794, %v2795
      %v2797 = vrot.slane %v2534, 7
      %v2798 = vrot.slane %v2535, 7
      %v2799 = vsel %vm2781, %v2797, %v2798
      %v2800 = vrot.slane %v2536, 7
      %v2801 = vrot.slane %v2537, 7
      %v2802 = vsel %vm2781, %v2800, %v2801
      %v2803 = vrot.slane %v2538, 7
      %v2804 = vrot.slane %v2539, 7
      %v2805 = vsel %vm2781, %v2803, %v2804
      %v2806 = vrot.slane %v2540, 7
      %v2807 = vrot.slane %v2541, 7
      %v2808 = vsel %vm2781, %v2806, %v2807
      %v2809 = vrot.slane %v2542, 7
      %v2810 = vrot.slane %v2543, 7
      %v2811 = vsel %vm2781, %v2809, %v2810
      %v2812 = vrot.slane %v2544, 7
      %v2813 = vrot.slane %v2545, 7
      %v2814 = vsel %vm2781, %v2812, %v2813
      %v2815 = vrot.slane %v2546, 7
      %v2816 = vrot.slane %v2547, 7
      %v2817 = vsel %vm2781, %v2815, %v2816
      %v2818 = vrot.slane %v2548, 7
      %v2819 = vrot.slane %v2549, 7
      %v2820 = vsel %vm2781, %v2818, %v2819
      %v2821 = vrot.slane %v2550, 7
      %v2822 = vrot.slane %v2551, 7
      %v2823 = vsel %vm2781, %v2821, %v2822
      %v2824 = vrot.slane %v2552, 7
      %v2825 = vrot.slane %v2553, 7
      %v2826 = vsel %vm2781, %v2824, %v2825
      %v2827 = vrot.slane %v2554, 7
      %v2828 = vrot.slane %v2555, 7
      %v2829 = vsel %vm2781, %v2827, %v2828
      %v2878 = vadd.f32 %v2316, %v2782
      %v2879 = vadd.f32 %v2317, %v2784
      %v2880 = vadd.f32 %v2318, %v2783
      %v2881 = vadd.f32 %v2319, %v2785
      %v2882 = vadd.f32 %v2320, %v2787
      %v2883 = vadd.f32 %v2321, %v2786
      %v2884 = vadd.f32 %v2322, %v2788
      %v2885 = vadd.f32 %v2323, %v2790
      %v2886 = vadd.f32 %v2324, %v2789
      %v2887 = vadd.f32 %v2325, %v2791
      %v2888 = vadd.f32 %v2326, %v2793
      %v2889 = vadd.f32 %v2327, %v2792
      %v2890 = vadd.f32 %v2328, %v2794
      %v2891 = vadd.f32 %v2329, %v2796
      %v2892 = vadd.f32 %v2330, %v2795
      %v2893 = vadd.f32 %v2331, %v2797
      %v2894 = vadd.f32 %v2332, %v2799
      %v2895 = vadd.f32 %v2333, %v2798
      %v2896 = vadd.f32 %v2334, %v2800
      %v2897 = vadd.f32 %v2335, %v2802
      %v2898 = vadd.f32 %v2336, %v2801
      %v2899 = vadd.f32 %v2337, %v2803
      %v2900 = vadd.f32 %v2338, %v2805
      %v2901 = vadd.f32 %v2339, %v2804
      %v2902 = vadd.f32 %v2340, %v2806
      %v2903 = vadd.f32 %v2341, %v2808
      %v2904 = vadd.f32 %v2342, %v2807
      %v2905 = vadd.f32 %v2343, %v2809
      %v2906 = vadd.f32 %v2344, %v2811
      %v2907 = vadd.f32 %v2345, %v2810
      %v2908 = vadd.f32 %v2346, %v2812
      %v2909 = vadd.f32 %v2347, %v2814
      %v2910 = vadd.f32 %v2348, %v2813
      %v2911 = vadd.f32 %v2349, %v2815
      %v2912 = vadd.f32 %v2350, %v2817
      %v2913 = vadd.f32 %v2351, %v2816
      %v2914 = vadd.f32 %v2352, %v2818
      %v2915 = vadd.f32 %v2353, %v2820
      %v2916 = vadd.f32 %v2354, %v2819
      %v2917 = vadd.f32 %v2355, %v2821
      %v2918 = vadd.f32 %v2356, %v2823
      %v2919 = vadd.f32 %v2357, %v2822
      %v2920 = vadd.f32 %v2358, %v2824
      %v2921 = vadd.f32 %v2359, %v2826
      %v2922 = vadd.f32 %v2360, %v2825
      %v2923 = vadd.f32 %v2361, %v2827
      %v2924 = vadd.f32 %v2362, %v2829
      %v2925 = vadd.f32 %v2363, %v2828
      %v2974 = vrot.slane %v2878, 1
      %v2975 = vrot.slane %v2879, 1
      %v2976 = vsel %vm1818, %v2974, %v2975
      %v2977 = vrot.slane %v2880, 1
      %v2978 = vsel %vm1818, %v2975, %v2977
      %v2979 = vrot.slane %v2881, 1
      %v2980 = vrot.slane %v2882, 1
      %v2981 = vsel %vm1818, %v2979, %v2980
      %v2982 = vrot.slane %v2883, 1
      %v2983 = vsel %vm1818, %v2980, %v2982
      %v2984 = vrot.slane %v2884, 1
      %v2985 = vrot.slane %v2885, 1
      %v2986 = vsel %vm1818, %v2984, %v2985
      %v2987 = vrot.slane %v2886, 1
      %v2988 = vsel %vm1818, %v2985, %v2987
      %v2989 = vrot.slane %v2887, 1
      %v2990 = vrot.slane %v2888, 1
      %v2991 = vsel %vm1818, %v2989, %v2990
      %v2992 = vrot.slane %v2889, 1
      %v2993 = vsel %vm1818, %v2990, %v2992
      %v2994 = vrot.slane %v2890, 1
      %v2995 = vrot.slane %v2891, 1
      %v2996 = vsel %vm1818, %v2994, %v2995
      %v2997 = vrot.slane %v2892, 1
      %v2998 = vsel %vm1818, %v2995, %v2997
      %v2999 = vrot.slane %v2893, 1
      %v3000 = vrot.slane %v2894, 1
      %v3001 = vsel %vm1818, %v2999, %v3000
      %v3002 = vrot.slane %v2895, 1
      %v3003 = vsel %vm1818, %v3000, %v3002
      %v3004 = vrot.slane %v2896, 1
      %v3005 = vrot.slane %v2897, 1
      %v3006 = vsel %vm1818, %v3004, %v3005
      %v3007 = vrot.slane %v2898, 1
      %v3008 = vsel %vm1818, %v3005, %v3007
      %v3009 = vrot.slane %v2899, 1
      %v3010 = vrot.slane %v2900, 1
      %v3011 = vsel %vm1818, %v3009, %v3010
      %v3012 = vrot.slane %v2901, 1
      %v3013 = vsel %vm1818, %v3010, %v3012
      %v3014 = vrot.slane %v2902, 1
      %v3015 = vrot.slane %v2903, 1
      %v3016 = vsel %vm1818, %v3014, %v3015
      %v3017 = vrot.slane %v2904, 1
      %v3018 = vsel %vm1818, %v3015, %v3017
      %v3019 = vrot.slane %v2905, 1
      %v3020 = vrot.slane %v2906, 1
      %v3021 = vsel %vm1818, %v3019, %v3020
      %v3022 = vrot.slane %v2907, 1
      %v3023 = vsel %vm1818, %v3020, %v3022
      %v3024 = vrot.slane %v2908, 1
      %v3025 = vrot.slane %v2909, 1
      %v3026 = vsel %vm1818, %v3024, %v3025
      %v3027 = vrot.slane %v2910, 1
      %v3028 = vsel %vm1818, %v3025, %v3027
      %v3029 = vrot.slane %v2911, 1
      %v3030 = vrot.slane %v2912, 1
      %v3031 = vsel %vm1818, %v3029, %v3030
      %v3032 = vrot.slane %v2913, 1
      %v3033 = vsel %vm1818, %v3030, %v3032
      %v3034 = vrot.slane %v2914, 1
      %v3035 = vrot.slane %v2915, 1
      %v3036 = vsel %vm1818, %v3034, %v3035
      %v3037 = vrot.slane %v2916, 1
      %v3038 = vsel %vm1818, %v3035, %v3037
      %v3039 = vrot.slane %v2917, 1
      %v3040 = vrot.slane %v2918, 1
      %v3041 = vsel %vm1818, %v3039, %v3040
      %v3042 = vrot.slane %v2919, 1
      %v3043 = vsel %vm1818, %v3040, %v3042
      %v3044 = vrot.slane %v2920, 1
      %v3045 = vrot.slane %v2921, 1
      %v3046 = vsel %vm1818, %v3044, %v3045
      %v3047 = vrot.slane %v2922, 1
      %v3048 = vsel %vm1818, %v3045, %v3047
      %v3049 = vrot.slane %v2923, 1
      %v3050 = vrot.slane %v2924, 1
      %v3051 = vsel %vm1818, %v3049, %v3050
      %v3052 = vrot.slane %v2925, 1
      %v3053 = vsel %vm1818, %v3050, %v3052
      %v3086 = vadd.f32 %v2717, %v2976
      %v3087 = vadd.f32 %v2718, %v2978
      %v3088 = vadd.f32 %v2719, %v2981
      %v3089 = vadd.f32 %v2720, %v2983
      %v3090 = vadd.f32 %v2721, %v2986
      %v3091 = vadd.f32 %v2722, %v2988
      %v3092 = vadd.f32 %v2723, %v2991
      %v3093 = vadd.f32 %v2724, %v2993
      %v3094 = vadd.f32 %v2725, %v2996
      %v3095 = vadd.f32 %v2726, %v2998
      %v3096 = vadd.f32 %v2727, %v3001
      %v3097 = vadd.f32 %v2728, %v3003
      %v3098 = vadd.f32 %v2729, %v3006
      %v3099 = vadd.f32 %v2730, %v3008
      %v3100 = vadd.f32 %v2731, %v3011
      %v3101 = vadd.f32 %v2732, %v3013
      %v3102 = vadd.f32 %v2733, %v3016
      %v3103 = vadd.f32 %v2734, %v3018
      %v3104 = vadd.f32 %v2735, %v3021
      %v3105 = vadd.f32 %v2736, %v3023
      %v3106 = vadd.f32 %v2737, %v3026
      %v3107 = vadd.f32 %v2738, %v3028
      %v3108 = vadd.f32 %v2739, %v3031
      %v3109 = vadd.f32 %v2740, %v3033
      %v3110 = vadd.f32 %v2741, %v3036
      %v3111 = vadd.f32 %v2742, %v3038
      %v3112 = vadd.f32 %v2743, %v3041
      %v3113 = vadd.f32 %v2744, %v3043
      %v3114 = vadd.f32 %v2745, %v3046
      %v3115 = vadd.f32 %v2746, %v3048
      %v3116 = vadd.f32 %v2747, %v3051
      %v3117 = vadd.f32 %v2748, %v3053
      %v3166 = vrot.slane %v1722, 2
      %v3167 = vrot.slane %v1723, 2
      %v3168 = vsel %vm2604, %v3166, %v3167
      %v3169 = vrot.slane %v1724, 2
      %v3170 = vsel %vm2604, %v3167, %v3169
      %v3171 = vrot.slane %v1725, 2
      %v3172 = vrot.slane %v1726, 2
      %v3173 = vsel %vm2604, %v3171, %v3172
      %v3174 = vrot.slane %v1727, 2
      %v3175 = vsel %vm2604, %v3172, %v3174
      %v3176 = vrot.slane %v1728, 2
      %v3177 = vrot.slane %v1729, 2
      %v3178 = vsel %vm2604, %v3176, %v3177
      %v3179 = vrot.slane %v1730, 2
      %v3180 = vsel %vm2604, %v3177, %v3179
      %v3181 = vrot.slane %v1731, 2
      %v3182 = vrot.slane %v1732, 2
      %v3183 = vsel %vm2604, %v3181, %v3182
      %v3184 = vrot.slane %v1733, 2
      %v3185 = vsel %vm2604, %v3182, %v3184
      %v3186 = vrot.slane %v1734, 2
      %v3187 = vrot.slane %v1735, 2
      %v3188 = vsel %vm2604, %v3186, %v3187
      %v3189 = vrot.slane %v1736, 2
      %v3190 = vsel %vm2604, %v3187, %v3189
      %v3191 = vrot.slane %v1737, 2
      %v3192 = vrot.slane %v1738, 2
      %v3193 = vsel %vm2604, %v3191, %v3192
      %v3194 = vrot.slane %v1739, 2
      %v3195 = vsel %vm2604, %v3192, %v3194
      %v3196 = vrot.slane %v1740, 2
      %v3197 = vrot.slane %v1741, 2
      %v3198 = vsel %vm2604, %v3196, %v3197
      %v3199 = vrot.slane %v1742, 2
      %v3200 = vsel %vm2604, %v3197, %v3199
      %v3201 = vrot.slane %v1743, 2
      %v3202 = vrot.slane %v1744, 2
      %v3203 = vsel %vm2604, %v3201, %v3202
      %v3204 = vrot.slane %v1745, 2
      %v3205 = vsel %vm2604, %v3202, %v3204
      %v3206 = vrot.slane %v1746, 2
      %v3207 = vrot.slane %v1747, 2
      %v3208 = vsel %vm2604, %v3206, %v3207
      %v3209 = vrot.slane %v1748, 2
      %v3210 = vsel %vm2604, %v3207, %v3209
      %v3211 = vrot.slane %v1749, 2
      %v3212 = vrot.slane %v1750, 2
      %v3213 = vsel %vm2604, %v3211, %v3212
      %v3214 = vrot.slane %v1751, 2
      %v3215 = vsel %vm2604, %v3212, %v3214
      %v3216 = vrot.slane %v1752, 2
      %v3217 = vrot.slane %v1753, 2
      %v3218 = vsel %vm2604, %v3216, %v3217
      %v3219 = vrot.slane %v1754, 2
      %v3220 = vsel %vm2604, %v3217, %v3219
      %v3221 = vrot.slane %v1755, 2
      %v3222 = vrot.slane %v1756, 2
      %v3223 = vsel %vm2604, %v3221, %v3222
      %v3224 = vrot.slane %v1757, 2
      %v3225 = vsel %vm2604, %v3222, %v3224
      %v3226 = vrot.slane %v1758, 2
      %v3227 = vrot.slane %v1759, 2
      %v3228 = vsel %vm2604, %v3226, %v3227
      %v3229 = vrot.slane %v1760, 2
      %v3230 = vsel %vm2604, %v3227, %v3229
      %v3231 = vrot.slane %v1761, 2
      %v3232 = vrot.slane %v1762, 2
      %v3233 = vsel %vm2604, %v3231, %v3232
      %v3234 = vrot.slane %v1763, 2
      %v3235 = vsel %vm2604, %v3232, %v3234
      %v3236 = vrot.slane %v1764, 2
      %v3237 = vrot.slane %v1765, 2
      %v3238 = vsel %vm2604, %v3236, %v3237
      %v3239 = vrot.slane %v1766, 2
      %v3240 = vsel %vm2604, %v3237, %v3239
      %v3241 = vrot.slane %v1767, 2
      %v3242 = vrot.slane %v1768, 2
      %v3243 = vsel %vm2604, %v3241, %v3242
      %v3244 = vrot.slane %v1769, 2
      %v3245 = vsel %vm2604, %v3242, %v3244
      %v3278 = vadd.f32 %v3086, %v3168
      %v3279 = vadd.f32 %v3087, %v3170
      %v3280 = vadd.f32 %v3088, %v3173
      %v3281 = vadd.f32 %v3089, %v3175
      %v3282 = vadd.f32 %v3090, %v3178
      %v3283 = vadd.f32 %v3091, %v3180
      %v3284 = vadd.f32 %v3092, %v3183
      %v3285 = vadd.f32 %v3093, %v3185
      %v3286 = vadd.f32 %v3094, %v3188
      %v3287 = vadd.f32 %v3095, %v3190
      %v3288 = vadd.f32 %v3096, %v3193
      %v3289 = vadd.f32 %v3097, %v3195
      %v3290 = vadd.f32 %v3098, %v3198
      %v3291 = vadd.f32 %v3099, %v3200
      %v3292 = vadd.f32 %v3100, %v3203
      %v3293 = vadd.f32 %v3101, %v3205
      %v3294 = vadd.f32 %v3102, %v3208
      %v3295 = vadd.f32 %v3103, %v3210
      %v3296 = vadd.f32 %v3104, %v3213
      %v3297 = vadd.f32 %v3105, %v3215
      %v3298 = vadd.f32 %v3106, %v3218
      %v3299 = vadd.f32 %v3107, %v3220
      %v3300 = vadd.f32 %v3108, %v3223
      %v3301 = vadd.f32 %v3109, %v3225
      %v3302 = vadd.f32 %v3110, %v3228
      %v3303 = vadd.f32 %v3111, %v3230
      %v3304 = vadd.f32 %v3112, %v3233
      %v3305 = vadd.f32 %v3113, %v3235
      %v3306 = vadd.f32 %v3114, %v3238
      %v3307 = vadd.f32 %v3115, %v3240
      %v3308 = vadd.f32 %v3116, %v3243
      %v3309 = vadd.f32 %v3117, %v3245
      %v3310 = vld [vmem:[%s387] sm:$0x1]
      %v3312 = vlaneseq
      %v3313 = vshrl.u32 %v3312, 7
      %v3314 = vsub.s32 0, %v3313
      %v3315 = vrot.slane %v3310, %v3314
      %v3317 = vadd.f32 %v3278, %v3315
      %v3318 = vadd.f32 %v3279, %v3315
      %v3319 = vadd.f32 %v3280, %v3315
      %v3320 = vadd.f32 %v3281, %v3315
      %v3321 = vadd.f32 %v3282, %v3315
      %v3322 = vadd.f32 %v3283, %v3315
      %v3323 = vadd.f32 %v3284, %v3315
      %v3324 = vadd.f32 %v3285, %v3315
      %v3325 = vadd.f32 %v3286, %v3315
      %v3326 = vadd.f32 %v3287, %v3315
      %v3327 = vadd.f32 %v3288, %v3315
      %v3328 = vadd.f32 %v3289, %v3315
      %v3329 = vadd.f32 %v3290, %v3315
      %v3330 = vadd.f32 %v3291, %v3315
      %v3331 = vadd.f32 %v3292, %v3315
      %v3332 = vadd.f32 %v3293, %v3315
      %v3333 = vadd.f32 %v3294, %v3315
      %v3334 = vadd.f32 %v3295, %v3315
      %v3335 = vadd.f32 %v3296, %v3315
      %v3336 = vadd.f32 %v3297, %v3315
      %v3337 = vadd.f32 %v3298, %v3315
      %v3338 = vadd.f32 %v3299, %v3315
      %v3339 = vadd.f32 %v3300, %v3315
      %v3340 = vadd.f32 %v3301, %v3315
      %v3341 = vadd.f32 %v3302, %v3315
      %v3342 = vadd.f32 %v3303, %v3315
      %v3343 = vadd.f32 %v3304, %v3315
      %v3344 = vadd.f32 %v3305, %v3315
      %v3345 = vadd.f32 %v3306, %v3315
      %v3346 = vadd.f32 %v3307, %v3315
      %v3347 = vadd.f32 %v3308, %v3315
      %v3348 = vadd.f32 %v3309, %v3315
      %v3349 = vmax.f32 %v3317, 0.0
      %v3350 = vmax.f32 %v3318, 0.0
      %v3351 = vmax.f32 %v3319, 0.0
      %v3352 = vmax.f32 %v3320, 0.0
      %v3353 = vmax.f32 %v3321, 0.0
      %v3354 = vmax.f32 %v3322, 0.0
      %v3355 = vmax.f32 %v3323, 0.0
      %v3356 = vmax.f32 %v3324, 0.0
      %v3357 = vmax.f32 %v3325, 0.0
      %v3358 = vmax.f32 %v3326, 0.0
      %v3359 = vmax.f32 %v3327, 0.0
      %v3360 = vmax.f32 %v3328, 0.0
      %v3361 = vmax.f32 %v3329, 0.0
      %v3362 = vmax.f32 %v3330, 0.0
      %v3363 = vmax.f32 %v3331, 0.0
      %v3364 = vmax.f32 %v3332, 0.0
      %v3365 = vmax.f32 %v3333, 0.0
      %v3366 = vmax.f32 %v3334, 0.0
      %v3367 = vmax.f32 %v3335, 0.0
      %v3368 = vmax.f32 %v3336, 0.0
      %v3369 = vmax.f32 %v3337, 0.0
      %v3370 = vmax.f32 %v3338, 0.0
      %v3371 = vmax.f32 %v3339, 0.0
      %v3372 = vmax.f32 %v3340, 0.0
      %v3373 = vmax.f32 %v3341, 0.0
      %v3374 = vmax.f32 %v3342, 0.0
      %v3375 = vmax.f32 %v3343, 0.0
      %v3376 = vmax.f32 %v3344, 0.0
      %v3377 = vmax.f32 %v3345, 0.0
      %v3378 = vmax.f32 %v3346, 0.0
      %v3379 = vmax.f32 %v3347, 0.0
      %v3380 = vmax.f32 %v3348, 0.0
      %v3381 = vmin.f32 %v3349, 6.0
      %v3382 = vmin.f32 %v3350, 6.0
      %v3383 = vmin.f32 %v3351, 6.0
      %v3384 = vmin.f32 %v3352, 6.0
      %v3385 = vmin.f32 %v3353, 6.0
      %v3386 = vmin.f32 %v3354, 6.0
      %v3387 = vmin.f32 %v3355, 6.0
      %v3388 = vmin.f32 %v3356, 6.0
      %v3389 = vmin.f32 %v3357, 6.0
      %v3390 = vmin.f32 %v3358, 6.0
      %v3391 = vmin.f32 %v3359, 6.0
      %v3392 = vmin.f32 %v3360, 6.0
      %v3393 = vmin.f32 %v3361, 6.0
      %v3394 = vmin.f32 %v3362, 6.0
      %v3395 = vmin.f32 %v3363, 6.0
      %v3396 = vmin.f32 %v3364, 6.0
      %v3397 = vmin.f32 %v3365, 6.0
      %v3398 = vmin.f32 %v3366, 6.0
      %v3399 = vmin.f32 %v3367, 6.0
      %v3400 = vmin.f32 %v3368, 6.0
      %v3401 = vmin.f32 %v3369, 6.0
      %v3402 = vmin.f32 %v3370, 6.0
      %v3403 = vmin.f32 %v3371, 6.0
      %v3404 = vmin.f32 %v3372, 6.0
      %v3405 = vmin.f32 %v3373, 6.0
      %v3406 = vmin.f32 %v3374, 6.0
      %v3407 = vmin.f32 %v3375, 6.0
      %v3408 = vmin.f32 %v3376, 6.0
      %v3409 = vmin.f32 %v3377, 6.0
      %v3410 = vmin.f32 %v3378, 6.0
      %v3411 = vmin.f32 %v3379, 6.0
      %v3412 = vmin.f32 %v3380, 6.0
      %v3413 = vpack.c.bf16 %v3382, %v3381
      %v3414 = vpack.c.bf16 %v3384, %v3383
      %v3415 = vpack.c.bf16 %v3386, %v3385
      %v3416 = vpack.c.bf16 %v3388, %v3387
      %v3417 = vpack.c.bf16 %v3390, %v3389
      %v3418 = vpack.c.bf16 %v3392, %v3391
      %v3419 = vpack.c.bf16 %v3394, %v3393
      %v3420 = vpack.c.bf16 %v3396, %v3395
      %v3421 = vpack.c.bf16 %v3398, %v3397
      %v3422 = vpack.c.bf16 %v3400, %v3399
      %v3423 = vpack.c.bf16 %v3402, %v3401
      %v3424 = vpack.c.bf16 %v3404, %v3403
      %v3425 = vpack.c.bf16 %v3406, %v3405
      %v3426 = vpack.c.bf16 %v3408, %v3407
      %v3427 = vpack.c.bf16 %v3410, %v3409
      %v3428 = vpack.c.bf16 %v3412, %v3411
      %v3429 = vld [vmem:[#allocation2] sm:$0xff]
      %v3430 = vld [vmem:[#allocation2 + $0x8] sm:$0xff]
      %v3431 = vld [vmem:[#allocation2 + $0x10] sm:$0xff]
      %v3432 = vld [vmem:[#allocation2 + $0x18] sm:$0xff]
      %v3433 = vld [vmem:[#allocation2 + $0x20] sm:$0xff]
      %v3434 = vld [vmem:[#allocation2 + $0x28] sm:$0xff]
      %v3435 = vld [vmem:[#allocation2 + $0x30] sm:$0xff]
      %v3436 = vld [vmem:[#allocation2 + $0x38] sm:$0xff]
      %v3437 = vld [vmem:[#allocation2 + $0x40] sm:$0xff]
      %v3438 = vld [vmem:[#allocation2 + $0x48] sm:$0xff]
      %v3439 = vld [vmem:[#allocation2 + $0x50] sm:$0xff]
      %v3440 = vld [vmem:[#allocation2 + $0x58] sm:$0xff]
      %v3441 = vld [vmem:[#allocation2 + $0x60] sm:$0xff]
      %v3442 = vld [vmem:[#allocation2 + $0x68] sm:$0xff]
      %v3443 = vld [vmem:[#allocation2 + $0x70] sm:$0xff]
      %v3444 = vld [vmem:[#allocation2 + $0x78] sm:$0xff]
      %v3445 = vld [vmem:[#allocation2 + $0x80] sm:$0xff]
      %v3446 = vld [vmem:[#allocation2 + $0x88] sm:$0xff]
      %v3447 = vld [vmem:[#allocation2 + $0x90] sm:$0xff]
      %v3448 = vld [vmem:[#allocation2 + $0x98] sm:$0xff]
      %v3449 = vld [vmem:[#allocation2 + $0xa0] sm:$0xff]
      %v3450 = vld [vmem:[#allocation2 + $0xa8] sm:$0xff]
      %v3451 = vld [vmem:[#allocation2 + $0xb0] sm:$0xff]
      %v3452 = vld [vmem:[#allocation2 + $0xb8] sm:$0xff]
      %v3453 = vld [vmem:[#allocation2 + $0xc0] sm:$0xff]
      %v3454 = vld [vmem:[#allocation2 + $0xc8] sm:$0xff]
      %v3455 = vld [vmem:[#allocation2 + $0xd0] sm:$0xff]
      %v3456 = vld [vmem:[#allocation2 + $0xd8] sm:$0xff]
      %v3457 = vld [vmem:[#allocation2 + $0xe0] sm:$0xff]
      %v3458 = vld [vmem:[#allocation2 + $0xe8] sm:$0xff]
      %v3459 = vld [vmem:[#allocation2 + $0xf0] sm:$0xff]
      %v3460 = vld [vmem:[#allocation2 + $0xf8] sm:$0xff]
      %v3461 = vld [vmem:[%s392] sm:$0xf]
      %v3462 = vld [vmem:[%s392 + $0x4] sm:$0xf]
      %v3463 = vld [vmem:[%s392 + $0x8] sm:$0xf]
      %v3464 = vld [vmem:[%s392 + $0xc] sm:$0xf]
      %v3465 = vld [vmem:[%s392 + $0x10] sm:$0xf]
      %v3466 = vld [vmem:[%s392 + $0x14] sm:$0xf]
      %v3467 = vld [vmem:[%s392 + $0x18] sm:$0xf]
      %v3468 = vld [vmem:[%s392 + $0x1c] sm:$0xf]
      %v3469 = vld [vmem:[%s392 + $0x20] sm:$0xf]
      %v3470 = vld [vmem:[%s392 + $0x24] sm:$0xf]
      %v3471 = vld [vmem:[%s392 + $0x28] sm:$0xf]
      %v3472 = vld [vmem:[%s392 + $0x2c] sm:$0xf]
      %v3473 = vld [vmem:[%s392 + $0x30] sm:$0xf]
      %v3474 = vld [vmem:[%s392 + $0x34] sm:$0xf]
      %v3475 = vld [vmem:[%s392 + $0x38] sm:$0xf]
      %v3476 = vld [vmem:[%s392 + $0x3c] sm:$0xf]
      %v3493 = vunpack.c.l.b16 %v3461
      %v3494 = vunpack.c.l.b16 %v3462
      %v3495 = vunpack.c.l.b16 %v3463
      %v3496 = vunpack.c.l.b16 %v3464
      %v3497 = vunpack.c.l.b16 %v3465
      %v3498 = vunpack.c.l.b16 %v3466
      %v3499 = vunpack.c.l.b16 %v3467
      %v3500 = vunpack.c.l.b16 %v3468
      %v3501 = vunpack.c.l.b16 %v3469
      %v3502 = vunpack.c.l.b16 %v3470
      %v3503 = vunpack.c.l.b16 %v3471
      %v3504 = vunpack.c.l.b16 %v3472
      %v3505 = vunpack.c.l.b16 %v3473
      %v3506 = vunpack.c.l.b16 %v3474
      %v3507 = vunpack.c.l.b16 %v3475
      %v3508 = vunpack.c.l.b16 %v3476
      %v3509 = vpack.c.b16 %v3494, %v3493
      %v3510 = vpack.c.b16 %v3496, %v3495
      %v3511 = vpack.c.b16 %v3498, %v3497
      %v3512 = vpack.c.b16 %v3500, %v3499
      %v3513 = vpack.c.b16 %v3502, %v3501
      %v3514 = vpack.c.b16 %v3504, %v3503
      %v3515 = vpack.c.b16 %v3506, %v3505
      %v3516 = vpack.c.b16 %v3508, %v3507
      %3525 = vmatprep.subr.bf16.mxu0 0
      %3526 = vmatpush1.bf16.msra.mxu0 %v3516
      %3527 = vmatprep.subr.bf16.mxu0 0
      %3528 = vmatpush1.bf16.msra.mxu0 %v3515
      %3529 = vmatprep.subr.bf16.mxu0 0
      %3530 = vmatpush1.bf16.msra.mxu0 %v3514
      %3531 = vmatprep.subr.bf16.mxu0 0
      %3532 = vmatpush1.bf16.msra.mxu0 %v3513
      %3533 = vmatprep.subr.bf16.mxu0 0
      %3534 = vmatpush1.bf16.msra.mxu0 %v3512
      %3535 = vmatprep.subr.bf16.mxu0 0
      %3536 = vmatpush1.bf16.msra.mxu0 %v3511
      %3537 = vmatprep.subr.bf16.mxu0 0
      %3538 = vmatpush1.bf16.msra.mxu0 %v3510
      %3539 = vmatprep.subr.bf16.mxu0 0
      %3540 = vmatpush1.bf16.msra.mxu0 %v3509
      %3541 = vmatprep.subr.bf16.mxu0 0
      %3542 = vmatpush2.bf16.msra.mxu0 0
      %3543 = vmatprep.subr.bf16.mxu0 0
      %3544 = vmatpush2.bf16.msra.mxu0 0
      %3545 = vmatprep.subr.bf16.mxu0 0
      %3546 = vmatpush2.bf16.msra.mxu0 0
      %3547 = vmatprep.subr.bf16.mxu0 0
      %3548 = vmatpush2.bf16.msra.mxu0 0
      %3549 = vmatprep.subr.bf16.mxu0 0
      %3550 = vmatpush2.bf16.msra.mxu0 0
      %3551 = vmatprep.subr.bf16.mxu0 0
      %3552 = vmatpush2.bf16.msra.mxu0 0
      %3553 = vmatprep.subr.bf16.mxu0 0
      %3554 = vmatpush2.bf16.msra.mxu0 0
      %3555 = vmatprep.subr.bf16.mxu0 0
      %3556 = vmatpush2.bf16.msra.mxu0 0
      %3557 = vmatprep.mubr.bf16.mxu0 0
      %3558 = vmatmul.mubr.bf16.gmra.mxu0 %v3413
      %v3559 = vpop.f32.mrf.mxu0
      %v3560 = vadd.f32 0.0, %v3559
      %v3561 = vpop.f32.mrf.mxu0
      %v3562 = vpop.f32.mrf.mxu0
      %v3563 = vadd.f32 0.0, %v3562
      %v3564 = vpop.f32.mrf.mxu0
      %3565 = vmatprep.mubr.bf16.mxu0 0
      %3566 = vmatmul.mubr.bf16.gmra.mxu0 %v3414
      %v3567 = vpop.f32.mrf.mxu0
      %v3568 = vadd.f32 0.0, %v3567
      %v3569 = vpop.f32.mrf.mxu0
      %v3570 = vpop.f32.mrf.mxu0
      %v3571 = vadd.f32 0.0, %v3570
      %v3572 = vpop.f32.mrf.mxu0
      %3573 = vmatprep.mubr.bf16.mxu0 0
      %3574 = vmatmul.mubr.bf16.gmra.mxu0 %v3415
      %v3575 = vpop.f32.mrf.mxu0
      %v3576 = vadd.f32 0.0, %v3575
      %v3577 = vpop.f32.mrf.mxu0
      %v3578 = vpop.f32.mrf.mxu0
      %v3579 = vadd.f32 0.0, %v3578
      %v3580 = vpop.f32.mrf.mxu0
      %3581 = vmatprep.mubr.bf16.mxu0 0
      %3582 = vmatmul.mubr.bf16.gmra.mxu0 %v3416
      %v3583 = vpop.f32.mrf.mxu0
      %v3584 = vadd.f32 0.0, %v3583
      %v3585 = vpop.f32.mrf.mxu0
      %v3586 = vpop.f32.mrf.mxu0
      %v3587 = vadd.f32 0.0, %v3586
      %v3588 = vpop.f32.mrf.mxu0
      %3589 = vmatprep.mubr.bf16.mxu0 0
      %3590 = vmatmul.mubr.bf16.gmra.mxu0 %v3417
      %v3591 = vpop.f32.mrf.mxu0
      %v3592 = vadd.f32 0.0, %v3591
      %v3593 = vpop.f32.mrf.mxu0
      %v3594 = vpop.f32.mrf.mxu0
      %v3595 = vadd.f32 0.0, %v3594
      %v3596 = vpop.f32.mrf.mxu0
      %3597 = vmatprep.mubr.bf16.mxu0 0
      %3598 = vmatmul.mubr.bf16.gmra.mxu0 %v3418
      %v3599 = vpop.f32.mrf.mxu0
      %v3600 = vadd.f32 0.0, %v3599
      %v3601 = vpop.f32.mrf.mxu0
      %v3602 = vpop.f32.mrf.mxu0
      %v3603 = vadd.f32 0.0, %v3602
      %v3604 = vpop.f32.mrf.mxu0
      %3605 = vmatprep.mubr.bf16.mxu0 0
      %3606 = vmatmul.mubr.bf16.gmra.mxu0 %v3419
      %v3607 = vpop.f32.mrf.mxu0
      %v3608 = vadd.f32 0.0, %v3607
      %v3609 = vpop.f32.mrf.mxu0
      %v3610 = vpop.f32.mrf.mxu0
      %v3611 = vadd.f32 0.0, %v3610
      %v3612 = vpop.f32.mrf.mxu0
      %3613 = vmatprep.mubr.bf16.mxu0 0
      %3614 = vmatmul.mubr.bf16.gmra.mxu0 %v3420
      %v3615 = vpop.f32.mrf.mxu0
      %v3616 = vadd.f32 0.0, %v3615
      %v3617 = vpop.f32.mrf.mxu0
      %v3618 = vpop.f32.mrf.mxu0
      %v3619 = vadd.f32 0.0, %v3618
      %v3620 = vpop.f32.mrf.mxu0
      %3621 = vmatprep.mubr.bf16.mxu0 0
      %3622 = vmatmul.mubr.bf16.gmra.mxu0 %v3421
      %v3623 = vpop.f32.mrf.mxu0
      %v3624 = vadd.f32 0.0, %v3623
      %v3625 = vpop.f32.mrf.mxu0
      %v3626 = vpop.f32.mrf.mxu0
      %v3627 = vadd.f32 0.0, %v3626
      %v3628 = vpop.f32.mrf.mxu0
      %3629 = vmatprep.mubr.bf16.mxu0 0
      %3630 = vmatmul.mubr.bf16.gmra.mxu0 %v3422
      %v3631 = vpop.f32.mrf.mxu0
      %v3632 = vadd.f32 0.0, %v3631
      %v3633 = vpop.f32.mrf.mxu0
      %v3634 = vpop.f32.mrf.mxu0
      %v3635 = vadd.f32 0.0, %v3634
      %v3636 = vpop.f32.mrf.mxu0
      %3637 = vmatprep.mubr.bf16.mxu0 0
      %3638 = vmatmul.mubr.bf16.gmra.mxu0 %v3423
      %v3639 = vpop.f32.mrf.mxu0
      %v3640 = vadd.f32 0.0, %v3639
      %v3641 = vpop.f32.mrf.mxu0
      %v3642 = vpop.f32.mrf.mxu0
      %v3643 = vadd.f32 0.0, %v3642
      %v3644 = vpop.f32.mrf.mxu0
      %3645 = vmatprep.mubr.bf16.mxu0 0
      %3646 = vmatmul.mubr.bf16.gmra.mxu0 %v3424
      %v3647 = vpop.f32.mrf.mxu0
      %v3648 = vadd.f32 0.0, %v3647
      %v3649 = vpop.f32.mrf.mxu0
      %v3650 = vpop.f32.mrf.mxu0
      %v3651 = vadd.f32 0.0, %v3650
      %v3652 = vpop.f32.mrf.mxu0
      %3653 = vmatprep.mubr.bf16.mxu0 0
      %3654 = vmatmul.mubr.bf16.gmra.mxu0 %v3425
      %v3655 = vpop.f32.mrf.mxu0
      %v3656 = vadd.f32 0.0, %v3655
      %v3657 = vpop.f32.mrf.mxu0
      %v3658 = vpop.f32.mrf.mxu0
      %v3659 = vadd.f32 0.0, %v3658
      %v3660 = vpop.f32.mrf.mxu0
      %3661 = vmatprep.mubr.bf16.mxu0 0
      %3662 = vmatmul.mubr.bf16.gmra.mxu0 %v3426
      %v3663 = vpop.f32.mrf.mxu0
      %v3664 = vadd.f32 0.0, %v3663
      %v3665 = vpop.f32.mrf.mxu0
      %v3666 = vpop.f32.mrf.mxu0
      %v3667 = vadd.f32 0.0, %v3666
      %v3668 = vpop.f32.mrf.mxu0
      %3669 = vmatprep.mubr.bf16.mxu0 0
      %3670 = vmatmul.mubr.bf16.gmra.mxu0 %v3427
      %v3671 = vpop.f32.mrf.mxu0
      %v3672 = vadd.f32 0.0, %v3671
      %v3673 = vpop.f32.mrf.mxu0
      %v3674 = vpop.f32.mrf.mxu0
      %v3675 = vadd.f32 0.0, %v3674
      %v3676 = vpop.f32.mrf.mxu0
      %3677 = vmatprep.mubr.bf16.mxu0 0
      %3678 = vmatmul.mubr.bf16.gmra.mxu0 %v3428
      %v3679 = vpop.f32.mrf.mxu0
      %v3680 = vadd.f32 0.0, %v3679
      %v3681 = vpop.f32.mrf.mxu0
      %v3682 = vpop.f32.mrf.mxu0
      %v3683 = vadd.f32 0.0, %v3682
      %v3684 = vpop.f32.mrf.mxu0
      %3685 = vdwg.mxu0
      %v3686 = vadd.f32 %v3429, %v3560
      %v3687 = vadd.f32 %v3430, %v3563
      %v3688 = vadd.f32 %v3431, %v3568
      %v3689 = vadd.f32 %v3432, %v3571
      %v3690 = vadd.f32 %v3433, %v3576
      %v3691 = vadd.f32 %v3434, %v3579
      %v3692 = vadd.f32 %v3435, %v3584
      %v3693 = vadd.f32 %v3436, %v3587
      %v3694 = vadd.f32 %v3437, %v3592
      %v3695 = vadd.f32 %v3438, %v3595
      %v3696 = vadd.f32 %v3439, %v3600
      %v3697 = vadd.f32 %v3440, %v3603
      %v3698 = vadd.f32 %v3441, %v3608
      %v3699 = vadd.f32 %v3442, %v3611
      %v3700 = vadd.f32 %v3443, %v3616
      %v3701 = vadd.f32 %v3444, %v3619
      %v3702 = vadd.f32 %v3445, %v3624
      %v3703 = vadd.f32 %v3446, %v3627
      %v3704 = vadd.f32 %v3447, %v3632
      %v3705 = vadd.f32 %v3448, %v3635
      %v3706 = vadd.f32 %v3449, %v3640
      %v3707 = vadd.f32 %v3450, %v3643
      %v3708 = vadd.f32 %v3451, %v3648
      %v3709 = vadd.f32 %v3452, %v3651
      %v3710 = vadd.f32 %v3453, %v3656
      %v3711 = vadd.f32 %v3454, %v3659
      %v3712 = vadd.f32 %v3455, %v3664
      %v3713 = vadd.f32 %v3456, %v3667
      %v3714 = vadd.f32 %v3457, %v3672
      %v3715 = vadd.f32 %v3458, %v3675
      %v3716 = vadd.f32 %v3459, %v3680
      %v3717 = vadd.f32 %v3460, %v3683
      %3718 = vst [vmem:[#allocation2] sm:$0xff] %v3686
      %3719 = vst [vmem:[#allocation2 + $0x8] sm:$0xff] %v3687
      %3720 = vst [vmem:[#allocation2 + $0x10] sm:$0xff] %v3688
      %3721 = vst [vmem:[#allocation2 + $0x18] sm:$0xff] %v3689
      %3722 = vst [vmem:[#allocation2 + $0x20] sm:$0xff] %v3690
      %3723 = vst [vmem:[#allocation2 + $0x28] sm:$0xff] %v3691
      %3724 = vst [vmem:[#allocation2 + $0x30] sm:$0xff] %v3692
      %3725 = vst [vmem:[#allocation2 + $0x38] sm:$0xff] %v3693
      %3726 = vst [vmem:[#allocation2 + $0x40] sm:$0xff] %v3694
      %3727 = vst [vmem:[#allocation2 + $0x48] sm:$0xff] %v3695
      %3728 = vst [vmem:[#allocation2 + $0x50] sm:$0xff] %v3696
      %3729 = vst [vmem:[#allocation2 + $0x58] sm:$0xff] %v3697
      %3730 = vst [vmem:[#allocation2 + $0x60] sm:$0xff] %v3698
      %3731 = vst [vmem:[#allocation2 + $0x68] sm:$0xff] %v3699
      %3732 = vst [vmem:[#allocation2 + $0x70] sm:$0xff] %v3700
      %3733 = vst [vmem:[#allocation2 + $0x78] sm:$0xff] %v3701
      %3734 = vst [vmem:[#allocation2 + $0x80] sm:$0xff] %v3702
      %3735 = vst [vmem:[#allocation2 + $0x88] sm:$0xff] %v3703
      %3736 = vst [vmem:[#allocation2 + $0x90] sm:$0xff] %v3704
      %3737 = vst [vmem:[#allocation2 + $0x98] sm:$0xff] %v3705
      %3738 = vst [vmem:[#allocation2 + $0xa0] sm:$0xff] %v3706
      %3739 = vst [vmem:[#allocation2 + $0xa8] sm:$0xff] %v3707
      %3740 = vst [vmem:[#allocation2 + $0xb0] sm:$0xff] %v3708
      %3741 = vst [vmem:[#allocation2 + $0xb8] sm:$0xff] %v3709
      %3742 = vst [vmem:[#allocation2 + $0xc0] sm:$0xff] %v3710
      %3743 = vst [vmem:[#allocation2 + $0xc8] sm:$0xff] %v3711
      %3744 = vst [vmem:[#allocation2 + $0xd0] sm:$0xff] %v3712
      %3745 = vst [vmem:[#allocation2 + $0xd8] sm:$0xff] %v3713
      %3746 = vst [vmem:[#allocation2 + $0xe0] sm:$0xff] %v3714
      %3747 = vst [vmem:[#allocation2 + $0xe8] sm:$0xff] %v3715
      %3748 = vst [vmem:[#allocation2 + $0xf0] sm:$0xff] %v3716
      %3749 = vst [vmem:[#allocation2 + $0xf8] sm:$0xff] %v3717
      // Predicated region
      $region57: #{inverted_residual_forward.1} parent=51 // pred_check
        %p3750 = pneg %p400
      $region58: #{inverted_residual_forward.1} parent=51 // pred_check_branch
        %3752 = sbr.rel (%p3750) target = $region60
      $region59: #{inverted_residual_forward.1} parent=51 // pred_region
        %v3753 = vld [vmem:[#allocation2] sm:$0xff]
        %v3754 = vld [vmem:[#allocation2 + $0x8] sm:$0xff]
        %v3755 = vld [vmem:[#allocation2 + $0x10] sm:$0xff]
        %v3756 = vld [vmem:[#allocation2 + $0x18] sm:$0xff]
        %v3757 = vld [vmem:[#allocation2 + $0x20] sm:$0xff]
        %v3758 = vld [vmem:[#allocation2 + $0x28] sm:$0xff]
        %v3759 = vld [vmem:[#allocation2 + $0x30] sm:$0xff]
        %v3760 = vld [vmem:[#allocation2 + $0x38] sm:$0xff]
        %v3761 = vld [vmem:[#allocation2 + $0x40] sm:$0xff]
        %v3762 = vld [vmem:[#allocation2 + $0x48] sm:$0xff]
        %v3763 = vld [vmem:[#allocation2 + $0x50] sm:$0xff]
        %v3764 = vld [vmem:[#allocation2 + $0x58] sm:$0xff]
        %v3765 = vld [vmem:[#allocation2 + $0x60] sm:$0xff]
        %v3766 = vld [vmem:[#allocation2 + $0x68] sm:$0xff]
        %v3767 = vld [vmem:[#allocation2 + $0x70] sm:$0xff]
        %v3768 = vld [vmem:[#allocation2 + $0x78] sm:$0xff]
        %v3769 = vld [vmem:[#allocation2 + $0x80] sm:$0xff]
        %v3770 = vld [vmem:[#allocation2 + $0x88] sm:$0xff]
        %v3771 = vld [vmem:[#allocation2 + $0x90] sm:$0xff]
        %v3772 = vld [vmem:[#allocation2 + $0x98] sm:$0xff]
        %v3773 = vld [vmem:[#allocation2 + $0xa0] sm:$0xff]
        %v3774 = vld [vmem:[#allocation2 + $0xa8] sm:$0xff]
        %v3775 = vld [vmem:[#allocation2 + $0xb0] sm:$0xff]
        %v3776 = vld [vmem:[#allocation2 + $0xb8] sm:$0xff]
        %v3777 = vld [vmem:[#allocation2 + $0xc0] sm:$0xff]
        %v3778 = vld [vmem:[#allocation2 + $0xc8] sm:$0xff]
        %v3779 = vld [vmem:[#allocation2 + $0xd0] sm:$0xff]
        %v3780 = vld [vmem:[#allocation2 + $0xd8] sm:$0xff]
        %v3781 = vld [vmem:[#allocation2 + $0xe0] sm:$0xff]
        %v3782 = vld [vmem:[#allocation2 + $0xe8] sm:$0xff]
        %v3783 = vld [vmem:[#allocation2 + $0xf0] sm:$0xff]
        %v3784 = vld [vmem:[#allocation2 + $0xf8] sm:$0xff]
        %v3785 = vld [vmem:[%s7] sm:$0x1]
        %v3787 = vlaneseq
        %v3788 = vshrl.u32 %v3787, 7
        %v3789 = vsub.s32 0, %v3788
        %v3790 = vrot.slane %v3785, %v3789
        %v3792 = vadd.f32 %v3753, %v3790
        %v3793 = vadd.f32 %v3754, %v3790
        %v3794 = vadd.f32 %v3755, %v3790
        %v3795 = vadd.f32 %v3756, %v3790
        %v3796 = vadd.f32 %v3757, %v3790
        %v3797 = vadd.f32 %v3758, %v3790
        %v3798 = vadd.f32 %v3759, %v3790
        %v3799 = vadd.f32 %v3760, %v3790
        %v3800 = vadd.f32 %v3761, %v3790
        %v3801 = vadd.f32 %v3762, %v3790
        %v3802 = vadd.f32 %v3763, %v3790
        %v3803 = vadd.f32 %v3764, %v3790
        %v3804 = vadd.f32 %v3765, %v3790
        %v3805 = vadd.f32 %v3766, %v3790
        %v3806 = vadd.f32 %v3767, %v3790
        %v3807 = vadd.f32 %v3768, %v3790
        %v3808 = vadd.f32 %v3769, %v3790
        %v3809 = vadd.f32 %v3770, %v3790
        %v3810 = vadd.f32 %v3771, %v3790
        %v3811 = vadd.f32 %v3772, %v3790
        %v3812 = vadd.f32 %v3773, %v3790
        %v3813 = vadd.f32 %v3774, %v3790
        %v3814 = vadd.f32 %v3775, %v3790
        %v3815 = vadd.f32 %v3776, %v3790
        %v3816 = vadd.f32 %v3777, %v3790
        %v3817 = vadd.f32 %v3778, %v3790
        %v3818 = vadd.f32 %v3779, %v3790
        %v3819 = vadd.f32 %v3780, %v3790
        %v3820 = vadd.f32 %v3781, %v3790
        %v3821 = vadd.f32 %v3782, %v3790
        %v3822 = vadd.f32 %v3783, %v3790
        %v3823 = vadd.f32 %v3784, %v3790
        %v3872 = vrot.slane %v439, 1
        %v3873 = vrot.slane %v440, 1
        %v3874 = vsel %vm1818, %v3872, %v3873
        %v3875 = vrot.slane %v441, 1
        %v3876 = vsel %vm1818, %v3873, %v3875
        %v3877 = vrot.slane %v442, 1
        %v3878 = vrot.slane %v443, 1
        %v3879 = vsel %vm1818, %v3877, %v3878
        %v3880 = vrot.slane %v444, 1
        %v3881 = vsel %vm1818, %v3878, %v3880
        %v3882 = vrot.slane %v445, 1
        %v3883 = vrot.slane %v446, 1
        %v3884 = vsel %vm1818, %v3882, %v3883
        %v3885 = vrot.slane %v447, 1
        %v3886 = vsel %vm1818, %v3883, %v3885
        %v3887 = vrot.slane %v448, 1
        %v3888 = vrot.slane %v449, 1
        %v3889 = vsel %vm1818, %v3887, %v3888
        %v3890 = vrot.slane %v450, 1
        %v3891 = vsel %vm1818, %v3888, %v3890
        %v3892 = vrot.slane %v451, 1
        %v3893 = vrot.slane %v452, 1
        %v3894 = vsel %vm1818, %v3892, %v3893
        %v3895 = vrot.slane %v453, 1
        %v3896 = vsel %vm1818, %v3893, %v3895
        %v3897 = vrot.slane %v454, 1
        %v3898 = vrot.slane %v455, 1
        %v3899 = vsel %vm1818, %v3897, %v3898
        %v3900 = vrot.slane %v456, 1
        %v3901 = vsel %vm1818, %v3898, %v3900
        %v3902 = vrot.slane %v457, 1
        %v3903 = vrot.slane %v458, 1
        %v3904 = vsel %vm1818, %v3902, %v3903
        %v3905 = vrot.slane %v459, 1
        %v3906 = vsel %vm1818, %v3903, %v3905
        %v3907 = vrot.slane %v460, 1
        %v3908 = vrot.slane %v461, 1
        %v3909 = vsel %vm1818, %v3907, %v3908
        %v3910 = vrot.slane %v462, 1
        %v3911 = vsel %vm1818, %v3908, %v3910
        %v3912 = vrot.slane %v463, 1
        %v3913 = vrot.slane %v464, 1
        %v3914 = vsel %vm1818, %v3912, %v3913
        %v3915 = vrot.slane %v465, 1
        %v3916 = vsel %vm1818, %v3913, %v3915
        %v3917 = vrot.slane %v466, 1
        %v3918 = vrot.slane %v467, 1
        %v3919 = vsel %vm1818, %v3917, %v3918
        %v3920 = vrot.slane %v468, 1
        %v3921 = vsel %vm1818, %v3918, %v3920
        %v3922 = vrot.slane %v469, 1
        %v3923 = vrot.slane %v470, 1
        %v3924 = vsel %vm1818, %v3922, %v3923
        %v3925 = vrot.slane %v471, 1
        %v3926 = vsel %vm1818, %v3923, %v3925
        %v3927 = vrot.slane %v472, 1
        %v3928 = vrot.slane %v473, 1
        %v3929 = vsel %vm1818, %v3927, %v3928
        %v3930 = vrot.slane %v474, 1
        %v3931 = vsel %vm1818, %v3928, %v3930
        %v3932 = vrot.slane %v475, 1
        %v3933 = vrot.slane %v476, 1
        %v3934 = vsel %vm1818, %v3932, %v3933
        %v3935 = vrot.slane %v477, 1
        %v3936 = vsel %vm1818, %v3933, %v3935
        %v3937 = vrot.slane %v478, 1
        %v3938 = vrot.slane %v479, 1
        %v3939 = vsel %vm1818, %v3937, %v3938
        %v3940 = vrot.slane %v480, 1
        %v3941 = vsel %vm1818, %v3938, %v3940
        %v3942 = vrot.slane %v481, 1
        %v3943 = vrot.slane %v482, 1
        %v3944 = vsel %vm1818, %v3942, %v3943
        %v3945 = vrot.slane %v483, 1
        %v3946 = vsel %vm1818, %v3943, %v3945
        %v3947 = vrot.slane %v484, 1
        %v3948 = vrot.slane %v485, 1
        %v3949 = vsel %vm1818, %v3947, %v3948
        %v3950 = vrot.slane %v486, 1
        %v3951 = vsel %vm1818, %v3948, %v3950
        %v3984 = vadd.f32 %v3792, %v3874
        %v3985 = vadd.f32 %v3793, %v3876
        %v3986 = vadd.f32 %v3794, %v3879
        %v3987 = vadd.f32 %v3795, %v3881
        %v3988 = vadd.f32 %v3796, %v3884
        %v3989 = vadd.f32 %v3797, %v3886
        %v3990 = vadd.f32 %v3798, %v3889
        %v3991 = vadd.f32 %v3799, %v3891
        %v3992 = vadd.f32 %v3800, %v3894
        %v3993 = vadd.f32 %v3801, %v3896
        %v3994 = vadd.f32 %v3802, %v3899
        %v3995 = vadd.f32 %v3803, %v3901
        %v3996 = vadd.f32 %v3804, %v3904
        %v3997 = vadd.f32 %v3805, %v3906
        %v3998 = vadd.f32 %v3806, %v3909
        %v3999 = vadd.f32 %v3807, %v3911
        %v4000 = vadd.f32 %v3808, %v3914
        %v4001 = vadd.f32 %v3809, %v3916
        %v4002 = vadd.f32 %v3810, %v3919
        %v4003 = vadd.f32 %v3811, %v3921
        %v4004 = vadd.f32 %v3812, %v3924
        %v4005 = vadd.f32 %v3813, %v3926
        %v4006 = vadd.f32 %v3814, %v3929
        %v4007 = vadd.f32 %v3815, %v3931
        %v4008 = vadd.f32 %v3816, %v3934
        %v4009 = vadd.f32 %v3817, %v3936
        %v4010 = vadd.f32 %v3818, %v3939
        %v4011 = vadd.f32 %v3819, %v3941
        %v4012 = vadd.f32 %v3820, %v3944
        %v4013 = vadd.f32 %v3821, %v3946
        %v4014 = vadd.f32 %v3822, %v3949
        %v4015 = vadd.f32 %v3823, %v3951
        %4016 = vst [vmem:[%s398] sm:$0xff] %v3984
        %4017 = vst [vmem:[%s398 + $0x8] sm:$0xff] %v3985
        %4018 = vst [vmem:[%s398 + $0x10] sm:$0xff] %v3986
        %4019 = vst [vmem:[%s398 + $0x18] sm:$0xff] %v3987
        %4020 = vst [vmem:[%s398 + $0x20] sm:$0xff] %v3988
        %4021 = vst [vmem:[%s398 + $0x28] sm:$0xff] %v3989
        %4022 = vst [vmem:[%s398 + $0x30] sm:$0xff] %v3990
        %4023 = vst [vmem:[%s398 + $0x38] sm:$0xff] %v3991
        %4024 = vst [vmem:[%s398 + $0x40] sm:$0xff] %v3992
        %4025 = vst [vmem:[%s398 + $0x48] sm:$0xff] %v3993
        %4026 = vst [vmem:[%s398 + $0x50] sm:$0xff] %v3994
        %4027 = vst [vmem:[%s398 + $0x58] sm:$0xff] %v3995
        %4028 = vst [vmem:[%s398 + $0x60] sm:$0xff] %v3996
        %4029 = vst [vmem:[%s398 + $0x68] sm:$0xff] %v3997
        %4030 = vst [vmem:[%s398 + $0x70] sm:$0xff] %v3998
        %4031 = vst [vmem:[%s398 + $0x78] sm:$0xff] %v3999
        %4032 = vst [vmem:[%s398 + $0x80] sm:$0xff] %v4000
        %4033 = vst [vmem:[%s398 + $0x88] sm:$0xff] %v4001
        %4034 = vst [vmem:[%s398 + $0x90] sm:$0xff] %v4002
        %4035 = vst [vmem:[%s398 + $0x98] sm:$0xff] %v4003
        %4036 = vst [vmem:[%s398 + $0xa0] sm:$0xff] %v4004
        %4037 = vst [vmem:[%s398 + $0xa8] sm:$0xff] %v4005
        %4038 = vst [vmem:[%s398 + $0xb0] sm:$0xff] %v4006
        %4039 = vst [vmem:[%s398 + $0xb8] sm:$0xff] %v4007
        %4040 = vst [vmem:[%s398 + $0xc0] sm:$0xff] %v4008
        %4041 = vst [vmem:[%s398 + $0xc8] sm:$0xff] %v4009
        %4042 = vst [vmem:[%s398 + $0xd0] sm:$0xff] %v4010
        %4043 = vst [vmem:[%s398 + $0xd8] sm:$0xff] %v4011
        %4044 = vst [vmem:[%s398 + $0xe0] sm:$0xff] %v4012
        %4045 = vst [vmem:[%s398 + $0xe8] sm:$0xff] %v4013
        %4046 = vst [vmem:[%s398 + $0xf0] sm:$0xff] %v4014
        %4047 = vst [vmem:[%s398 + $0xf8] sm:$0xff] %v4015
      $region60: #{inverted_residual_forward.1} parent=51 // pred_fallthru
        _
      %p4048 = scmp.lt.s32.totalorder %s23, 1
      %s4049 = scalar_select %p4048, %s23, 1
      %s4050 = smul.addr %s4049, 32
      %s4051 = smul.addr %s4050, 8
      %s4052 = scalar_lea.vmem %s8, %s4051
      // Predicated region
      $region61: #{inverted_residual_forward.1} parent=51 // pred_check
        %p4053 = pneg %p247
      $region62: #{inverted_residual_forward.1} parent=51 // pred_check_branch
        %4055 = sbr.rel (%p4053) target = $region64
      $region63: #{inverted_residual_forward.1} parent=51 // pred_region
        _
      $region64: #{inverted_residual_forward.1} parent=51 // pred_fallthru
        _
    $region52: #{inverted_residual_forward.1} parent=5 // pred_fallthru
      _
    %p4056 = scmp.le.s32.totalorder 2, %s14
    // Predicated region
    $region65: #{inverted_residual_forward.1} parent=5 // pred_check
      %p4057 = pneg %p4056
    $region66: #{inverted_residual_forward.1} parent=5 // pred_check_branch
      %4059 = sbr.rel (%p4057) target = $region68
    $region67: #{inverted_residual_forward.1} parent=5 // pred_region
      %s4060 = ssub.s32 %s14, 2
      // Predicated region
      $region69: #{inverted_residual_forward.1} parent=67 // pred_check
        %p4061 = pneg %p253
      $region70: #{inverted_residual_forward.1} parent=67 // pred_check_branch
        %4063 = sbr.rel (%p4061) target = $region72
      $region71: #{inverted_residual_forward.1} parent=67 // pred_region
        %p4064 = scmp.lt.s32.totalorder %s25, 1
        %s4065 = scalar_select %p4064, %s25, 1
        %s4066 = smul.addr %s4065, 32
        %s4067 = smul.addr %s4066, 8
        %s4068 = scalar_lea.vmem %s8, %s4067
      $region72: #{inverted_residual_forward.1} parent=67 // pred_fallthru
        _
    $region68: #{inverted_residual_forward.1} parent=5 // pred_fallthru
      _
  $region6: #{inverted_residual_forward.1} parent=0 // loop_footer
    %s18 = sadd.s32 1, %s14
  $region7: #{inverted_residual_forward.1} parent=0 // loop_footer_branch
    %13 = sbr.rel target = $region3
  $region8: #{inverted_residual_forward.1} parent=0 // loop_exit
    _

</llo_original>
